<compile_context>
chip_gen: v7x
topology: tpu7x:2x2x1
jax: 0.10.0
libtpu: 0.0.40
codegen_flags: <defaults>
</compile_context>

<pallas_src>
import jax
import jax.numpy as jnp
from jax.experimental import pallas as pl
from jax.experimental.pallas import tpu as pltpu


def _round_up(n, m):
    return ((n + m - 1) // m) * m


def _cdiv(a, b):
    return -(-a // b)


def _make_kernel(T, tt):
    """Kernel closure over static T (full time extent) and tt (T-chunk size)."""
    t_ragged = (T % tt) != 0

    def kernel(x_ref, w1_ref, b1_ref, w2_ref, b2_ref, out_ref, pool_acc):
        t = pl.program_id(1)
        nt = pl.num_programs(1)

        @pl.when(t == 0)
        def _():
            pool_acc[...] = jnp.full(pool_acc.shape, -jnp.inf, pool_acc.dtype)

        # Temporal max-pool: running maximum over this T-chunk, unrolled as
        # 2-D (bt, D) lane-dense slices so it stays pure VPU vmax (no XLU
        # cross-sublane reduce / relayout).
        acc = pool_acc[...]
        for s in range(tt):
            xs = x_ref[:, s, :].astype(jnp.bfloat16)      # no-op when x is bf16
            new = jnp.maximum(acc, xs)
            if t_ragged:
                # Ragged last T-chunk: rows past T are stale edge-DMA data.
                acc = jnp.where(t * tt + s < T, new, acc)
            else:
                acc = new
        pool_acc[...] = acc

        @pl.when(t == nt - 1)
        def _():
            pooled = pool_acc[...]                                     # (bt, D) bf16
            # fc1 + ReLU  (bf16 operands, f32 MXU accumulation)
            h = jnp.dot(pooled, w1_ref[...],
                        preferred_element_type=jnp.float32)            # (bt, H) f32
            h = jnp.maximum(h + b1_ref[...], 0.0)
            # Dropout: identity at inference.
            # TODO(synk): training-mode dropout (random mask + 1/(1-p) scaling)
            # is not implemented.
            out = jnp.dot(h.astype(jnp.bfloat16), w2_ref[...],
                          preferred_element_type=jnp.float32)          # (bt, 128) f32
            out_ref[...] = (out + b2_ref[...]).astype(out_ref.dtype)   # lane-dense store

    return kernel


def prepare_params(w1, b1, w2, b2, lane_pad=128):
    """One-time conversion to the kernel layout: bf16 weights, lane-padded fc2."""
    D, H = w1.shape
    C = w2.shape[1]
    c_pad = max(lane_pad, _round_up(C, lane_pad))
    w1_bf = w1.astype(jnp.bfloat16)                                   # (D, H)
    b1_2d = jnp.asarray(b1, jnp.float32).reshape(1, H)                # (1, H)
    w2_p = jnp.zeros((H, c_pad), jnp.bfloat16).at[:, :C].set(w2.astype(jnp.bfloat16))
    b2_p = jnp.zeros((1, c_pad), jnp.float32).at[:, :C].set(
        jnp.asarray(b2, jnp.float32).reshape(1, C))
    return (w1_bf, b1_2d, w2_p, b2_p), C


def mlp_classifier_forward(x, prepared, num_classes, *, b_tile=256, t_tile=16):
    """x: (B, T, D), ideally bf16 (the kernel pools in bf16 either way).

    Returns (logits (B, num_classes) float32, {}).
    """
    w1_bf, b1_2d, w2_p, b2_p = prepared
    B, T, D = x.shape
    H = w1_bf.shape[1]
    c_pad = w2_p.shape[1]

    # Batch tile: sublane-aligned, aims for >= 2 grid steps when B allows so
    # the "parallel" axis actually shards across v7x's two TensorCores.
    # No wrapper-side padded copy of x; ragged edges are handled by Pallas.
    if B <= 8:
        bt = B
    else:
        bt = max(8, min(b_tile, _round_up(_cdiv(B, 2), 8)))
    nb = _cdiv(B, bt)

    # Stream T as a trailing "arbitrary" reduction axis with a running-max
    # scratch: VMEM stays bounded independent of T.
    tt = T if T <= t_tile else t_tile
    nt = _cdiv(T, tt)

    # Explicit scoped-VMEM budget: x block double-buffered, weights single-
    # buffered (Buffered(1)), plus output block and the pool accumulator.
    itemsize = jnp.dtype(x.dtype).itemsize
    est = (2 * bt * tt * D * itemsize                # x blocks (double-buffered)
           + (w1_bf.size + w2_p.size) * 2            # bf16 weights (1 buffer)
           + (b1_2d.size + b2_p.size) * 4            # f32 biases
           + 2 * bt * c_pad * 4                      # output block
           + bt * D * 2)                             # bf16 pool accumulator
    vmem_limit = max(32 << 20, min(int(est * 1.5) + (2 << 20), 64 << 20))

    resident = dict(pipeline_mode=pl.Buffered(1))    # constant index -> 1 buffer

    logits_p = pl.pallas_call(
        _make_kernel(T, tt),
        out_shape=jax.ShapeDtypeStruct((B, c_pad), jnp.float32),
        grid_spec=pltpu.PrefetchScalarGridSpec(
            num_scalar_prefetch=0,
            grid=(nb, nt),
            in_specs=[
                pl.BlockSpec((bt, tt, D), lambda i, t: (i, t, 0)),       # x tile
                pl.BlockSpec((D, H), lambda i, t: (0, 0), **resident),   # w1
                pl.BlockSpec((1, H), lambda i, t: (0, 0), **resident),   # b1
                pl.BlockSpec((H, c_pad), lambda i, t: (0, 0), **resident),  # w2 (padded)
                pl.BlockSpec((1, c_pad), lambda i, t: (0, 0), **resident),  # b2 (padded)
            ],
            out_specs=pl.BlockSpec((bt, c_pad), lambda i, t: (i, 0)),
            scratch_shapes=[pltpu.VMEM((bt, D), jnp.bfloat16)],          # running max
        ),
        compiler_params=pltpu.CompilerParams(
            dimension_semantics=("parallel", "arbitrary"),
            vmem_limit_bytes=vmem_limit),
    )(x, w1_bf, b1_2d, w2_p, b2_p)

    return logits_p[:, :num_classes], {}


def init_params(key, input_size=1024, hidden_size=512, num_classes=8):
    """Deterministic synthetic parameters (shapes match the nn.Linear layers)."""
    k1, k2, k3, k4 = jax.random.split(key, 4)
    # Stored as [in, out]; equivalent to torch's x @ W.T with W [out, in].
    w1 = jax.random.normal(k1, (input_size, hidden_size), jnp.float32) * 0.02
    b1 = jax.random.normal(k2, (hidden_size,), jnp.float32) * 0.02
    w2 = jax.random.normal(k3, (hidden_size, num_classes), jnp.float32) * 0.02
    b2 = jax.random.normal(k4, (num_classes,), jnp.float32) * 0.02
    return w1, b1, w2, b2


if __name__ == "__main__":
    key = jax.random.PRNGKey(0)
    kx, kp = jax.random.split(key)

    B, T, D, H, C = 2, 8, 1024, 512, 8
    # The upstream producer should emit x in bf16; here we construct it so
    # (one-time, deterministic), rather than casting inside the forward path.
    x = jax.random.normal(kx, (B, T, D), jnp.float32).astype(jnp.bfloat16)
    w1, b1, w2, b2 = init_params(kp, input_size=D, hidden_size=H, num_classes=C)

    prepared, num_classes = prepare_params(w1, b1, w2, b2)
    logits, extras = mlp_classifier_forward(x, prepared, num_classes)
    logits = jax.block_until_ready(logits)
    assert logits.shape == (B, C)
    assert extras == {}

    # Reference 1: identical precision path (bf16 pool, bf16 operands, f32 acc).
    w1_bf, b1_2d, w2_p, b2_p = prepared
    pooled_bf = jnp.max(x, axis=1)                                   # (B, D) bf16
    h_ref = jnp.maximum(
        jnp.dot(pooled_bf, w1_bf, preferred_element_type=jnp.float32) + b1_2d, 0.0)
    ref_bf16 = (jnp.dot(h_ref.astype(jnp.bfloat16), w2_p,
                        preferred_element_type=jnp.float32) + b2_p)[:, :C]
    assert jnp.allclose(logits, ref_bf16, atol=1e-2, rtol=1e-2)

    # Reference 2: full-f32 semantics of the original torch module (loose
    # tolerance covers the intentional bf16 quantization of weights/acts).
    xf = x.astype(jnp.float32)
    ref_f32 = jnp.maximum(jnp.max(xf, axis=1) @ w1 + b1, 0.0) @ w2 + b2
    assert jnp.allclose(logits, ref_f32, atol=5e-2, rtol=5e-2)

    print("KERNEL_OK")
</pallas_src>

<mosaic_0001>
module attributes {stable_mosaic.version = 11 : i64} {
  func.func @kernel(%arg0: i32, %arg1: i32, %arg2: memref<2x8x1024xbf16, #tpu.memory_space<vmem>>, %arg3: memref<1024x512xbf16, #tpu.memory_space<vmem>>, %arg4: memref<1x512xf32, #tpu.memory_space<vmem>>, %arg5: memref<512x128xbf16, #tpu.memory_space<vmem>>, %arg6: memref<1x128xf32, #tpu.memory_space<vmem>>, %arg7: memref<2x128xf32, #tpu.memory_space<vmem>>, %arg8: memref<2x1024xbf16, #tpu.memory_space<vmem>>) attributes {dimension_semantics = [#tpu.dimension_semantics<parallel>, #tpu.dimension_semantics<arbitrary>], iteration_bounds = array<i64: 1, 1>, scalar_prefetch = 0 : i64, scratch_operands = 1 : i64, tpu.core_type = #tpu.core_type<tc>, window_params = [{transform_indices = @transform_0, window_bounds = array<i64: 2, 8, 1024>}, {pipeline_mode = #tpu.pipeline_mode<synchronous>, transform_indices = @transform_1, window_bounds = array<i64: 1024, 512>}, {pipeline_mode = #tpu.pipeline_mode<synchronous>, transform_indices = @transform_2, window_bounds = array<i64: 1, 512>}, {pipeline_mode = #tpu.pipeline_mode<synchronous>, transform_indices = @transform_3, window_bounds = array<i64: 512, 128>}, {pipeline_mode = #tpu.pipeline_mode<synchronous>, transform_indices = @transform_4, window_bounds = array<i64: 1, 128>}, {transform_indices = @transform_5, window_bounds = array<i64: 2, 128>}]} {
    %c0_i32 = arith.constant 0 : i32
    %0 = arith.cmpi eq, %arg1, %c0_i32 : i32
    %1 = arith.extui %0 : i1 to i32
    %c0_i32_0 = arith.constant 0 : i32
    %2 = arith.cmpi ne, %1, %c0_i32_0 : i32
    scf.if %2 {
      %cst = arith.constant 0xFF80 : bf16
      %32 = vector.broadcast %cst : bf16 to vector<2x1024xbf16>
      %c0_23 = arith.constant 0 : index
      %c0_24 = arith.constant 0 : index
      %33 = vector.load %arg8[%c0_23, %c0_24] : memref<2x1024xbf16, #tpu.memory_space<vmem>>, vector<2x1024xbf16>
      tpu.vector_store %arg8[%c0_23, %c0_24], %32 {strides = array<i32>} : memref<2x1024xbf16, #tpu.memory_space<vmem>>, vector<2x1024xbf16>,
    } else {
    }
    %c0 = arith.constant 0 : index
    %c0_1 = arith.constant 0 : index
    %3 = vector.load %arg8[%c0, %c0_1] : memref<2x1024xbf16, #tpu.memory_space<vmem>>, vector<2x1024xbf16>
    %c0_2 = arith.constant 0 : index
    %c0_3 = arith.constant 0 : index
    %c0_4 = arith.constant 0 : index
    %4 = vector.load %arg2[%c0_2, %c0_3, %c0_4] : memref<2x8x1024xbf16, #tpu.memory_space<vmem>>, vector<2x1x1024xbf16>
    %5 = vector.shape_cast %4 : vector<2x1x1024xbf16> to vector<2x1024xbf16>
    %6 = arith.maximumf %3, %5 : vector<2x1024xbf16>
    %c0_5 = arith.constant 0 : index
    %c1 = arith.constant 1 : index
    %c0_6 = arith.constant 0 : index
    %7 = vector.load %arg2[%c0_5, %c1, %c0_6] : memref<2x8x1024xbf16, #tpu.memory_space<vmem>>, vector<2x1x1024xbf16>
    %8 = vector.shape_cast %7 : vector<2x1x1024xbf16> to vector<2x1024xbf16>
    %9 = arith.maximumf %6, %8 : vector<2x1024xbf16>
    %c0_7 = arith.constant 0 : index
    %c2 = arith.constant 2 : index
    %c0_8 = arith.constant 0 : index
    %10 = vector.load %arg2[%c0_7, %c2, %c0_8] : memref<2x8x1024xbf16, #tpu.memory_space<vmem>>, vector<2x1x1024xbf16>
    %11 = vector.shape_cast %10 : vector<2x1x1024xbf16> to vector<2x1024xbf16>
    %12 = arith.maximumf %9, %11 : vector<2x1024xbf16>
    %c0_9 = arith.constant 0 : index
    %c3 = arith.constant 3 : index
    %c0_10 = arith.constant 0 : index
    %13 = vector.load %arg2[%c0_9, %c3, %c0_10] : memref<2x8x1024xbf16, #tpu.memory_space<vmem>>, vector<2x1x1024xbf16>
    %14 = vector.shape_cast %13 : vector<2x1x1024xbf16> to vector<2x1024xbf16>
    %15 = arith.maximumf %12, %14 : vector<2x1024xbf16>
    %c0_11 = arith.constant 0 : index
    %c4 = arith.constant 4 : index
    %c0_12 = arith.constant 0 : index
    %16 = vector.load %arg2[%c0_11, %c4, %c0_12] : memref<2x8x1024xbf16, #tpu.memory_space<vmem>>, vector<2x1x1024xbf16>
    %17 = vector.shape_cast %16 : vector<2x1x1024xbf16> to vector<2x1024xbf16>
    %18 = arith.maximumf %15, %17 : vector<2x1024xbf16>
    %c0_13 = arith.constant 0 : index
    %c5 = arith.constant 5 : index
    %c0_14 = arith.constant 0 : index
    %19 = vector.load %arg2[%c0_13, %c5, %c0_14] : memref<2x8x1024xbf16, #tpu.memory_space<vmem>>, vector<2x1x1024xbf16>
    %20 = vector.shape_cast %19 : vector<2x1x1024xbf16> to vector<2x1024xbf16>
    %21 = arith.maximumf %18, %20 : vector<2x1024xbf16>
    %c0_15 = arith.constant 0 : index
    %c6 = arith.constant 6 : index
    %c0_16 = arith.constant 0 : index
    %22 = vector.load %arg2[%c0_15, %c6, %c0_16] : memref<2x8x1024xbf16, #tpu.memory_space<vmem>>, vector<2x1x1024xbf16>
    %23 = vector.shape_cast %22 : vector<2x1x1024xbf16> to vector<2x1024xbf16>
    %24 = arith.maximumf %21, %23 : vector<2x1024xbf16>
    %c0_17 = arith.constant 0 : index
    %c7 = arith.constant 7 : index
    %c0_18 = arith.constant 0 : index
    %25 = vector.load %arg2[%c0_17, %c7, %c0_18] : memref<2x8x1024xbf16, #tpu.memory_space<vmem>>, vector<2x1x1024xbf16>
    %26 = vector.shape_cast %25 : vector<2x1x1024xbf16> to vector<2x1024xbf16>
    %27 = arith.maximumf %24, %26 : vector<2x1024xbf16>
    %c0_19 = arith.constant 0 : index
    %c0_20 = arith.constant 0 : index
    %28 = vector.load %arg8[%c0_19, %c0_20] : memref<2x1024xbf16, #tpu.memory_space<vmem>>, vector<2x1024xbf16>
    tpu.vector_store %arg8[%c0_19, %c0_20], %27 {strides = array<i32>} : memref<2x1024xbf16, #tpu.memory_space<vmem>>, vector<2x1024xbf16>,
    %c0_i32_21 = arith.constant 0 : i32
    %29 = arith.cmpi eq, %arg1, %c0_i32_21 : i32
    %30 = arith.extui %29 : i1 to i32
    %c0_i32_22 = arith.constant 0 : i32
    %31 = arith.cmpi ne, %30, %c0_i32_22 : i32
    scf.if %31 {
      %c0_23 = arith.constant 0 : index
      %c0_24 = arith.constant 0 : index
      %32 = vector.load %arg8[%c0_23, %c0_24] : memref<2x1024xbf16, #tpu.memory_space<vmem>>, vector<2x1024xbf16>
      %c0_25 = arith.constant 0 : index
      %c0_26 = arith.constant 0 : index
      %33 = vector.load %arg3[%c0_25, %c0_26] : memref<1024x512xbf16, #tpu.memory_space<vmem>>, vector<1024x512xbf16>
      %cst = arith.constant dense<0.000000e+00> : vector<2x512xf32>
      %34 = tpu.matmul %32, %33, %cst {dimension_numbers = #tpu.dot_dimension_numbers<[1], [0], [0], [1], [0, 0, 1, 1], [], []>} : vector<2x1024xbf16>, vector<1024x512xbf16>, vector<2x512xf32> -> vector<2x512xf32>
      %c0_27 = arith.constant 0 : index
      %c0_28 = arith.constant 0 : index
      %35 = vector.load %arg4[%c0_27, %c0_28] : memref<1x512xf32, #tpu.memory_space<vmem>>, vector<1x512xf32>
      %36 = vector.broadcast %35 : vector<1x512xf32> to vector<2x512xf32>
      %37 = arith.addf %34, %36 : vector<2x512xf32>
      %cst_29 = arith.constant 0.000000e+00 : f32
      %38 = vector.broadcast %cst_29 : f32 to vector<2x512xf32>
      %39 = arith.maximumf %37, %38 : vector<2x512xf32>
      %40 = arith.truncf %39 : vector<2x512xf32> to vector<2x512xbf16>
      %c0_30 = arith.constant 0 : index
      %c0_31 = arith.constant 0 : index
      %41 = vector.load %arg5[%c0_30, %c0_31] : memref<512x128xbf16, #tpu.memory_space<vmem>>, vector<512x128xbf16>
      %cst_32 = arith.constant dense<0.000000e+00> : vector<2x128xf32>
      %42 = tpu.matmul %40, %41, %cst_32 {dimension_numbers = #tpu.dot_dimension_numbers<[1], [0], [0], [1], [0, 0, 1, 1], [], []>} : vector<2x512xbf16>, vector<512x128xbf16>, vector<2x128xf32> -> vector<2x128xf32>
      %c0_33 = arith.constant 0 : index
      %c0_34 = arith.constant 0 : index
      %43 = vector.load %arg6[%c0_33, %c0_34] : memref<1x128xf32, #tpu.memory_space<vmem>>, vector<1x128xf32>
      %44 = vector.broadcast %43 : vector<1x128xf32> to vector<2x128xf32>
      %45 = arith.addf %42, %44 : vector<2x128xf32>
      %c0_35 = arith.constant 0 : index
      %c0_36 = arith.constant 0 : index
      %46 = vector.load %arg7[%c0_35, %c0_36] : memref<2x128xf32, #tpu.memory_space<vmem>>, vector<2x128xf32>
      tpu.vector_store %arg7[%c0_35, %c0_36], %45 {strides = array<i32>} : memref<2x128xf32, #tpu.memory_space<vmem>>, vector<2x128xf32>,
    } else {
    }
    return
  }
  func.func @transform_0(%arg0: i32, %arg1: i32) -> (i32, i32, i32) {
    %c0_i32 = arith.constant 0 : i32
    %c0_i32_0 = arith.constant 0 : i32
    return %arg0, %arg1, %c0_i32 : i32, i32, i32
  }
  func.func @transform_1(%arg0: i32, %arg1: i32) -> (i32, i32) {
    %c0_i32 = arith.constant 0 : i32
    %c0_i32_0 = arith.constant 0 : i32
    %c0_i32_1 = arith.constant 0 : i32
    return %c0_i32, %c0_i32_0 : i32, i32
  }
  func.func @transform_2(%arg0: i32, %arg1: i32) -> (i32, i32) {
    %c0_i32 = arith.constant 0 : i32
    %c0_i32_0 = arith.constant 0 : i32
    %c0_i32_1 = arith.constant 0 : i32
    return %c0_i32, %c0_i32_0 : i32, i32
  }
  func.func @transform_3(%arg0: i32, %arg1: i32) -> (i32, i32) {
    %c0_i32 = arith.constant 0 : i32
    %c0_i32_0 = arith.constant 0 : i32
    %c0_i32_1 = arith.constant 0 : i32
    return %c0_i32, %c0_i32_0 : i32, i32
  }
  func.func @transform_4(%arg0: i32, %arg1: i32) -> (i32, i32) {
    %c0_i32 = arith.constant 0 : i32
    %c0_i32_0 = arith.constant 0 : i32
    %c0_i32_1 = arith.constant 0 : i32
    return %c0_i32, %c0_i32_0 : i32, i32
  }
  func.func @transform_5(%arg0: i32, %arg1: i32) -> (i32, i32) {
    %c0_i32 = arith.constant 0 : i32
    %c0_i32_0 = arith.constant 0 : i32
    return %arg0, %c0_i32 : i32, i32
  }
}

</mosaic_0001>

<llo_original>
// kernel: tpu_custom_call.1
$region0: #{tpu_custom_call.1}
  #allocation0 [shape = 'u32[]', space=smem, size = 0x4, offset = 0x4, fixed_abs, tag = 'smem constant byte address 0x4 - core index']
  #allocation1 [shape = 'u32[144,128]{1,0:T(1,128)}', space=vmem, size = 0x12000, scoped, tag = 'internal scratch']
  #allocation2 [shape = 'bf16[2,1024]{1,0:T(2,128)(2,1)}', space=vmem, size = 0x1000, scoped, tag = 'scratch operand']
  %s0 = inlined_call_operand.hbm [shape: bf16[2,8,1024], index: 0, kind: input, shape index: {}]
  %s1 = inlined_call_operand.hbm [shape: bf16[1024,512], index: 1, kind: input, shape index: {}]
  %s2 = inlined_call_operand.vmem [shape: f32[1,512], index: 2, kind: input, shape index: {}]
  %s3 = inlined_call_operand.hbm [shape: bf16[512,128], index: 3, kind: input, shape index: {}]
  %s4 = inlined_call_operand.vmem [shape: f32[1,128], index: 4, kind: input, shape index: {}]
  %s5 = inlined_call_operand.hbm [shape: f32[2,128], index: 5, kind: output, shape index: {}]
  %s6 = sld [smem:[#allocation0]]
  $region50: #{tpu_custom_call.1} parent=0
    _
  %s8 = ssub.s32 1, %s6
  %s9 = scalar_select 0, %s8, %s6
  $region1: #{tpu_custom_call.1} parent=0
    #allocation3 [shape = 'u8[32768]{0}', space=vmem, size = 0x8000, scoped, tag = 'input window, operand 0, single buffered']
    #allocation4 [shape = 's32[1]{0}', space=sflag, size = 0x4, scoped, tag = 'scoped memory for tpu_custom_call.1']
    #allocation5 [shape = 's32[1]{0}', space=sflag, size = 0x4, scoped, tag = 'scoped memory for tpu_custom_call.1']
    #allocation6 [shape = 'u8[1048576]{0}', space=vmem, size = 0x100000, scoped, tag = 'input window, operand 1, single buffered']
    #allocation7 [shape = 's32[1]{0}', space=sflag, size = 0x4, scoped, tag = 'scoped memory for tpu_custom_call.1']
    #allocation8 [shape = 'u8[131072]{0}', space=vmem, size = 0x20000, scoped, tag = 'input window, operand 3, single buffered']
    #allocation9 [shape = 'u8[1024]{0}', space=vmem, size = 0x400, scoped, tag = 'output window, operand 0, single buffered']
    %10 = vsyncpa [#allocation4], 0
    %11 = vsyncpa [#allocation7], 0
    %12 = vsyncpa [#allocation5], 0
    // Predicated region
    $region2: #{tpu_custom_call.1} parent=1 // pred_check
      _
    $region3: #{tpu_custom_call.1} parent=1 // pred_check_branch
      %14 = sbr.rel (0) target = $region5
    $region4: #{tpu_custom_call.1} parent=1 // pred_region
      %s16 = ssub.s32 1024, 1024
      %17 = vsyncadd [#allocation4], %s16
      %s18 = sshll.u32 [#allocation3], 4
      %s19 = int_to_ptr.vmem [resolvable:$true] %s18
      %24 = dma.hbm_to_vmem [thread:$0]  %s0, 1024, %s19, [#allocation4], 512, 512, 32
    $region5: #{tpu_custom_call.1} parent=1 // pred_fallthru
      _
    // Predicated region
    $region6: #{tpu_custom_call.1} parent=1 // pred_check
      _
    $region7: #{tpu_custom_call.1} parent=1 // pred_check_branch
      %26 = sbr.rel (0) target = $region9
    $region8: #{tpu_custom_call.1} parent=1 // pred_region
      %s28 = ssub.s32 32768, 32768
      %29 = vsyncadd [#allocation7], %s28
      %s30 = sshll.u32 [#allocation6], 4
      %s31 = int_to_ptr.vmem [resolvable:$true] %s30
      %36 = dma.hbm_to_vmem [thread:$0]  %s1, 32768, %s31, [#allocation7], 256, 256, 16
    $region9: #{tpu_custom_call.1} parent=1 // pred_fallthru
      _
    // Predicated region
    $region10: #{tpu_custom_call.1} parent=1 // pred_check
      _
    $region11: #{tpu_custom_call.1} parent=1 // pred_check_branch
      %38 = sbr.rel (0) target = $region13
    $region12: #{tpu_custom_call.1} parent=1 // pred_region
      _
    $region13: #{tpu_custom_call.1} parent=1 // pred_fallthru
      _
    // Predicated region
    $region14: #{tpu_custom_call.1} parent=1 // pred_check
      _
    $region15: #{tpu_custom_call.1} parent=1 // pred_check_branch
      %40 = sbr.rel (0) target = $region17
    $region16: #{tpu_custom_call.1} parent=1 // pred_region
      %s42 = ssub.s32 4096, 4096
      %43 = vsyncadd [#allocation7], %s42
      %s44 = sshll.u32 [#allocation8], 4
      %s45 = int_to_ptr.vmem [resolvable:$true] %s44
      %50 = dma.hbm_to_vmem [thread:$0]  %s3, 4096, %s45, [#allocation7], 64, 64, 4
    $region17: #{tpu_custom_call.1} parent=1 // pred_fallthru
      _
    // Predicated region
    $region18: #{tpu_custom_call.1} parent=1 // pred_check
      _
    $region19: #{tpu_custom_call.1} parent=1 // pred_check_branch
      %52 = sbr.rel (0) target = $region21
    $region20: #{tpu_custom_call.1} parent=1 // pred_region
      _
    $region21: #{tpu_custom_call.1} parent=1 // pred_fallthru
      _
    // Predicated region
    $region22: #{tpu_custom_call.1} parent=1 // pred_check
      _
    $region23: #{tpu_custom_call.1} parent=1 // pred_check_branch
      %54 = sbr.rel (0) target = $region25
    $region24: #{tpu_custom_call.1} parent=1 // pred_region
      %55 = dma.done [#allocation4], 1024
    $region25: #{tpu_custom_call.1} parent=1 // pred_fallthru
      _
    // Predicated region
    $region26: #{tpu_custom_call.1} parent=1 // pred_check
      _
    $region27: #{tpu_custom_call.1} parent=1 // pred_check_branch
      %57 = sbr.rel (0) target = $region29
    $region28: #{tpu_custom_call.1} parent=1 // pred_region
      %58 = dma.done [#allocation7], 32768
    $region29: #{tpu_custom_call.1} parent=1 // pred_fallthru
      _
    // Predicated region
    $region30: #{tpu_custom_call.1} parent=1 // pred_check
      _
    $region31: #{tpu_custom_call.1} parent=1 // pred_check_branch
      %60 = sbr.rel (0) target = $region33
    $region32: #{tpu_custom_call.1} parent=1 // pred_region
      %61 = dma.done [#allocation7], 4096
    $region33: #{tpu_custom_call.1} parent=1 // pred_fallthru
      _
    %p64 = scmp.eq.s32.totalorder 0, 0
    // Predicated region
    $region34: #{tpu_custom_call.1} parent=1 // pred_check
      %p65 = pneg %p64
    $region35: #{tpu_custom_call.1} parent=1 // pred_check_branch
      %67 = sbr.rel (%p65) target = $region37
    $region36: #{tpu_custom_call.1} parent=1 // pred_region
      %68 = vst [vmem:[#allocation2] sm:$0xff] 4286644096
    $region37: #{tpu_custom_call.1} parent=1 // pred_fallthru
      _
    %v69 = vld [vmem:[#allocation2] sm:$0xff]
    %v70 = vld [vmem:[#allocation3] sm:$0x11]
    %v71 = vld [vmem:[#allocation3 + $0x8] sm:$0x11]
    %v72 = vld [vmem:[#allocation3 + $0x10] sm:$0x11]
    %v73 = vld [vmem:[#allocation3 + $0x18] sm:$0x11]
    %v74 = vld [vmem:[#allocation3 + $0x20] sm:$0x11]
    %v75 = vld [vmem:[#allocation3 + $0x28] sm:$0x11]
    %v76 = vld [vmem:[#allocation3 + $0x30] sm:$0x11]
    %v77 = vld [vmem:[#allocation3 + $0x38] sm:$0x11]
    %v87 = vunpack.c.l.s4 1966171168
    %v88 = vunpack.c.0.s8 %v87
    %v89 = vlaneseq
    %v90 = vshrl.u32 %v89, 7
    %v91 = vsub.s32 %v88, %v90
    %v92 = vrot.slane %v70, %v91
    %v94 = vunpack.c.l.s4 1966171168
    %v95 = vunpack.c.0.s8 %v94
    %v96 = vlaneseq
    %v97 = vshrl.u32 %v96, 7
    %v98 = vsub.s32 %v95, %v97
    %v99 = vrot.slane %v71, %v98
    %v101 = vunpack.c.l.s4 1966171168
    %v102 = vunpack.c.0.s8 %v101
    %v103 = vlaneseq
    %v104 = vshrl.u32 %v103, 7
    %v105 = vsub.s32 %v102, %v104
    %v106 = vrot.slane %v72, %v105
    %v108 = vunpack.c.l.s4 1966171168
    %v109 = vunpack.c.0.s8 %v108
    %v110 = vlaneseq
    %v111 = vshrl.u32 %v110, 7
    %v112 = vsub.s32 %v109, %v111
    %v113 = vrot.slane %v73, %v112
    %v114 = vcombine.low %v92, %v99
    %v115 = vcombine.low %v106, %v113
    %v117 = vunpack.c.l.s4 1966171168
    %v118 = vunpack.c.0.s8 %v117
    %v119 = vlaneseq
    %v120 = vshrl.u32 %v119, 7
    %v121 = vsub.s32 %v118, %v120
    %v122 = vrot.slane %v114, %v121
    %v124 = vunpack.c.l.s4 1966171168
    %v125 = vunpack.c.0.s8 %v124
    %v126 = vlaneseq
    %v127 = vshrl.u32 %v126, 7
    %v128 = vsub.s32 %v125, %v127
    %v129 = vrot.slane %v115, %v128
    %v130 = vcombine.low %v122, %v129
    %v132 = vunpack.c.l.s4 1966171168
    %v133 = vunpack.c.0.s8 %v132
    %v134 = vlaneseq
    %v135 = vshrl.u32 %v134, 7
    %v136 = vsub.s32 %v133, %v135
    %v137 = vrot.slane %v74, %v136
    %v139 = vunpack.c.l.s4 1966171168
    %v140 = vunpack.c.0.s8 %v139
    %v141 = vlaneseq
    %v142 = vshrl.u32 %v141, 7
    %v143 = vsub.s32 %v140, %v142
    %v144 = vrot.slane %v75, %v143
    %v146 = vunpack.c.l.s4 1966171168
    %v147 = vunpack.c.0.s8 %v146
    %v148 = vlaneseq
    %v149 = vshrl.u32 %v148, 7
    %v150 = vsub.s32 %v147, %v149
    %v151 = vrot.slane %v76, %v150
    %v153 = vunpack.c.l.s4 1966171168
    %v154 = vunpack.c.0.s8 %v153
    %v155 = vlaneseq
    %v156 = vshrl.u32 %v155, 7
    %v157 = vsub.s32 %v154, %v156
    %v158 = vrot.slane %v77, %v157
    %v159 = vcombine.low %v137, %v144
    %v160 = vcombine.low %v151, %v158
    %v162 = vunpack.c.l.s4 1966171168
    %v163 = vunpack.c.0.s8 %v162
    %v164 = vlaneseq
    %v165 = vshrl.u32 %v164, 7
    %v166 = vsub.s32 %v163, %v165
    %v167 = vrot.slane %v159, %v166
    %v169 = vunpack.c.l.s4 1966171168
    %v170 = vunpack.c.0.s8 %v169
    %v171 = vlaneseq
    %v172 = vshrl.u32 %v171, 7
    %v173 = vsub.s32 %v170, %v172
    %v174 = vrot.slane %v160, %v173
    %v175 = vcombine.low %v167, %v174
    %v176 = vcombine.high %v130, %v130
    %v178 = vunpack.c.l.s4 1935823168
    %v179 = vunpack.c.0.s8 %v178
    %v180 = vlaneseq
    %v181 = vshrl.u32 %v180, 7
    %v182 = vsub.s32 %v179, %v181
    %v183 = vrot.slane %v130, %v182
    %v185 = vunpack.c.l.s4 1935823168
    %v186 = vunpack.c.0.s8 %v185
    %v187 = vlaneseq
    %v188 = vshrl.u32 %v187, 7
    %v189 = vsub.s32 %v186, %v188
    %v190 = vrot.slane %v176, %v189
    %v191 = vcombine.high %v183, %v183
    %v192 = vcombine.high %v190, %v190
    %v194 = vunpack.c.l.s4 1935823168
    %v195 = vunpack.c.0.s8 %v194
    %v196 = vlaneseq
    %v197 = vshrl.u32 %v196, 7
    %v198 = vsub.s32 %v195, %v197
    %v199 = vrot.slane %v183, %v198
    %v201 = vunpack.c.l.s4 1935823168
    %v202 = vunpack.c.0.s8 %v201
    %v203 = vlaneseq
    %v204 = vshrl.u32 %v203, 7
    %v205 = vsub.s32 %v202, %v204
    %v206 = vrot.slane %v191, %v205
    %v208 = vunpack.c.l.s4 1935823168
    %v209 = vunpack.c.0.s8 %v208
    %v210 = vlaneseq
    %v211 = vshrl.u32 %v210, 7
    %v212 = vsub.s32 %v209, %v211
    %v213 = vrot.slane %v190, %v212
    %v215 = vunpack.c.l.s4 1935823168
    %v216 = vunpack.c.0.s8 %v215
    %v217 = vlaneseq
    %v218 = vshrl.u32 %v217, 7
    %v219 = vsub.s32 %v216, %v218
    %v220 = vrot.slane %v192, %v219
    %v221 = vcombine.high %v175, %v175
    %v223 = vunpack.c.l.s4 1935823168
    %v224 = vunpack.c.0.s8 %v223
    %v225 = vlaneseq
    %v226 = vshrl.u32 %v225, 7
    %v227 = vsub.s32 %v224, %v226
    %v228 = vrot.slane %v175, %v227
    %v230 = vunpack.c.l.s4 1935823168
    %v231 = vunpack.c.0.s8 %v230
    %v232 = vlaneseq
    %v233 = vshrl.u32 %v232, 7
    %v234 = vsub.s32 %v231, %v233
    %v235 = vrot.slane %v221, %v234
    %v236 = vcombine.high %v228, %v228
    %v237 = vcombine.high %v235, %v235
    %v239 = vunpack.c.l.s4 1935823168
    %v240 = vunpack.c.0.s8 %v239
    %v241 = vlaneseq
    %v242 = vshrl.u32 %v241, 7
    %v243 = vsub.s32 %v240, %v242
    %v244 = vrot.slane %v228, %v243
    %v246 = vunpack.c.l.s4 1935823168
    %v247 = vunpack.c.0.s8 %v246
    %v248 = vlaneseq
    %v249 = vshrl.u32 %v248, 7
    %v250 = vsub.s32 %v247, %v249
    %v251 = vrot.slane %v236, %v250
    %v253 = vunpack.c.l.s4 1935823168
    %v254 = vunpack.c.0.s8 %v253
    %v255 = vlaneseq
    %v256 = vshrl.u32 %v255, 7
    %v257 = vsub.s32 %v254, %v256
    %v258 = vrot.slane %v235, %v257
    %v260 = vunpack.c.l.s4 1935823168
    %v261 = vunpack.c.0.s8 %v260
    %v262 = vlaneseq
    %v263 = vshrl.u32 %v262, 7
    %v264 = vsub.s32 %v261, %v263
    %v265 = vrot.slane %v237, %v264
    %v266 = vunpack.c.l.b16 %v199
    %v267 = vunpack.c.h.b16 %v199
    %v268 = vunpack.c.l.b16 %v206
    %v269 = vunpack.c.h.b16 %v206
    %v270 = vunpack.c.l.b16 %v213
    %v271 = vunpack.c.h.b16 %v213
    %v272 = vunpack.c.l.b16 %v220
    %v273 = vunpack.c.h.b16 %v220
    %v274 = vunpack.c.l.b16 %v244
    %v275 = vunpack.c.h.b16 %v244
    %v276 = vunpack.c.l.b16 %v251
    %v277 = vunpack.c.h.b16 %v251
    %v278 = vunpack.c.l.b16 %v258
    %v279 = vunpack.c.h.b16 %v258
    %v280 = vunpack.c.l.b16 %v265
    %v281 = vunpack.c.h.b16 %v265
    %v282 = vrot.slane %v274, 7
    %vm283 = vcmask 1041409
    %v284 = vsel %vm283, %v282, %v266
    %v285 = vrot.slane %v275, 7
    %v286 = vsel %vm283, %v285, %v267
    %v287 = vrot.slane %v276, 7
    %v288 = vsel %vm283, %v287, %v268
    %v289 = vrot.slane %v277, 7
    %v290 = vsel %vm283, %v289, %v269
    %v291 = vrot.slane %v278, 7
    %v292 = vsel %vm283, %v291, %v270
    %v293 = vrot.slane %v279, 7
    %v294 = vsel %vm283, %v293, %v271
    %v295 = vrot.slane %v280, 7
    %v296 = vsel %vm283, %v295, %v272
    %v297 = vrot.slane %v281, 7
    %v298 = vsel %vm283, %v297, %v273
    %v299 = vpack.c.b16 %v286, %v284
    %v300 = vpack.c.b16 %v290, %v288
    %v301 = vpack.c.b16 %v294, %v292
    %v302 = vpack.c.b16 %v298, %v296
    %v304 = vunpack.c.l.s4 1966171168
    %v305 = vunpack.c.0.s8 %v304
    %v306 = vlaneseq
    %v307 = vshrl.u32 %v306, 7
    %v308 = vsub.s32 %v305, %v307
    %v309 = vrot.slane %v299, %v308
    %v311 = vunpack.c.l.s4 1966171168
    %v312 = vunpack.c.0.s8 %v311
    %v313 = vlaneseq
    %v314 = vshrl.u32 %v313, 7
    %v315 = vsub.s32 %v312, %v314
    %v316 = vrot.slane %v300, %v315
    %v318 = vunpack.c.l.s4 1966171168
    %v319 = vunpack.c.0.s8 %v318
    %v320 = vlaneseq
    %v321 = vshrl.u32 %v320, 7
    %v322 = vsub.s32 %v319, %v321
    %v323 = vrot.slane %v301, %v322
    %v325 = vunpack.c.l.s4 1966171168
    %v326 = vunpack.c.0.s8 %v325
    %v327 = vlaneseq
    %v328 = vshrl.u32 %v327, 7
    %v329 = vsub.s32 %v326, %v328
    %v330 = vrot.slane %v302, %v329
    %v331 = vcombine.low %v309, %v316
    %v332 = vcombine.low %v323, %v330
    %v334 = vunpack.c.l.s4 1966171168
    %v335 = vunpack.c.0.s8 %v334
    %v336 = vlaneseq
    %v337 = vshrl.u32 %v336, 7
    %v338 = vsub.s32 %v335, %v337
    %v339 = vrot.slane %v331, %v338
    %v341 = vunpack.c.l.s4 1966171168
    %v342 = vunpack.c.0.s8 %v341
    %v343 = vlaneseq
    %v344 = vshrl.u32 %v343, 7
    %v345 = vsub.s32 %v342, %v344
    %v346 = vrot.slane %v332, %v345
    %v347 = vcombine.low %v339, %v346
    %v349 = vmax.bf16 %v69, %v347
    %v350 = vrot.slane %v266, 1
    %v351 = vsel %vm283, %v274, %v350
    %v352 = vrot.slane %v267, 1
    %v353 = vsel %vm283, %v275, %v352
    %v354 = vrot.slane %v268, 1
    %v355 = vsel %vm283, %v276, %v354
    %v356 = vrot.slane %v269, 1
    %v357 = vsel %vm283, %v277, %v356
    %v358 = vrot.slane %v270, 1
    %v359 = vsel %vm283, %v278, %v358
    %v360 = vrot.slane %v271, 1
    %v361 = vsel %vm283, %v279, %v360
    %v362 = vrot.slane %v272, 1
    %v363 = vsel %vm283, %v280, %v362
    %v364 = vrot.slane %v273, 1
    %v365 = vsel %vm283, %v281, %v364
    %v366 = vpack.c.b16 %v353, %v351
    %v367 = vpack.c.b16 %v357, %v355
    %v368 = vpack.c.b16 %v361, %v359
    %v369 = vpack.c.b16 %v365, %v363
    %v371 = vunpack.c.l.s4 1966171168
    %v372 = vunpack.c.0.s8 %v371
    %v373 = vlaneseq
    %v374 = vshrl.u32 %v373, 7
    %v375 = vsub.s32 %v372, %v374
    %v376 = vrot.slane %v366, %v375
    %v378 = vunpack.c.l.s4 1966171168
    %v379 = vunpack.c.0.s8 %v378
    %v380 = vlaneseq
    %v381 = vshrl.u32 %v380, 7
    %v382 = vsub.s32 %v379, %v381
    %v383 = vrot.slane %v367, %v382
    %v385 = vunpack.c.l.s4 1966171168
    %v386 = vunpack.c.0.s8 %v385
    %v387 = vlaneseq
    %v388 = vshrl.u32 %v387, 7
    %v389 = vsub.s32 %v386, %v388
    %v390 = vrot.slane %v368, %v389
    %v392 = vunpack.c.l.s4 1966171168
    %v393 = vunpack.c.0.s8 %v392
    %v394 = vlaneseq
    %v395 = vshrl.u32 %v394, 7
    %v396 = vsub.s32 %v393, %v395
    %v397 = vrot.slane %v369, %v396
    %v398 = vcombine.low %v376, %v383
    %v399 = vcombine.low %v390, %v397
    %v401 = vunpack.c.l.s4 1966171168
    %v402 = vunpack.c.0.s8 %v401
    %v403 = vlaneseq
    %v404 = vshrl.u32 %v403, 7
    %v405 = vsub.s32 %v402, %v404
    %v406 = vrot.slane %v398, %v405
    %v408 = vunpack.c.l.s4 1966171168
    %v409 = vunpack.c.0.s8 %v408
    %v410 = vlaneseq
    %v411 = vshrl.u32 %v410, 7
    %v412 = vsub.s32 %v409, %v411
    %v413 = vrot.slane %v399, %v412
    %v414 = vcombine.low %v406, %v413
    %v416 = vmax.bf16 %v349, %v414
    %v417 = vld [vmem:[#allocation3] sm:$0x22]
    %v418 = vld [vmem:[#allocation3 + $0x8] sm:$0x22]
    %v419 = vld [vmem:[#allocation3 + $0x10] sm:$0x22]
    %v420 = vld [vmem:[#allocation3 + $0x18] sm:$0x22]
    %v421 = vld [vmem:[#allocation3 + $0x20] sm:$0x22]
    %v422 = vld [vmem:[#allocation3 + $0x28] sm:$0x22]
    %v423 = vld [vmem:[#allocation3 + $0x30] sm:$0x22]
    %v424 = vld [vmem:[#allocation3 + $0x38] sm:$0x22]
    %v434 = vunpack.c.l.s4 1966171168
    %v435 = vunpack.c.0.s8 %v434
    %v436 = vlaneseq
    %v437 = vshrl.u32 %v436, 7
    %v438 = vsub.s32 %v435, %v437
    %v439 = vrot.slane %v417, %v438
    %v441 = vunpack.c.l.s4 1966171168
    %v442 = vunpack.c.0.s8 %v441
    %v443 = vlaneseq
    %v444 = vshrl.u32 %v443, 7
    %v445 = vsub.s32 %v442, %v444
    %v446 = vrot.slane %v418, %v445
    %v448 = vunpack.c.l.s4 1966171168
    %v449 = vunpack.c.0.s8 %v448
    %v450 = vlaneseq
    %v451 = vshrl.u32 %v450, 7
    %v452 = vsub.s32 %v449, %v451
    %v453 = vrot.slane %v419, %v452
    %v455 = vunpack.c.l.s4 1966171168
    %v456 = vunpack.c.0.s8 %v455
    %v457 = vlaneseq
    %v458 = vshrl.u32 %v457, 7
    %v459 = vsub.s32 %v456, %v458
    %v460 = vrot.slane %v420, %v459
    %v461 = vcombine.high %v439, %v446
    %v462 = vcombine.high %v453, %v460
    %v464 = vunpack.c.l.s4 1966171168
    %v465 = vunpack.c.0.s8 %v464
    %v466 = vlaneseq
    %v467 = vshrl.u32 %v466, 7
    %v468 = vsub.s32 %v465, %v467
    %v469 = vrot.slane %v461, %v468
    %v471 = vunpack.c.l.s4 1966171168
    %v472 = vunpack.c.0.s8 %v471
    %v473 = vlaneseq
    %v474 = vshrl.u32 %v473, 7
    %v475 = vsub.s32 %v472, %v474
    %v476 = vrot.slane %v462, %v475
    %v477 = vcombine.low %v469, %v476
    %v479 = vunpack.c.l.s4 1966171168
    %v480 = vunpack.c.0.s8 %v479
    %v481 = vlaneseq
    %v482 = vshrl.u32 %v481, 7
    %v483 = vsub.s32 %v480, %v482
    %v484 = vrot.slane %v421, %v483
    %v486 = vunpack.c.l.s4 1966171168
    %v487 = vunpack.c.0.s8 %v486
    %v488 = vlaneseq
    %v489 = vshrl.u32 %v488, 7
    %v490 = vsub.s32 %v487, %v489
    %v491 = vrot.slane %v422, %v490
    %v493 = vunpack.c.l.s4 1966171168
    %v494 = vunpack.c.0.s8 %v493
    %v495 = vlaneseq
    %v496 = vshrl.u32 %v495, 7
    %v497 = vsub.s32 %v494, %v496
    %v498 = vrot.slane %v423, %v497
    %v500 = vunpack.c.l.s4 1966171168
    %v501 = vunpack.c.0.s8 %v500
    %v502 = vlaneseq
    %v503 = vshrl.u32 %v502, 7
    %v504 = vsub.s32 %v501, %v503
    %v505 = vrot.slane %v424, %v504
    %v506 = vcombine.high %v484, %v491
    %v507 = vcombine.high %v498, %v505
    %v509 = vunpack.c.l.s4 1966171168
    %v510 = vunpack.c.0.s8 %v509
    %v511 = vlaneseq
    %v512 = vshrl.u32 %v511, 7
    %v513 = vsub.s32 %v510, %v512
    %v514 = vrot.slane %v506, %v513
    %v516 = vunpack.c.l.s4 1966171168
    %v517 = vunpack.c.0.s8 %v516
    %v518 = vlaneseq
    %v519 = vshrl.u32 %v518, 7
    %v520 = vsub.s32 %v517, %v519
    %v521 = vrot.slane %v507, %v520
    %v522 = vcombine.low %v514, %v521
    %v523 = vcombine.high %v477, %v477
    %v525 = vunpack.c.l.s4 1935823168
    %v526 = vunpack.c.0.s8 %v525
    %v527 = vlaneseq
    %v528 = vshrl.u32 %v527, 7
    %v529 = vsub.s32 %v526, %v528
    %v530 = vrot.slane %v477, %v529
    %v532 = vunpack.c.l.s4 1935823168
    %v533 = vunpack.c.0.s8 %v532
    %v534 = vlaneseq
    %v535 = vshrl.u32 %v534, 7
    %v536 = vsub.s32 %v533, %v535
    %v537 = vrot.slane %v523, %v536
    %v538 = vcombine.high %v530, %v530
    %v539 = vcombine.high %v537, %v537
    %v541 = vunpack.c.l.s4 1935823168
    %v542 = vunpack.c.0.s8 %v541
    %v543 = vlaneseq
    %v544 = vshrl.u32 %v543, 7
    %v545 = vsub.s32 %v542, %v544
    %v546 = vrot.slane %v530, %v545
    %v548 = vunpack.c.l.s4 1935823168
    %v549 = vunpack.c.0.s8 %v548
    %v550 = vlaneseq
    %v551 = vshrl.u32 %v550, 7
    %v552 = vsub.s32 %v549, %v551
    %v553 = vrot.slane %v538, %v552
    %v555 = vunpack.c.l.s4 1935823168
    %v556 = vunpack.c.0.s8 %v555
    %v557 = vlaneseq
    %v558 = vshrl.u32 %v557, 7
    %v559 = vsub.s32 %v556, %v558
    %v560 = vrot.slane %v537, %v559
    %v562 = vunpack.c.l.s4 1935823168
    %v563 = vunpack.c.0.s8 %v562
    %v564 = vlaneseq
    %v565 = vshrl.u32 %v564, 7
    %v566 = vsub.s32 %v563, %v565
    %v567 = vrot.slane %v539, %v566
    %v568 = vcombine.high %v522, %v522
    %v570 = vunpack.c.l.s4 1935823168
    %v571 = vunpack.c.0.s8 %v570
    %v572 = vlaneseq
    %v573 = vshrl.u32 %v572, 7
    %v574 = vsub.s32 %v571, %v573
    %v575 = vrot.slane %v522, %v574
    %v577 = vunpack.c.l.s4 1935823168
    %v578 = vunpack.c.0.s8 %v577
    %v579 = vlaneseq
    %v580 = vshrl.u32 %v579, 7
    %v581 = vsub.s32 %v578, %v580
    %v582 = vrot.slane %v568, %v581
    %v583 = vcombine.high %v575, %v575
    %v584 = vcombine.high %v582, %v582
    %v586 = vunpack.c.l.s4 1935823168
    %v587 = vunpack.c.0.s8 %v586
    %v588 = vlaneseq
    %v589 = vshrl.u32 %v588, 7
    %v590 = vsub.s32 %v587, %v589
    %v591 = vrot.slane %v575, %v590
    %v593 = vunpack.c.l.s4 1935823168
    %v594 = vunpack.c.0.s8 %v593
    %v595 = vlaneseq
    %v596 = vshrl.u32 %v595, 7
    %v597 = vsub.s32 %v594, %v596
    %v598 = vrot.slane %v583, %v597
    %v600 = vunpack.c.l.s4 1935823168
    %v601 = vunpack.c.0.s8 %v600
    %v602 = vlaneseq
    %v603 = vshrl.u32 %v602, 7
    %v604 = vsub.s32 %v601, %v603
    %v605 = vrot.slane %v582, %v604
    %v607 = vunpack.c.l.s4 1935823168
    %v608 = vunpack.c.0.s8 %v607
    %v609 = vlaneseq
    %v610 = vshrl.u32 %v609, 7
    %v611 = vsub.s32 %v608, %v610
    %v612 = vrot.slane %v584, %v611
    %v613 = vunpack.c.l.b16 %v546
    %v614 = vunpack.c.h.b16 %v546
    %v615 = vunpack.c.l.b16 %v553
    %v616 = vunpack.c.h.b16 %v553
    %v617 = vunpack.c.l.b16 %v560
    %v618 = vunpack.c.h.b16 %v560
    %v619 = vunpack.c.l.b16 %v567
    %v620 = vunpack.c.h.b16 %v567
    %v621 = vunpack.c.l.b16 %v591
    %v622 = vunpack.c.h.b16 %v591
    %v623 = vunpack.c.l.b16 %v598
    %v624 = vunpack.c.h.b16 %v598
    %v625 = vunpack.c.l.b16 %v605
    %v626 = vunpack.c.h.b16 %v605
    %v627 = vunpack.c.l.b16 %v612
    %v628 = vunpack.c.h.b16 %v612
    %v629 = vrot.slane %v621, 7
    %v630 = vsel %vm283, %v629, %v613
    %v631 = vrot.slane %v622, 7
    %v632 = vsel %vm283, %v631, %v614
    %v633 = vrot.slane %v623, 7
    %v634 = vsel %vm283, %v633, %v615
    %v635 = vrot.slane %v624, 7
    %v636 = vsel %vm283, %v635, %v616
    %v637 = vrot.slane %v625, 7
    %v638 = vsel %vm283, %v637, %v617
    %v639 = vrot.slane %v626, 7
    %v640 = vsel %vm283, %v639, %v618
    %v641 = vrot.slane %v627, 7
    %v642 = vsel %vm283, %v641, %v619
    %v643 = vrot.slane %v628, 7
    %v644 = vsel %vm283, %v643, %v620
    %v645 = vpack.c.b16 %v632, %v630
    %v646 = vpack.c.b16 %v636, %v634
    %v647 = vpack.c.b16 %v640, %v638
    %v648 = vpack.c.b16 %v644, %v642
    %v650 = vunpack.c.l.s4 1966171168
    %v651 = vunpack.c.0.s8 %v650
    %v652 = vlaneseq
    %v653 = vshrl.u32 %v652, 7
    %v654 = vsub.s32 %v651, %v653
    %v655 = vrot.slane %v645, %v654
    %v657 = vunpack.c.l.s4 1966171168
    %v658 = vunpack.c.0.s8 %v657
    %v659 = vlaneseq
    %v660 = vshrl.u32 %v659, 7
    %v661 = vsub.s32 %v658, %v660
    %v662 = vrot.slane %v646, %v661
    %v664 = vunpack.c.l.s4 1966171168
    %v665 = vunpack.c.0.s8 %v664
    %v666 = vlaneseq
    %v667 = vshrl.u32 %v666, 7
    %v668 = vsub.s32 %v665, %v667
    %v669 = vrot.slane %v647, %v668
    %v671 = vunpack.c.l.s4 1966171168
    %v672 = vunpack.c.0.s8 %v671
    %v673 = vlaneseq
    %v674 = vshrl.u32 %v673, 7
    %v675 = vsub.s32 %v672, %v674
    %v676 = vrot.slane %v648, %v675
    %v677 = vcombine.low %v655, %v662
    %v678 = vcombine.low %v669, %v676
    %v680 = vunpack.c.l.s4 1966171168
    %v681 = vunpack.c.0.s8 %v680
    %v682 = vlaneseq
    %v683 = vshrl.u32 %v682, 7
    %v684 = vsub.s32 %v681, %v683
    %v685 = vrot.slane %v677, %v684
    %v687 = vunpack.c.l.s4 1966171168
    %v688 = vunpack.c.0.s8 %v687
    %v689 = vlaneseq
    %v690 = vshrl.u32 %v689, 7
    %v691 = vsub.s32 %v688, %v690
    %v692 = vrot.slane %v678, %v691
    %v693 = vcombine.low %v685, %v692
    %v695 = vmax.bf16 %v416, %v693
    %v696 = vrot.slane %v613, 1
    %v697 = vsel %vm283, %v621, %v696
    %v698 = vrot.slane %v614, 1
    %v699 = vsel %vm283, %v622, %v698
    %v700 = vrot.slane %v615, 1
    %v701 = vsel %vm283, %v623, %v700
    %v702 = vrot.slane %v616, 1
    %v703 = vsel %vm283, %v624, %v702
    %v704 = vrot.slane %v617, 1
    %v705 = vsel %vm283, %v625, %v704
    %v706 = vrot.slane %v618, 1
    %v707 = vsel %vm283, %v626, %v706
    %v708 = vrot.slane %v619, 1
    %v709 = vsel %vm283, %v627, %v708
    %v710 = vrot.slane %v620, 1
    %v711 = vsel %vm283, %v628, %v710
    %v712 = vpack.c.b16 %v699, %v697
    %v713 = vpack.c.b16 %v703, %v701
    %v714 = vpack.c.b16 %v707, %v705
    %v715 = vpack.c.b16 %v711, %v709
    %v717 = vunpack.c.l.s4 1966171168
    %v718 = vunpack.c.0.s8 %v717
    %v719 = vlaneseq
    %v720 = vshrl.u32 %v719, 7
    %v721 = vsub.s32 %v718, %v720
    %v722 = vrot.slane %v712, %v721
    %v724 = vunpack.c.l.s4 1966171168
    %v725 = vunpack.c.0.s8 %v724
    %v726 = vlaneseq
    %v727 = vshrl.u32 %v726, 7
    %v728 = vsub.s32 %v725, %v727
    %v729 = vrot.slane %v713, %v728
    %v731 = vunpack.c.l.s4 1966171168
    %v732 = vunpack.c.0.s8 %v731
    %v733 = vlaneseq
    %v734 = vshrl.u32 %v733, 7
    %v735 = vsub.s32 %v732, %v734
    %v736 = vrot.slane %v714, %v735
    %v738 = vunpack.c.l.s4 1966171168
    %v739 = vunpack.c.0.s8 %v738
    %v740 = vlaneseq
    %v741 = vshrl.u32 %v740, 7
    %v742 = vsub.s32 %v739, %v741
    %v743 = vrot.slane %v715, %v742
    %v744 = vcombine.low %v722, %v729
    %v745 = vcombine.low %v736, %v743
    %v747 = vunpack.c.l.s4 1966171168
    %v748 = vunpack.c.0.s8 %v747
    %v749 = vlaneseq
    %v750 = vshrl.u32 %v749, 7
    %v751 = vsub.s32 %v748, %v750
    %v752 = vrot.slane %v744, %v751
    %v754 = vunpack.c.l.s4 1966171168
    %v755 = vunpack.c.0.s8 %v754
    %v756 = vlaneseq
    %v757 = vshrl.u32 %v756, 7
    %v758 = vsub.s32 %v755, %v757
    %v759 = vrot.slane %v745, %v758
    %v760 = vcombine.low %v752, %v759
    %v762 = vmax.bf16 %v695, %v760
    %v763 = vld [vmem:[#allocation3] sm:$0x44]
    %v764 = vld [vmem:[#allocation3 + $0x8] sm:$0x44]
    %v765 = vld [vmem:[#allocation3 + $0x10] sm:$0x44]
    %v766 = vld [vmem:[#allocation3 + $0x18] sm:$0x44]
    %v767 = vld [vmem:[#allocation3 + $0x20] sm:$0x44]
    %v768 = vld [vmem:[#allocation3 + $0x28] sm:$0x44]
    %v769 = vld [vmem:[#allocation3 + $0x30] sm:$0x44]
    %v770 = vld [vmem:[#allocation3 + $0x38] sm:$0x44]
    %v780 = vunpack.c.l.s4 1966171168
    %v781 = vunpack.c.0.s8 %v780
    %v782 = vlaneseq
    %v783 = vshrl.u32 %v782, 7
    %v784 = vsub.s32 %v781, %v783
    %v785 = vrot.slane %v763, %v784
    %v787 = vunpack.c.l.s4 1966171168
    %v788 = vunpack.c.0.s8 %v787
    %v789 = vlaneseq
    %v790 = vshrl.u32 %v789, 7
    %v791 = vsub.s32 %v788, %v790
    %v792 = vrot.slane %v764, %v791
    %v794 = vunpack.c.l.s4 1966171168
    %v795 = vunpack.c.0.s8 %v794
    %v796 = vlaneseq
    %v797 = vshrl.u32 %v796, 7
    %v798 = vsub.s32 %v795, %v797
    %v799 = vrot.slane %v765, %v798
    %v801 = vunpack.c.l.s4 1966171168
    %v802 = vunpack.c.0.s8 %v801
    %v803 = vlaneseq
    %v804 = vshrl.u32 %v803, 7
    %v805 = vsub.s32 %v802, %v804
    %v806 = vrot.slane %v766, %v805
    %v807 = vcombine.low %v785, %v792
    %v808 = vcombine.low %v799, %v806
    %v810 = vunpack.c.l.s4 1966171168
    %v811 = vunpack.c.0.s8 %v810
    %v812 = vlaneseq
    %v813 = vshrl.u32 %v812, 7
    %v814 = vsub.s32 %v811, %v813
    %v815 = vrot.slane %v807, %v814
    %v817 = vunpack.c.l.s4 1966171168
    %v818 = vunpack.c.0.s8 %v817
    %v819 = vlaneseq
    %v820 = vshrl.u32 %v819, 7
    %v821 = vsub.s32 %v818, %v820
    %v822 = vrot.slane %v808, %v821
    %v823 = vcombine.high %v815, %v822
    %v825 = vunpack.c.l.s4 1966171168
    %v826 = vunpack.c.0.s8 %v825
    %v827 = vlaneseq
    %v828 = vshrl.u32 %v827, 7
    %v829 = vsub.s32 %v826, %v828
    %v830 = vrot.slane %v767, %v829
    %v832 = vunpack.c.l.s4 1966171168
    %v833 = vunpack.c.0.s8 %v832
    %v834 = vlaneseq
    %v835 = vshrl.u32 %v834, 7
    %v836 = vsub.s32 %v833, %v835
    %v837 = vrot.slane %v768, %v836
    %v839 = vunpack.c.l.s4 1966171168
    %v840 = vunpack.c.0.s8 %v839
    %v841 = vlaneseq
    %v842 = vshrl.u32 %v841, 7
    %v843 = vsub.s32 %v840, %v842
    %v844 = vrot.slane %v769, %v843
    %v846 = vunpack.c.l.s4 1966171168
    %v847 = vunpack.c.0.s8 %v846
    %v848 = vlaneseq
    %v849 = vshrl.u32 %v848, 7
    %v850 = vsub.s32 %v847, %v849
    %v851 = vrot.slane %v770, %v850
    %v852 = vcombine.low %v830, %v837
    %v853 = vcombine.low %v844, %v851
    %v855 = vunpack.c.l.s4 1966171168
    %v856 = vunpack.c.0.s8 %v855
    %v857 = vlaneseq
    %v858 = vshrl.u32 %v857, 7
    %v859 = vsub.s32 %v856, %v858
    %v860 = vrot.slane %v852, %v859
    %v862 = vunpack.c.l.s4 1966171168
    %v863 = vunpack.c.0.s8 %v862
    %v864 = vlaneseq
    %v865 = vshrl.u32 %v864, 7
    %v866 = vsub.s32 %v863, %v865
    %v867 = vrot.slane %v853, %v866
    %v868 = vcombine.high %v860, %v867
    %v869 = vcombine.high %v823, %v823
    %v871 = vunpack.c.l.s4 1935823168
    %v872 = vunpack.c.0.s8 %v871
    %v873 = vlaneseq
    %v874 = vshrl.u32 %v873, 7
    %v875 = vsub.s32 %v872, %v874
    %v876 = vrot.slane %v823, %v875
    %v878 = vunpack.c.l.s4 1935823168
    %v879 = vunpack.c.0.s8 %v878
    %v880 = vlaneseq
    %v881 = vshrl.u32 %v880, 7
    %v882 = vsub.s32 %v879, %v881
    %v883 = vrot.slane %v869, %v882
    %v884 = vcombine.high %v876, %v876
    %v885 = vcombine.high %v883, %v883
    %v887 = vunpack.c.l.s4 1935823168
    %v888 = vunpack.c.0.s8 %v887
    %v889 = vlaneseq
    %v890 = vshrl.u32 %v889, 7
    %v891 = vsub.s32 %v888, %v890
    %v892 = vrot.slane %v876, %v891
    %v894 = vunpack.c.l.s4 1935823168
    %v895 = vunpack.c.0.s8 %v894
    %v896 = vlaneseq
    %v897 = vshrl.u32 %v896, 7
    %v898 = vsub.s32 %v895, %v897
    %v899 = vrot.slane %v884, %v898
    %v901 = vunpack.c.l.s4 1935823168
    %v902 = vunpack.c.0.s8 %v901
    %v903 = vlaneseq
    %v904 = vshrl.u32 %v903, 7
    %v905 = vsub.s32 %v902, %v904
    %v906 = vrot.slane %v883, %v905
    %v908 = vunpack.c.l.s4 1935823168
    %v909 = vunpack.c.0.s8 %v908
    %v910 = vlaneseq
    %v911 = vshrl.u32 %v910, 7
    %v912 = vsub.s32 %v909, %v911
    %v913 = vrot.slane %v885, %v912
    %v914 = vcombine.high %v868, %v868
    %v916 = vunpack.c.l.s4 1935823168
    %v917 = vunpack.c.0.s8 %v916
    %v918 = vlaneseq
    %v919 = vshrl.u32 %v918, 7
    %v920 = vsub.s32 %v917, %v919
    %v921 = vrot.slane %v868, %v920
    %v923 = vunpack.c.l.s4 1935823168
    %v924 = vunpack.c.0.s8 %v923
    %v925 = vlaneseq
    %v926 = vshrl.u32 %v925, 7
    %v927 = vsub.s32 %v924, %v926
    %v928 = vrot.slane %v914, %v927
    %v929 = vcombine.high %v921, %v921
    %v930 = vcombine.high %v928, %v928
    %v932 = vunpack.c.l.s4 1935823168
    %v933 = vunpack.c.0.s8 %v932
    %v934 = vlaneseq
    %v935 = vshrl.u32 %v934, 7
    %v936 = vsub.s32 %v933, %v935
    %v937 = vrot.slane %v921, %v936
    %v939 = vunpack.c.l.s4 1935823168
    %v940 = vunpack.c.0.s8 %v939
    %v941 = vlaneseq
    %v942 = vshrl.u32 %v941, 7
    %v943 = vsub.s32 %v940, %v942
    %v944 = vrot.slane %v929, %v943
    %v946 = vunpack.c.l.s4 1935823168
    %v947 = vunpack.c.0.s8 %v946
    %v948 = vlaneseq
    %v949 = vshrl.u32 %v948, 7
    %v950 = vsub.s32 %v947, %v949
    %v951 = vrot.slane %v928, %v950
    %v953 = vunpack.c.l.s4 1935823168
    %v954 = vunpack.c.0.s8 %v953
    %v955 = vlaneseq
    %v956 = vshrl.u32 %v955, 7
    %v957 = vsub.s32 %v954, %v956
    %v958 = vrot.slane %v930, %v957
    %v959 = vunpack.c.l.b16 %v892
    %v960 = vunpack.c.h.b16 %v892
    %v961 = vunpack.c.l.b16 %v899
    %v962 = vunpack.c.h.b16 %v899
    %v963 = vunpack.c.l.b16 %v906
    %v964 = vunpack.c.h.b16 %v906
    %v965 = vunpack.c.l.b16 %v913
    %v966 = vunpack.c.h.b16 %v913
    %v967 = vunpack.c.l.b16 %v937
    %v968 = vunpack.c.h.b16 %v937
    %v969 = vunpack.c.l.b16 %v944
    %v970 = vunpack.c.h.b16 %v944
    %v971 = vunpack.c.l.b16 %v951
    %v972 = vunpack.c.h.b16 %v951
    %v973 = vunpack.c.l.b16 %v958
    %v974 = vunpack.c.h.b16 %v958
    %v975 = vrot.slane %v967, 7
    %v976 = vsel %vm283, %v975, %v959
    %v977 = vrot.slane %v968, 7
    %v978 = vsel %vm283, %v977, %v960
    %v979 = vrot.slane %v969, 7
    %v980 = vsel %vm283, %v979, %v961
    %v981 = vrot.slane %v970, 7
    %v982 = vsel %vm283, %v981, %v962
    %v983 = vrot.slane %v971, 7
    %v984 = vsel %vm283, %v983, %v963
    %v985 = vrot.slane %v972, 7
    %v986 = vsel %vm283, %v985, %v964
    %v987 = vrot.slane %v973, 7
    %v988 = vsel %vm283, %v987, %v965
    %v989 = vrot.slane %v974, 7
    %v990 = vsel %vm283, %v989, %v966
    %v991 = vpack.c.b16 %v978, %v976
    %v992 = vpack.c.b16 %v982, %v980
    %v993 = vpack.c.b16 %v986, %v984
    %v994 = vpack.c.b16 %v990, %v988
    %v996 = vunpack.c.l.s4 1966171168
    %v997 = vunpack.c.0.s8 %v996
    %v998 = vlaneseq
    %v999 = vshrl.u32 %v998, 7
    %v1000 = vsub.s32 %v997, %v999
    %v1001 = vrot.slane %v991, %v1000
    %v1003 = vunpack.c.l.s4 1966171168
    %v1004 = vunpack.c.0.s8 %v1003
    %v1005 = vlaneseq
    %v1006 = vshrl.u32 %v1005, 7
    %v1007 = vsub.s32 %v1004, %v1006
    %v1008 = vrot.slane %v992, %v1007
    %v1010 = vunpack.c.l.s4 1966171168
    %v1011 = vunpack.c.0.s8 %v1010
    %v1012 = vlaneseq
    %v1013 = vshrl.u32 %v1012, 7
    %v1014 = vsub.s32 %v1011, %v1013
    %v1015 = vrot.slane %v993, %v1014
    %v1017 = vunpack.c.l.s4 1966171168
    %v1018 = vunpack.c.0.s8 %v1017
    %v1019 = vlaneseq
    %v1020 = vshrl.u32 %v1019, 7
    %v1021 = vsub.s32 %v1018, %v1020
    %v1022 = vrot.slane %v994, %v1021
    %v1023 = vcombine.low %v1001, %v1008
    %v1024 = vcombine.low %v1015, %v1022
    %v1026 = vunpack.c.l.s4 1966171168
    %v1027 = vunpack.c.0.s8 %v1026
    %v1028 = vlaneseq
    %v1029 = vshrl.u32 %v1028, 7
    %v1030 = vsub.s32 %v1027, %v1029
    %v1031 = vrot.slane %v1023, %v1030
    %v1033 = vunpack.c.l.s4 1966171168
    %v1034 = vunpack.c.0.s8 %v1033
    %v1035 = vlaneseq
    %v1036 = vshrl.u32 %v1035, 7
    %v1037 = vsub.s32 %v1034, %v1036
    %v1038 = vrot.slane %v1024, %v1037
    %v1039 = vcombine.low %v1031, %v1038
    %v1041 = vmax.bf16 %v762, %v1039
    %v1042 = vrot.slane %v959, 1
    %v1043 = vsel %vm283, %v967, %v1042
    %v1044 = vrot.slane %v960, 1
    %v1045 = vsel %vm283, %v968, %v1044
    %v1046 = vrot.slane %v961, 1
    %v1047 = vsel %vm283, %v969, %v1046
    %v1048 = vrot.slane %v962, 1
    %v1049 = vsel %vm283, %v970, %v1048
    %v1050 = vrot.slane %v963, 1
    %v1051 = vsel %vm283, %v971, %v1050
    %v1052 = vrot.slane %v964, 1
    %v1053 = vsel %vm283, %v972, %v1052
    %v1054 = vrot.slane %v965, 1
    %v1055 = vsel %vm283, %v973, %v1054
    %v1056 = vrot.slane %v966, 1
    %v1057 = vsel %vm283, %v974, %v1056
    %v1058 = vpack.c.b16 %v1045, %v1043
    %v1059 = vpack.c.b16 %v1049, %v1047
    %v1060 = vpack.c.b16 %v1053, %v1051
    %v1061 = vpack.c.b16 %v1057, %v1055
    %v1063 = vunpack.c.l.s4 1966171168
    %v1064 = vunpack.c.0.s8 %v1063
    %v1065 = vlaneseq
    %v1066 = vshrl.u32 %v1065, 7
    %v1067 = vsub.s32 %v1064, %v1066
    %v1068 = vrot.slane %v1058, %v1067
    %v1070 = vunpack.c.l.s4 1966171168
    %v1071 = vunpack.c.0.s8 %v1070
    %v1072 = vlaneseq
    %v1073 = vshrl.u32 %v1072, 7
    %v1074 = vsub.s32 %v1071, %v1073
    %v1075 = vrot.slane %v1059, %v1074
    %v1077 = vunpack.c.l.s4 1966171168
    %v1078 = vunpack.c.0.s8 %v1077
    %v1079 = vlaneseq
    %v1080 = vshrl.u32 %v1079, 7
    %v1081 = vsub.s32 %v1078, %v1080
    %v1082 = vrot.slane %v1060, %v1081
    %v1084 = vunpack.c.l.s4 1966171168
    %v1085 = vunpack.c.0.s8 %v1084
    %v1086 = vlaneseq
    %v1087 = vshrl.u32 %v1086, 7
    %v1088 = vsub.s32 %v1085, %v1087
    %v1089 = vrot.slane %v1061, %v1088
    %v1090 = vcombine.low %v1068, %v1075
    %v1091 = vcombine.low %v1082, %v1089
    %v1093 = vunpack.c.l.s4 1966171168
    %v1094 = vunpack.c.0.s8 %v1093
    %v1095 = vlaneseq
    %v1096 = vshrl.u32 %v1095, 7
    %v1097 = vsub.s32 %v1094, %v1096
    %v1098 = vrot.slane %v1090, %v1097
    %v1100 = vunpack.c.l.s4 1966171168
    %v1101 = vunpack.c.0.s8 %v1100
    %v1102 = vlaneseq
    %v1103 = vshrl.u32 %v1102, 7
    %v1104 = vsub.s32 %v1101, %v1103
    %v1105 = vrot.slane %v1091, %v1104
    %v1106 = vcombine.low %v1098, %v1105
    %v1108 = vmax.bf16 %v1041, %v1106
    %v1109 = vld [vmem:[#allocation3] sm:$0x88]
    %v1110 = vld [vmem:[#allocation3 + $0x8] sm:$0x88]
    %v1111 = vld [vmem:[#allocation3 + $0x10] sm:$0x88]
    %v1112 = vld [vmem:[#allocation3 + $0x18] sm:$0x88]
    %v1113 = vld [vmem:[#allocation3 + $0x20] sm:$0x88]
    %v1114 = vld [vmem:[#allocation3 + $0x28] sm:$0x88]
    %v1115 = vld [vmem:[#allocation3 + $0x30] sm:$0x88]
    %v1116 = vld [vmem:[#allocation3 + $0x38] sm:$0x88]
    %v1126 = vunpack.c.l.s4 1966171168
    %v1127 = vunpack.c.0.s8 %v1126
    %v1128 = vlaneseq
    %v1129 = vshrl.u32 %v1128, 7
    %v1130 = vsub.s32 %v1127, %v1129
    %v1131 = vrot.slane %v1109, %v1130
    %v1133 = vunpack.c.l.s4 1966171168
    %v1134 = vunpack.c.0.s8 %v1133
    %v1135 = vlaneseq
    %v1136 = vshrl.u32 %v1135, 7
    %v1137 = vsub.s32 %v1134, %v1136
    %v1138 = vrot.slane %v1110, %v1137
    %v1140 = vunpack.c.l.s4 1966171168
    %v1141 = vunpack.c.0.s8 %v1140
    %v1142 = vlaneseq
    %v1143 = vshrl.u32 %v1142, 7
    %v1144 = vsub.s32 %v1141, %v1143
    %v1145 = vrot.slane %v1111, %v1144
    %v1147 = vunpack.c.l.s4 1966171168
    %v1148 = vunpack.c.0.s8 %v1147
    %v1149 = vlaneseq
    %v1150 = vshrl.u32 %v1149, 7
    %v1151 = vsub.s32 %v1148, %v1150
    %v1152 = vrot.slane %v1112, %v1151
    %v1153 = vcombine.high %v1131, %v1138
    %v1154 = vcombine.high %v1145, %v1152
    %v1156 = vunpack.c.l.s4 1966171168
    %v1157 = vunpack.c.0.s8 %v1156
    %v1158 = vlaneseq
    %v1159 = vshrl.u32 %v1158, 7
    %v1160 = vsub.s32 %v1157, %v1159
    %v1161 = vrot.slane %v1153, %v1160
    %v1163 = vunpack.c.l.s4 1966171168
    %v1164 = vunpack.c.0.s8 %v1163
    %v1165 = vlaneseq
    %v1166 = vshrl.u32 %v1165, 7
    %v1167 = vsub.s32 %v1164, %v1166
    %v1168 = vrot.slane %v1154, %v1167
    %v1169 = vcombine.high %v1161, %v1168
    %v1171 = vunpack.c.l.s4 1966171168
    %v1172 = vunpack.c.0.s8 %v1171
    %v1173 = vlaneseq
    %v1174 = vshrl.u32 %v1173, 7
    %v1175 = vsub.s32 %v1172, %v1174
    %v1176 = vrot.slane %v1113, %v1175
    %v1178 = vunpack.c.l.s4 1966171168
    %v1179 = vunpack.c.0.s8 %v1178
    %v1180 = vlaneseq
    %v1181 = vshrl.u32 %v1180, 7
    %v1182 = vsub.s32 %v1179, %v1181
    %v1183 = vrot.slane %v1114, %v1182
    %v1185 = vunpack.c.l.s4 1966171168
    %v1186 = vunpack.c.0.s8 %v1185
    %v1187 = vlaneseq
    %v1188 = vshrl.u32 %v1187, 7
    %v1189 = vsub.s32 %v1186, %v1188
    %v1190 = vrot.slane %v1115, %v1189
    %v1192 = vunpack.c.l.s4 1966171168
    %v1193 = vunpack.c.0.s8 %v1192
    %v1194 = vlaneseq
    %v1195 = vshrl.u32 %v1194, 7
    %v1196 = vsub.s32 %v1193, %v1195
    %v1197 = vrot.slane %v1116, %v1196
    %v1198 = vcombine.high %v1176, %v1183
    %v1199 = vcombine.high %v1190, %v1197
    %v1201 = vunpack.c.l.s4 1966171168
    %v1202 = vunpack.c.0.s8 %v1201
    %v1203 = vlaneseq
    %v1204 = vshrl.u32 %v1203, 7
    %v1205 = vsub.s32 %v1202, %v1204
    %v1206 = vrot.slane %v1198, %v1205
    %v1208 = vunpack.c.l.s4 1966171168
    %v1209 = vunpack.c.0.s8 %v1208
    %v1210 = vlaneseq
    %v1211 = vshrl.u32 %v1210, 7
    %v1212 = vsub.s32 %v1209, %v1211
    %v1213 = vrot.slane %v1199, %v1212
    %v1214 = vcombine.high %v1206, %v1213
    %v1215 = vcombine.high %v1169, %v1169
    %v1217 = vunpack.c.l.s4 1935823168
    %v1218 = vunpack.c.0.s8 %v1217
    %v1219 = vlaneseq
    %v1220 = vshrl.u32 %v1219, 7
    %v1221 = vsub.s32 %v1218, %v1220
    %v1222 = vrot.slane %v1169, %v1221
    %v1224 = vunpack.c.l.s4 1935823168
    %v1225 = vunpack.c.0.s8 %v1224
    %v1226 = vlaneseq
    %v1227 = vshrl.u32 %v1226, 7
    %v1228 = vsub.s32 %v1225, %v1227
    %v1229 = vrot.slane %v1215, %v1228
    %v1230 = vcombine.high %v1222, %v1222
    %v1231 = vcombine.high %v1229, %v1229
    %v1233 = vunpack.c.l.s4 1935823168
    %v1234 = vunpack.c.0.s8 %v1233
    %v1235 = vlaneseq
    %v1236 = vshrl.u32 %v1235, 7
    %v1237 = vsub.s32 %v1234, %v1236
    %v1238 = vrot.slane %v1222, %v1237
    %v1240 = vunpack.c.l.s4 1935823168
    %v1241 = vunpack.c.0.s8 %v1240
    %v1242 = vlaneseq
    %v1243 = vshrl.u32 %v1242, 7
    %v1244 = vsub.s32 %v1241, %v1243
    %v1245 = vrot.slane %v1230, %v1244
    %v1247 = vunpack.c.l.s4 1935823168
    %v1248 = vunpack.c.0.s8 %v1247
    %v1249 = vlaneseq
    %v1250 = vshrl.u32 %v1249, 7
    %v1251 = vsub.s32 %v1248, %v1250
    %v1252 = vrot.slane %v1229, %v1251
    %v1254 = vunpack.c.l.s4 1935823168
    %v1255 = vunpack.c.0.s8 %v1254
    %v1256 = vlaneseq
    %v1257 = vshrl.u32 %v1256, 7
    %v1258 = vsub.s32 %v1255, %v1257
    %v1259 = vrot.slane %v1231, %v1258
    %v1260 = vcombine.high %v1214, %v1214
    %v1262 = vunpack.c.l.s4 1935823168
    %v1263 = vunpack.c.0.s8 %v1262
    %v1264 = vlaneseq
    %v1265 = vshrl.u32 %v1264, 7
    %v1266 = vsub.s32 %v1263, %v1265
    %v1267 = vrot.slane %v1214, %v1266
    %v1269 = vunpack.c.l.s4 1935823168
    %v1270 = vunpack.c.0.s8 %v1269
    %v1271 = vlaneseq
    %v1272 = vshrl.u32 %v1271, 7
    %v1273 = vsub.s32 %v1270, %v1272
    %v1274 = vrot.slane %v1260, %v1273
    %v1275 = vcombine.high %v1267, %v1267
    %v1276 = vcombine.high %v1274, %v1274
    %v1278 = vunpack.c.l.s4 1935823168
    %v1279 = vunpack.c.0.s8 %v1278
    %v1280 = vlaneseq
    %v1281 = vshrl.u32 %v1280, 7
    %v1282 = vsub.s32 %v1279, %v1281
    %v1283 = vrot.slane %v1267, %v1282
    %v1285 = vunpack.c.l.s4 1935823168
    %v1286 = vunpack.c.0.s8 %v1285
    %v1287 = vlaneseq
    %v1288 = vshrl.u32 %v1287, 7
    %v1289 = vsub.s32 %v1286, %v1288
    %v1290 = vrot.slane %v1275, %v1289
    %v1292 = vunpack.c.l.s4 1935823168
    %v1293 = vunpack.c.0.s8 %v1292
    %v1294 = vlaneseq
    %v1295 = vshrl.u32 %v1294, 7
    %v1296 = vsub.s32 %v1293, %v1295
    %v1297 = vrot.slane %v1274, %v1296
    %v1299 = vunpack.c.l.s4 1935823168
    %v1300 = vunpack.c.0.s8 %v1299
    %v1301 = vlaneseq
    %v1302 = vshrl.u32 %v1301, 7
    %v1303 = vsub.s32 %v1300, %v1302
    %v1304 = vrot.slane %v1276, %v1303
    %v1305 = vunpack.c.l.b16 %v1238
    %v1306 = vunpack.c.h.b16 %v1238
    %v1307 = vunpack.c.l.b16 %v1245
    %v1308 = vunpack.c.h.b16 %v1245
    %v1309 = vunpack.c.l.b16 %v1252
    %v1310 = vunpack.c.h.b16 %v1252
    %v1311 = vunpack.c.l.b16 %v1259
    %v1312 = vunpack.c.h.b16 %v1259
    %v1313 = vunpack.c.l.b16 %v1283
    %v1314 = vunpack.c.h.b16 %v1283
    %v1315 = vunpack.c.l.b16 %v1290
    %v1316 = vunpack.c.h.b16 %v1290
    %v1317 = vunpack.c.l.b16 %v1297
    %v1318 = vunpack.c.h.b16 %v1297
    %v1319 = vunpack.c.l.b16 %v1304
    %v1320 = vunpack.c.h.b16 %v1304
    %v1321 = vrot.slane %v1313, 7
    %v1322 = vsel %vm283, %v1321, %v1305
    %v1323 = vrot.slane %v1314, 7
    %v1324 = vsel %vm283, %v1323, %v1306
    %v1325 = vrot.slane %v1315, 7
    %v1326 = vsel %vm283, %v1325, %v1307
    %v1327 = vrot.slane %v1316, 7
    %v1328 = vsel %vm283, %v1327, %v1308
    %v1329 = vrot.slane %v1317, 7
    %v1330 = vsel %vm283, %v1329, %v1309
    %v1331 = vrot.slane %v1318, 7
    %v1332 = vsel %vm283, %v1331, %v1310
    %v1333 = vrot.slane %v1319, 7
    %v1334 = vsel %vm283, %v1333, %v1311
    %v1335 = vrot.slane %v1320, 7
    %v1336 = vsel %vm283, %v1335, %v1312
    %v1337 = vpack.c.b16 %v1324, %v1322
    %v1338 = vpack.c.b16 %v1328, %v1326
    %v1339 = vpack.c.b16 %v1332, %v1330
    %v1340 = vpack.c.b16 %v1336, %v1334
    %v1342 = vunpack.c.l.s4 1966171168
    %v1343 = vunpack.c.0.s8 %v1342
    %v1344 = vlaneseq
    %v1345 = vshrl.u32 %v1344, 7
    %v1346 = vsub.s32 %v1343, %v1345
    %v1347 = vrot.slane %v1337, %v1346
    %v1349 = vunpack.c.l.s4 1966171168
    %v1350 = vunpack.c.0.s8 %v1349
    %v1351 = vlaneseq
    %v1352 = vshrl.u32 %v1351, 7
    %v1353 = vsub.s32 %v1350, %v1352
    %v1354 = vrot.slane %v1338, %v1353
    %v1356 = vunpack.c.l.s4 1966171168
    %v1357 = vunpack.c.0.s8 %v1356
    %v1358 = vlaneseq
    %v1359 = vshrl.u32 %v1358, 7
    %v1360 = vsub.s32 %v1357, %v1359
    %v1361 = vrot.slane %v1339, %v1360
    %v1363 = vunpack.c.l.s4 1966171168
    %v1364 = vunpack.c.0.s8 %v1363
    %v1365 = vlaneseq
    %v1366 = vshrl.u32 %v1365, 7
    %v1367 = vsub.s32 %v1364, %v1366
    %v1368 = vrot.slane %v1340, %v1367
    %v1369 = vcombine.low %v1347, %v1354
    %v1370 = vcombine.low %v1361, %v1368
    %v1372 = vunpack.c.l.s4 1966171168
    %v1373 = vunpack.c.0.s8 %v1372
    %v1374 = vlaneseq
    %v1375 = vshrl.u32 %v1374, 7
    %v1376 = vsub.s32 %v1373, %v1375
    %v1377 = vrot.slane %v1369, %v1376
    %v1379 = vunpack.c.l.s4 1966171168
    %v1380 = vunpack.c.0.s8 %v1379
    %v1381 = vlaneseq
    %v1382 = vshrl.u32 %v1381, 7
    %v1383 = vsub.s32 %v1380, %v1382
    %v1384 = vrot.slane %v1370, %v1383
    %v1385 = vcombine.low %v1377, %v1384
    %v1387 = vmax.bf16 %v1108, %v1385
    %v1388 = vrot.slane %v1305, 1
    %v1389 = vsel %vm283, %v1313, %v1388
    %v1390 = vrot.slane %v1306, 1
    %v1391 = vsel %vm283, %v1314, %v1390
    %v1392 = vrot.slane %v1307, 1
    %v1393 = vsel %vm283, %v1315, %v1392
    %v1394 = vrot.slane %v1308, 1
    %v1395 = vsel %vm283, %v1316, %v1394
    %v1396 = vrot.slane %v1309, 1
    %v1397 = vsel %vm283, %v1317, %v1396
    %v1398 = vrot.slane %v1310, 1
    %v1399 = vsel %vm283, %v1318, %v1398
    %v1400 = vrot.slane %v1311, 1
    %v1401 = vsel %vm283, %v1319, %v1400
    %v1402 = vrot.slane %v1312, 1
    %v1403 = vsel %vm283, %v1320, %v1402
    %v1404 = vpack.c.b16 %v1391, %v1389
    %v1405 = vpack.c.b16 %v1395, %v1393
    %v1406 = vpack.c.b16 %v1399, %v1397
    %v1407 = vpack.c.b16 %v1403, %v1401
    %v1409 = vunpack.c.l.s4 1966171168
    %v1410 = vunpack.c.0.s8 %v1409
    %v1411 = vlaneseq
    %v1412 = vshrl.u32 %v1411, 7
    %v1413 = vsub.s32 %v1410, %v1412
    %v1414 = vrot.slane %v1404, %v1413
    %v1416 = vunpack.c.l.s4 1966171168
    %v1417 = vunpack.c.0.s8 %v1416
    %v1418 = vlaneseq
    %v1419 = vshrl.u32 %v1418, 7
    %v1420 = vsub.s32 %v1417, %v1419
    %v1421 = vrot.slane %v1405, %v1420
    %v1423 = vunpack.c.l.s4 1966171168
    %v1424 = vunpack.c.0.s8 %v1423
    %v1425 = vlaneseq
    %v1426 = vshrl.u32 %v1425, 7
    %v1427 = vsub.s32 %v1424, %v1426
    %v1428 = vrot.slane %v1406, %v1427
    %v1430 = vunpack.c.l.s4 1966171168
    %v1431 = vunpack.c.0.s8 %v1430
    %v1432 = vlaneseq
    %v1433 = vshrl.u32 %v1432, 7
    %v1434 = vsub.s32 %v1431, %v1433
    %v1435 = vrot.slane %v1407, %v1434
    %v1436 = vcombine.low %v1414, %v1421
    %v1437 = vcombine.low %v1428, %v1435
    %v1439 = vunpack.c.l.s4 1966171168
    %v1440 = vunpack.c.0.s8 %v1439
    %v1441 = vlaneseq
    %v1442 = vshrl.u32 %v1441, 7
    %v1443 = vsub.s32 %v1440, %v1442
    %v1444 = vrot.slane %v1436, %v1443
    %v1446 = vunpack.c.l.s4 1966171168
    %v1447 = vunpack.c.0.s8 %v1446
    %v1448 = vlaneseq
    %v1449 = vshrl.u32 %v1448, 7
    %v1450 = vsub.s32 %v1447, %v1449
    %v1451 = vrot.slane %v1437, %v1450
    %v1452 = vcombine.low %v1444, %v1451
    %v1454 = vmax.bf16 %v1387, %v1452
    %1455 = vst [vmem:[#allocation2] sm:$0xff] %v1454
    // Predicated region
    $region38: #{tpu_custom_call.1} parent=1 // pred_check
      %p1456 = pneg %p64
    $region39: #{tpu_custom_call.1} parent=1 // pred_check_branch
      %1458 = sbr.rel (%p1456) target = $region41
    $region40: #{tpu_custom_call.1} parent=1 // pred_region
      %v1459 = vld [vmem:[#allocation2] sm:$0xff]
      %v1460 = vld [vmem:[#allocation6] sm:$0xff]
      %v1461 = vld [vmem:[#allocation6 + $0x8] sm:$0xff]
      %v1462 = vld [vmem:[#allocation6 + $0x10] sm:$0xff]
      %v1463 = vld [vmem:[#allocation6 + $0x18] sm:$0xff]
      %v1464 = vld [vmem:[#allocation6 + $0x20] sm:$0xff]
      %v1465 = vld [vmem:[#allocation6 + $0x28] sm:$0xff]
      %v1466 = vld [vmem:[#allocation6 + $0x30] sm:$0xff]
      %v1467 = vld [vmem:[#allocation6 + $0x38] sm:$0xff]
      %v1468 = vld [vmem:[#allocation6 + $0x40] sm:$0xff]
      %v1469 = vld [vmem:[#allocation6 + $0x48] sm:$0xff]
      %v1470 = vld [vmem:[#allocation6 + $0x50] sm:$0xff]
      %v1471 = vld [vmem:[#allocation6 + $0x58] sm:$0xff]
      %v1472 = vld [vmem:[#allocation6 + $0x60] sm:$0xff]
      %v1473 = vld [vmem:[#allocation6 + $0x68] sm:$0xff]
      %v1474 = vld [vmem:[#allocation6 + $0x70] sm:$0xff]
      %v1475 = vld [vmem:[#allocation6 + $0x78] sm:$0xff]
      %v1476 = vld [vmem:[#allocation6 + $0x80] sm:$0xff]
      %v1477 = vld [vmem:[#allocation6 + $0x88] sm:$0xff]
      %v1478 = vld [vmem:[#allocation6 + $0x90] sm:$0xff]
      %v1479 = vld [vmem:[#allocation6 + $0x98] sm:$0xff]
      %v1480 = vld [vmem:[#allocation6 + $0xa0] sm:$0xff]
      %v1481 = vld [vmem:[#allocation6 + $0xa8] sm:$0xff]
      %v1482 = vld [vmem:[#allocation6 + $0xb0] sm:$0xff]
      %v1483 = vld [vmem:[#allocation6 + $0xb8] sm:$0xff]
      %v1484 = vld [vmem:[#allocation6 + $0xc0] sm:$0xff]
      %v1485 = vld [vmem:[#allocation6 + $0xc8] sm:$0xff]
      %v1486 = vld [vmem:[#allocation6 + $0xd0] sm:$0xff]
      %v1487 = vld [vmem:[#allocation6 + $0xd8] sm:$0xff]
      %v1488 = vld [vmem:[#allocation6 + $0xe0] sm:$0xff]
      %v1489 = vld [vmem:[#allocation6 + $0xe8] sm:$0xff]
      %v1490 = vld [vmem:[#allocation6 + $0xf0] sm:$0xff]
      %v1491 = vld [vmem:[#allocation6 + $0xf8] sm:$0xff]
      %v1492 = vld [vmem:[#allocation6 + $0x100] sm:$0xff]
      %v1493 = vld [vmem:[#allocation6 + $0x108] sm:$0xff]
      %v1494 = vld [vmem:[#allocation6 + $0x110] sm:$0xff]
      %v1495 = vld [vmem:[#allocation6 + $0x118] sm:$0xff]
      %v1496 = vld [vmem:[#allocation6 + $0x120] sm:$0xff]
      %v1497 = vld [vmem:[#allocation6 + $0x128] sm:$0xff]
      %v1498 = vld [vmem:[#allocation6 + $0x130] sm:$0xff]
      %v1499 = vld [vmem:[#allocation6 + $0x138] sm:$0xff]
      %v1500 = vld [vmem:[#allocation6 + $0x140] sm:$0xff]
      %v1501 = vld [vmem:[#allocation6 + $0x148] sm:$0xff]
      %v1502 = vld [vmem:[#allocation6 + $0x150] sm:$0xff]
      %v1503 = vld [vmem:[#allocation6 + $0x158] sm:$0xff]
      %v1504 = vld [vmem:[#allocation6 + $0x160] sm:$0xff]
      %v1505 = vld [vmem:[#allocation6 + $0x168] sm:$0xff]
      %v1506 = vld [vmem:[#allocation6 + $0x170] sm:$0xff]
      %v1507 = vld [vmem:[#allocation6 + $0x178] sm:$0xff]
      %v1508 = vld [vmem:[#allocation6 + $0x180] sm:$0xff]
      %v1509 = vld [vmem:[#allocation6 + $0x188] sm:$0xff]
      %v1510 = vld [vmem:[#allocation6 + $0x190] sm:$0xff]
      %v1511 = vld [vmem:[#allocation6 + $0x198] sm:$0xff]
      %v1512 = vld [vmem:[#allocation6 + $0x1a0] sm:$0xff]
      %v1513 = vld [vmem:[#allocation6 + $0x1a8] sm:$0xff]
      %v1514 = vld [vmem:[#allocation6 + $0x1b0] sm:$0xff]
      %v1515 = vld [vmem:[#allocation6 + $0x1b8] sm:$0xff]
      %v1516 = vld [vmem:[#allocation6 + $0x1c0] sm:$0xff]
      %v1517 = vld [vmem:[#allocation6 + $0x1c8] sm:$0xff]
      %v1518 = vld [vmem:[#allocation6 + $0x1d0] sm:$0xff]
      %v1519 = vld [vmem:[#allocation6 + $0x1d8] sm:$0xff]
      %v1520 = vld [vmem:[#allocation6 + $0x1e0] sm:$0xff]
      %v1521 = vld [vmem:[#allocation6 + $0x1e8] sm:$0xff]
      %v1522 = vld [vmem:[#allocation6 + $0x1f0] sm:$0xff]
      %v1523 = vld [vmem:[#allocation6 + $0x1f8] sm:$0xff]
      %v1524 = vld [vmem:[#allocation6 + $0x200] sm:$0xff]
      %v1525 = vld [vmem:[#allocation6 + $0x208] sm:$0xff]
      %v1526 = vld [vmem:[#allocation6 + $0x210] sm:$0xff]
      %v1527 = vld [vmem:[#allocation6 + $0x218] sm:$0xff]
      %v1528 = vld [vmem:[#allocation6 + $0x220] sm:$0xff]
      %v1529 = vld [vmem:[#allocation6 + $0x228] sm:$0xff]
      %v1530 = vld [vmem:[#allocation6 + $0x230] sm:$0xff]
      %v1531 = vld [vmem:[#allocation6 + $0x238] sm:$0xff]
      %v1532 = vld [vmem:[#allocation6 + $0x240] sm:$0xff]
      %v1533 = vld [vmem:[#allocation6 + $0x248] sm:$0xff]
      %v1534 = vld [vmem:[#allocation6 + $0x250] sm:$0xff]
      %v1535 = vld [vmem:[#allocation6 + $0x258] sm:$0xff]
      %v1536 = vld [vmem:[#allocation6 + $0x260] sm:$0xff]
      %v1537 = vld [vmem:[#allocation6 + $0x268] sm:$0xff]
      %v1538 = vld [vmem:[#allocation6 + $0x270] sm:$0xff]
      %v1539 = vld [vmem:[#allocation6 + $0x278] sm:$0xff]
      %v1540 = vld [vmem:[#allocation6 + $0x280] sm:$0xff]
      %v1541 = vld [vmem:[#allocation6 + $0x288] sm:$0xff]
      %v1542 = vld [vmem:[#allocation6 + $0x290] sm:$0xff]
      %v1543 = vld [vmem:[#allocation6 + $0x298] sm:$0xff]
      %v1544 = vld [vmem:[#allocation6 + $0x2a0] sm:$0xff]
      %v1545 = vld [vmem:[#allocation6 + $0x2a8] sm:$0xff]
      %v1546 = vld [vmem:[#allocation6 + $0x2b0] sm:$0xff]
      %v1547 = vld [vmem:[#allocation6 + $0x2b8] sm:$0xff]
      %v1548 = vld [vmem:[#allocation6 + $0x2c0] sm:$0xff]
      %v1549 = vld [vmem:[#allocation6 + $0x2c8] sm:$0xff]
      %v1550 = vld [vmem:[#allocation6 + $0x2d0] sm:$0xff]
      %v1551 = vld [vmem:[#allocation6 + $0x2d8] sm:$0xff]
      %v1552 = vld [vmem:[#allocation6 + $0x2e0] sm:$0xff]
      %v1553 = vld [vmem:[#allocation6 + $0x2e8] sm:$0xff]
      %v1554 = vld [vmem:[#allocation6 + $0x2f0] sm:$0xff]
      %v1555 = vld [vmem:[#allocation6 + $0x2f8] sm:$0xff]
      %v1556 = vld [vmem:[#allocation6 + $0x300] sm:$0xff]
      %v1557 = vld [vmem:[#allocation6 + $0x308] sm:$0xff]
      %v1558 = vld [vmem:[#allocation6 + $0x310] sm:$0xff]
      %v1559 = vld [vmem:[#allocation6 + $0x318] sm:$0xff]
      %v1560 = vld [vmem:[#allocation6 + $0x320] sm:$0xff]
      %v1561 = vld [vmem:[#allocation6 + $0x328] sm:$0xff]
      %v1562 = vld [vmem:[#allocation6 + $0x330] sm:$0xff]
      %v1563 = vld [vmem:[#allocation6 + $0x338] sm:$0xff]
      %v1564 = vld [vmem:[#allocation6 + $0x340] sm:$0xff]
      %v1565 = vld [vmem:[#allocation6 + $0x348] sm:$0xff]
      %v1566 = vld [vmem:[#allocation6 + $0x350] sm:$0xff]
      %v1567 = vld [vmem:[#allocation6 + $0x358] sm:$0xff]
      %v1568 = vld [vmem:[#allocation6 + $0x360] sm:$0xff]
      %v1569 = vld [vmem:[#allocation6 + $0x368] sm:$0xff]
      %v1570 = vld [vmem:[#allocation6 + $0x370] sm:$0xff]
      %v1571 = vld [vmem:[#allocation6 + $0x378] sm:$0xff]
      %v1572 = vld [vmem:[#allocation6 + $0x380] sm:$0xff]
      %v1573 = vld [vmem:[#allocation6 + $0x388] sm:$0xff]
      %v1574 = vld [vmem:[#allocation6 + $0x390] sm:$0xff]
      %v1575 = vld [vmem:[#allocation6 + $0x398] sm:$0xff]
      %v1576 = vld [vmem:[#allocation6 + $0x3a0] sm:$0xff]
      %v1577 = vld [vmem:[#allocation6 + $0x3a8] sm:$0xff]
      %v1578 = vld [vmem:[#allocation6 + $0x3b0] sm:$0xff]
      %v1579 = vld [vmem:[#allocation6 + $0x3b8] sm:$0xff]
      %v1580 = vld [vmem:[#allocation6 + $0x3c0] sm:$0xff]
      %v1581 = vld [vmem:[#allocation6 + $0x3c8] sm:$0xff]
      %v1582 = vld [vmem:[#allocation6 + $0x3d0] sm:$0xff]
      %v1583 = vld [vmem:[#allocation6 + $0x3d8] sm:$0xff]
      %v1584 = vld [vmem:[#allocation6 + $0x3e0] sm:$0xff]
      %v1585 = vld [vmem:[#allocation6 + $0x3e8] sm:$0xff]
      %v1586 = vld [vmem:[#allocation6 + $0x3f0] sm:$0xff]
      %v1587 = vld [vmem:[#allocation6 + $0x3f8] sm:$0xff]
      %v1588 = vld [vmem:[#allocation6 + $0x400] sm:$0xff]
      %v1589 = vld [vmem:[#allocation6 + $0x408] sm:$0xff]
      %v1590 = vld [vmem:[#allocation6 + $0x410] sm:$0xff]
      %v1591 = vld [vmem:[#allocation6 + $0x418] sm:$0xff]
      %v1592 = vld [vmem:[#allocation6 + $0x420] sm:$0xff]
      %v1593 = vld [vmem:[#allocation6 + $0x428] sm:$0xff]
      %v1594 = vld [vmem:[#allocation6 + $0x430] sm:$0xff]
      %v1595 = vld [vmem:[#allocation6 + $0x438] sm:$0xff]
      %v1596 = vld [vmem:[#allocation6 + $0x440] sm:$0xff]
      %v1597 = vld [vmem:[#allocation6 + $0x448] sm:$0xff]
      %v1598 = vld [vmem:[#allocation6 + $0x450] sm:$0xff]
      %v1599 = vld [vmem:[#allocation6 + $0x458] sm:$0xff]
      %v1600 = vld [vmem:[#allocation6 + $0x460] sm:$0xff]
      %v1601 = vld [vmem:[#allocation6 + $0x468] sm:$0xff]
      %v1602 = vld [vmem:[#allocation6 + $0x470] sm:$0xff]
      %v1603 = vld [vmem:[#allocation6 + $0x478] sm:$0xff]
      %v1604 = vld [vmem:[#allocation6 + $0x480] sm:$0xff]
      %v1605 = vld [vmem:[#allocation6 + $0x488] sm:$0xff]
      %v1606 = vld [vmem:[#allocation6 + $0x490] sm:$0xff]
      %v1607 = vld [vmem:[#allocation6 + $0x498] sm:$0xff]
      %v1608 = vld [vmem:[#allocation6 + $0x4a0] sm:$0xff]
      %v1609 = vld [vmem:[#allocation6 + $0x4a8] sm:$0xff]
      %v1610 = vld [vmem:[#allocation6 + $0x4b0] sm:$0xff]
      %v1611 = vld [vmem:[#allocation6 + $0x4b8] sm:$0xff]
      %v1612 = vld [vmem:[#allocation6 + $0x4c0] sm:$0xff]
      %v1613 = vld [vmem:[#allocation6 + $0x4c8] sm:$0xff]
      %v1614 = vld [vmem:[#allocation6 + $0x4d0] sm:$0xff]
      %v1615 = vld [vmem:[#allocation6 + $0x4d8] sm:$0xff]
      %v1616 = vld [vmem:[#allocation6 + $0x4e0] sm:$0xff]
      %v1617 = vld [vmem:[#allocation6 + $0x4e8] sm:$0xff]
      %v1618 = vld [vmem:[#allocation6 + $0x4f0] sm:$0xff]
      %v1619 = vld [vmem:[#allocation6 + $0x4f8] sm:$0xff]
      %v1620 = vld [vmem:[#allocation6 + $0x500] sm:$0xff]
      %v1621 = vld [vmem:[#allocation6 + $0x508] sm:$0xff]
      %v1622 = vld [vmem:[#allocation6 + $0x510] sm:$0xff]
      %v1623 = vld [vmem:[#allocation6 + $0x518] sm:$0xff]
      %v1624 = vld [vmem:[#allocation6 + $0x520] sm:$0xff]
      %v1625 = vld [vmem:[#allocation6 + $0x528] sm:$0xff]
      %v1626 = vld [vmem:[#allocation6 + $0x530] sm:$0xff]
      %v1627 = vld [vmem:[#allocation6 + $0x538] sm:$0xff]
      %v1628 = vld [vmem:[#allocation6 + $0x540] sm:$0xff]
      %v1629 = vld [vmem:[#allocation6 + $0x548] sm:$0xff]
      %v1630 = vld [vmem:[#allocation6 + $0x550] sm:$0xff]
      %v1631 = vld [vmem:[#allocation6 + $0x558] sm:$0xff]
      %v1632 = vld [vmem:[#allocation6 + $0x560] sm:$0xff]
      %v1633 = vld [vmem:[#allocation6 + $0x568] sm:$0xff]
      %v1634 = vld [vmem:[#allocation6 + $0x570] sm:$0xff]
      %v1635 = vld [vmem:[#allocation6 + $0x578] sm:$0xff]
      %v1636 = vld [vmem:[#allocation6 + $0x580] sm:$0xff]
      %v1637 = vld [vmem:[#allocation6 + $0x588] sm:$0xff]
      %v1638 = vld [vmem:[#allocation6 + $0x590] sm:$0xff]
      %v1639 = vld [vmem:[#allocation6 + $0x598] sm:$0xff]
      %v1640 = vld [vmem:[#allocation6 + $0x5a0] sm:$0xff]
      %v1641 = vld [vmem:[#allocation6 + $0x5a8] sm:$0xff]
      %v1642 = vld [vmem:[#allocation6 + $0x5b0] sm:$0xff]
      %v1643 = vld [vmem:[#allocation6 + $0x5b8] sm:$0xff]
      %v1644 = vld [vmem:[#allocation6 + $0x5c0] sm:$0xff]
      %v1645 = vld [vmem:[#allocation6 + $0x5c8] sm:$0xff]
      %v1646 = vld [vmem:[#allocation6 + $0x5d0] sm:$0xff]
      %v1647 = vld [vmem:[#allocation6 + $0x5d8] sm:$0xff]
      %v1648 = vld [vmem:[#allocation6 + $0x5e0] sm:$0xff]
      %v1649 = vld [vmem:[#allocation6 + $0x5e8] sm:$0xff]
      %v1650 = vld [vmem:[#allocation6 + $0x5f0] sm:$0xff]
      %v1651 = vld [vmem:[#allocation6 + $0x5f8] sm:$0xff]
      %v1652 = vld [vmem:[#allocation6 + $0x600] sm:$0xff]
      %v1653 = vld [vmem:[#allocation6 + $0x608] sm:$0xff]
      %v1654 = vld [vmem:[#allocation6 + $0x610] sm:$0xff]
      %v1655 = vld [vmem:[#allocation6 + $0x618] sm:$0xff]
      %v1656 = vld [vmem:[#allocation6 + $0x620] sm:$0xff]
      %v1657 = vld [vmem:[#allocation6 + $0x628] sm:$0xff]
      %v1658 = vld [vmem:[#allocation6 + $0x630] sm:$0xff]
      %v1659 = vld [vmem:[#allocation6 + $0x638] sm:$0xff]
      %v1660 = vld [vmem:[#allocation6 + $0x640] sm:$0xff]
      %v1661 = vld [vmem:[#allocation6 + $0x648] sm:$0xff]
      %v1662 = vld [vmem:[#allocation6 + $0x650] sm:$0xff]
      %v1663 = vld [vmem:[#allocation6 + $0x658] sm:$0xff]
      %v1664 = vld [vmem:[#allocation6 + $0x660] sm:$0xff]
      %v1665 = vld [vmem:[#allocation6 + $0x668] sm:$0xff]
      %v1666 = vld [vmem:[#allocation6 + $0x670] sm:$0xff]
      %v1667 = vld [vmem:[#allocation6 + $0x678] sm:$0xff]
      %v1668 = vld [vmem:[#allocation6 + $0x680] sm:$0xff]
      %v1669 = vld [vmem:[#allocation6 + $0x688] sm:$0xff]
      %v1670 = vld [vmem:[#allocation6 + $0x690] sm:$0xff]
      %v1671 = vld [vmem:[#allocation6 + $0x698] sm:$0xff]
      %v1672 = vld [vmem:[#allocation6 + $0x6a0] sm:$0xff]
      %v1673 = vld [vmem:[#allocation6 + $0x6a8] sm:$0xff]
      %v1674 = vld [vmem:[#allocation6 + $0x6b0] sm:$0xff]
      %v1675 = vld [vmem:[#allocation6 + $0x6b8] sm:$0xff]
      %v1676 = vld [vmem:[#allocation6 + $0x6c0] sm:$0xff]
      %v1677 = vld [vmem:[#allocation6 + $0x6c8] sm:$0xff]
      %v1678 = vld [vmem:[#allocation6 + $0x6d0] sm:$0xff]
      %v1679 = vld [vmem:[#allocation6 + $0x6d8] sm:$0xff]
      %v1680 = vld [vmem:[#allocation6 + $0x6e0] sm:$0xff]
      %v1681 = vld [vmem:[#allocation6 + $0x6e8] sm:$0xff]
      %v1682 = vld [vmem:[#allocation6 + $0x6f0] sm:$0xff]
      %v1683 = vld [vmem:[#allocation6 + $0x6f8] sm:$0xff]
      %v1684 = vld [vmem:[#allocation6 + $0x700] sm:$0xff]
      %v1685 = vld [vmem:[#allocation6 + $0x708] sm:$0xff]
      %v1686 = vld [vmem:[#allocation6 + $0x710] sm:$0xff]
      %v1687 = vld [vmem:[#allocation6 + $0x718] sm:$0xff]
      %v1688 = vld [vmem:[#allocation6 + $0x720] sm:$0xff]
      %v1689 = vld [vmem:[#allocation6 + $0x728] sm:$0xff]
      %v1690 = vld [vmem:[#allocation6 + $0x730] sm:$0xff]
      %v1691 = vld [vmem:[#allocation6 + $0x738] sm:$0xff]
      %v1692 = vld [vmem:[#allocation6 + $0x740] sm:$0xff]
      %v1693 = vld [vmem:[#allocation6 + $0x748] sm:$0xff]
      %v1694 = vld [vmem:[#allocation6 + $0x750] sm:$0xff]
      %v1695 = vld [vmem:[#allocation6 + $0x758] sm:$0xff]
      %v1696 = vld [vmem:[#allocation6 + $0x760] sm:$0xff]
      %v1697 = vld [vmem:[#allocation6 + $0x768] sm:$0xff]
      %v1698 = vld [vmem:[#allocation6 + $0x770] sm:$0xff]
      %v1699 = vld [vmem:[#allocation6 + $0x778] sm:$0xff]
      %v1700 = vld [vmem:[#allocation6 + $0x780] sm:$0xff]
      %v1701 = vld [vmem:[#allocation6 + $0x788] sm:$0xff]
      %v1702 = vld [vmem:[#allocation6 + $0x790] sm:$0xff]
      %v1703 = vld [vmem:[#allocation6 + $0x798] sm:$0xff]
      %v1704 = vld [vmem:[#allocation6 + $0x7a0] sm:$0xff]
      %v1705 = vld [vmem:[#allocation6 + $0x7a8] sm:$0xff]
      %v1706 = vld [vmem:[#allocation6 + $0x7b0] sm:$0xff]
      %v1707 = vld [vmem:[#allocation6 + $0x7b8] sm:$0xff]
      %v1708 = vld [vmem:[#allocation6 + $0x7c0] sm:$0xff]
      %v1709 = vld [vmem:[#allocation6 + $0x7c8] sm:$0xff]
      %v1710 = vld [vmem:[#allocation6 + $0x7d0] sm:$0xff]
      %v1711 = vld [vmem:[#allocation6 + $0x7d8] sm:$0xff]
      %v1712 = vld [vmem:[#allocation6 + $0x7e0] sm:$0xff]
      %v1713 = vld [vmem:[#allocation6 + $0x7e8] sm:$0xff]
      %v1714 = vld [vmem:[#allocation6 + $0x7f0] sm:$0xff]
      %v1715 = vld [vmem:[#allocation6 + $0x7f8] sm:$0xff]
      %v1716 = vld [vmem:[%s2] sm:$0xf]
      %v1718 = vlaneseq
      %v1719 = vshrl.u32 %v1718, 7
      %v1720 = vsub.s32 0, %v1719
      %v1721 = vrot.slane %v1716, %v1720
      %v1722 = vlaneseq
      %v1723 = vshrl.u32 %v1722, 7
      %v1724 = vsub.s32 1, %v1723
      %v1725 = vrot.slane %v1716, %v1724
      %v1726 = vlaneseq
      %v1727 = vshrl.u32 %v1726, 7
      %v1728 = vsub.s32 2, %v1727
      %v1729 = vrot.slane %v1716, %v1728
      %v1730 = vlaneseq
      %v1731 = vshrl.u32 %v1730, 7
      %v1732 = vsub.s32 3, %v1731
      %v1733 = vrot.slane %v1716, %v1732
      %v1739 = vcombine.high %v1459, %v1459
      %v1741 = vunpack.c.l.s4 1966171168
      %v1742 = vunpack.c.0.s8 %v1741
      %v1743 = vlaneseq
      %v1744 = vshrl.u32 %v1743, 7
      %v1745 = vsub.s32 %v1742, %v1744
      %v1746 = vrot.slane %v1459, %v1745
      %v1748 = vunpack.c.l.s4 1966171168
      %v1749 = vunpack.c.0.s8 %v1748
      %v1750 = vlaneseq
      %v1751 = vshrl.u32 %v1750, 7
      %v1752 = vsub.s32 %v1749, %v1751
      %v1753 = vrot.slane %v1739, %v1752
      %v1754 = vcombine.high %v1746, %v1746
      %v1755 = vcombine.high %v1753, %v1753
      %v1757 = vunpack.c.l.s4 1966171168
      %v1758 = vunpack.c.0.s8 %v1757
      %v1759 = vlaneseq
      %v1760 = vshrl.u32 %v1759, 7
      %v1761 = vsub.s32 %v1758, %v1760
      %v1762 = vrot.slane %v1746, %v1761
      %v1764 = vunpack.c.l.s4 1966171168
      %v1765 = vunpack.c.0.s8 %v1764
      %v1766 = vlaneseq
      %v1767 = vshrl.u32 %v1766, 7
      %v1768 = vsub.s32 %v1765, %v1767
      %v1769 = vrot.slane %v1753, %v1768
      %v1771 = vunpack.c.l.s4 1966171168
      %v1772 = vunpack.c.0.s8 %v1771
      %v1773 = vlaneseq
      %v1774 = vshrl.u32 %v1773, 7
      %v1775 = vsub.s32 %v1772, %v1774
      %v1776 = vrot.slane %v1754, %v1775
      %v1778 = vunpack.c.l.s4 1966171168
      %v1779 = vunpack.c.0.s8 %v1778
      %v1780 = vlaneseq
      %v1781 = vshrl.u32 %v1780, 7
      %v1782 = vsub.s32 %v1779, %v1781
      %v1783 = vrot.slane %v1755, %v1782
      %v1784 = vcombine.high %v1762, %v1762
      %v1785 = vcombine.high %v1769, %v1769
      %v1786 = vcombine.high %v1776, %v1776
      %v1787 = vcombine.high %v1783, %v1783
      %v2052 = vunpack.c.l.b16 %v1460
      %v2053 = vunpack.c.h.b16 %v1460
      %v2054 = vunpack.c.l.b16 %v1461
      %v2055 = vunpack.c.h.b16 %v1461
      %v2056 = vunpack.c.l.b16 %v1462
      %v2057 = vunpack.c.h.b16 %v1462
      %v2058 = vunpack.c.l.b16 %v1463
      %v2059 = vunpack.c.h.b16 %v1463
      %v2060 = vunpack.c.l.b16 %v1464
      %v2061 = vunpack.c.h.b16 %v1464
      %v2062 = vunpack.c.l.b16 %v1465
      %v2063 = vunpack.c.h.b16 %v1465
      %v2064 = vunpack.c.l.b16 %v1466
      %v2065 = vunpack.c.h.b16 %v1466
      %v2066 = vunpack.c.l.b16 %v1467
      %v2067 = vunpack.c.h.b16 %v1467
      %v2068 = vunpack.c.l.b16 %v1468
      %v2069 = vunpack.c.h.b16 %v1468
      %v2070 = vunpack.c.l.b16 %v1469
      %v2071 = vunpack.c.h.b16 %v1469
      %v2072 = vunpack.c.l.b16 %v1470
      %v2073 = vunpack.c.h.b16 %v1470
      %v2074 = vunpack.c.l.b16 %v1471
      %v2075 = vunpack.c.h.b16 %v1471
      %v2076 = vunpack.c.l.b16 %v1472
      %v2077 = vunpack.c.h.b16 %v1472
      %v2078 = vunpack.c.l.b16 %v1473
      %v2079 = vunpack.c.h.b16 %v1473
      %v2080 = vunpack.c.l.b16 %v1474
      %v2081 = vunpack.c.h.b16 %v1474
      %v2082 = vunpack.c.l.b16 %v1475
      %v2083 = vunpack.c.h.b16 %v1475
      %v2084 = vunpack.c.l.b16 %v1476
      %v2085 = vunpack.c.h.b16 %v1476
      %v2086 = vunpack.c.l.b16 %v1477
      %v2087 = vunpack.c.h.b16 %v1477
      %v2088 = vunpack.c.l.b16 %v1478
      %v2089 = vunpack.c.h.b16 %v1478
      %v2090 = vunpack.c.l.b16 %v1479
      %v2091 = vunpack.c.h.b16 %v1479
      %v2092 = vunpack.c.l.b16 %v1480
      %v2093 = vunpack.c.h.b16 %v1480
      %v2094 = vunpack.c.l.b16 %v1481
      %v2095 = vunpack.c.h.b16 %v1481
      %v2096 = vunpack.c.l.b16 %v1482
      %v2097 = vunpack.c.h.b16 %v1482
      %v2098 = vunpack.c.l.b16 %v1483
      %v2099 = vunpack.c.h.b16 %v1483
      %v2100 = vunpack.c.l.b16 %v1484
      %v2101 = vunpack.c.h.b16 %v1484
      %v2102 = vunpack.c.l.b16 %v1485
      %v2103 = vunpack.c.h.b16 %v1485
      %v2104 = vunpack.c.l.b16 %v1486
      %v2105 = vunpack.c.h.b16 %v1486
      %v2106 = vunpack.c.l.b16 %v1487
      %v2107 = vunpack.c.h.b16 %v1487
      %v2108 = vunpack.c.l.b16 %v1488
      %v2109 = vunpack.c.h.b16 %v1488
      %v2110 = vunpack.c.l.b16 %v1489
      %v2111 = vunpack.c.h.b16 %v1489
      %v2112 = vunpack.c.l.b16 %v1490
      %v2113 = vunpack.c.h.b16 %v1490
      %v2114 = vunpack.c.l.b16 %v1491
      %v2115 = vunpack.c.h.b16 %v1491
      %v2116 = vunpack.c.l.b16 %v1492
      %v2117 = vunpack.c.h.b16 %v1492
      %v2118 = vunpack.c.l.b16 %v1493
      %v2119 = vunpack.c.h.b16 %v1493
      %v2120 = vunpack.c.l.b16 %v1494
      %v2121 = vunpack.c.h.b16 %v1494
      %v2122 = vunpack.c.l.b16 %v1495
      %v2123 = vunpack.c.h.b16 %v1495
      %v2124 = vunpack.c.l.b16 %v1496
      %v2125 = vunpack.c.h.b16 %v1496
      %v2126 = vunpack.c.l.b16 %v1497
      %v2127 = vunpack.c.h.b16 %v1497
      %v2128 = vunpack.c.l.b16 %v1498
      %v2129 = vunpack.c.h.b16 %v1498
      %v2130 = vunpack.c.l.b16 %v1499
      %v2131 = vunpack.c.h.b16 %v1499
      %v2132 = vunpack.c.l.b16 %v1500
      %v2133 = vunpack.c.h.b16 %v1500
      %v2134 = vunpack.c.l.b16 %v1501
      %v2135 = vunpack.c.h.b16 %v1501
      %v2136 = vunpack.c.l.b16 %v1502
      %v2137 = vunpack.c.h.b16 %v1502
      %v2138 = vunpack.c.l.b16 %v1503
      %v2139 = vunpack.c.h.b16 %v1503
      %v2140 = vunpack.c.l.b16 %v1504
      %v2141 = vunpack.c.h.b16 %v1504
      %v2142 = vunpack.c.l.b16 %v1505
      %v2143 = vunpack.c.h.b16 %v1505
      %v2144 = vunpack.c.l.b16 %v1506
      %v2145 = vunpack.c.h.b16 %v1506
      %v2146 = vunpack.c.l.b16 %v1507
      %v2147 = vunpack.c.h.b16 %v1507
      %v2148 = vunpack.c.l.b16 %v1508
      %v2149 = vunpack.c.h.b16 %v1508
      %v2150 = vunpack.c.l.b16 %v1509
      %v2151 = vunpack.c.h.b16 %v1509
      %v2152 = vunpack.c.l.b16 %v1510
      %v2153 = vunpack.c.h.b16 %v1510
      %v2154 = vunpack.c.l.b16 %v1511
      %v2155 = vunpack.c.h.b16 %v1511
      %v2156 = vunpack.c.l.b16 %v1512
      %v2157 = vunpack.c.h.b16 %v1512
      %v2158 = vunpack.c.l.b16 %v1513
      %v2159 = vunpack.c.h.b16 %v1513
      %v2160 = vunpack.c.l.b16 %v1514
      %v2161 = vunpack.c.h.b16 %v1514
      %v2162 = vunpack.c.l.b16 %v1515
      %v2163 = vunpack.c.h.b16 %v1515
      %v2164 = vunpack.c.l.b16 %v1516
      %v2165 = vunpack.c.h.b16 %v1516
      %v2166 = vunpack.c.l.b16 %v1517
      %v2167 = vunpack.c.h.b16 %v1517
      %v2168 = vunpack.c.l.b16 %v1518
      %v2169 = vunpack.c.h.b16 %v1518
      %v2170 = vunpack.c.l.b16 %v1519
      %v2171 = vunpack.c.h.b16 %v1519
      %v2172 = vunpack.c.l.b16 %v1520
      %v2173 = vunpack.c.h.b16 %v1520
      %v2174 = vunpack.c.l.b16 %v1521
      %v2175 = vunpack.c.h.b16 %v1521
      %v2176 = vunpack.c.l.b16 %v1522
      %v2177 = vunpack.c.h.b16 %v1522
      %v2178 = vunpack.c.l.b16 %v1523
      %v2179 = vunpack.c.h.b16 %v1523
      %v2180 = vunpack.c.l.b16 %v1524
      %v2181 = vunpack.c.h.b16 %v1524
      %v2182 = vunpack.c.l.b16 %v1525
      %v2183 = vunpack.c.h.b16 %v1525
      %v2184 = vunpack.c.l.b16 %v1526
      %v2185 = vunpack.c.h.b16 %v1526
      %v2186 = vunpack.c.l.b16 %v1527
      %v2187 = vunpack.c.h.b16 %v1527
      %v2188 = vunpack.c.l.b16 %v1528
      %v2189 = vunpack.c.h.b16 %v1528
      %v2190 = vunpack.c.l.b16 %v1529
      %v2191 = vunpack.c.h.b16 %v1529
      %v2192 = vunpack.c.l.b16 %v1530
      %v2193 = vunpack.c.h.b16 %v1530
      %v2194 = vunpack.c.l.b16 %v1531
      %v2195 = vunpack.c.h.b16 %v1531
      %v2196 = vunpack.c.l.b16 %v1532
      %v2197 = vunpack.c.h.b16 %v1532
      %v2198 = vunpack.c.l.b16 %v1533
      %v2199 = vunpack.c.h.b16 %v1533
      %v2200 = vunpack.c.l.b16 %v1534
      %v2201 = vunpack.c.h.b16 %v1534
      %v2202 = vunpack.c.l.b16 %v1535
      %v2203 = vunpack.c.h.b16 %v1535
      %v2204 = vunpack.c.l.b16 %v1536
      %v2205 = vunpack.c.h.b16 %v1536
      %v2206 = vunpack.c.l.b16 %v1537
      %v2207 = vunpack.c.h.b16 %v1537
      %v2208 = vunpack.c.l.b16 %v1538
      %v2209 = vunpack.c.h.b16 %v1538
      %v2210 = vunpack.c.l.b16 %v1539
      %v2211 = vunpack.c.h.b16 %v1539
      %v2212 = vunpack.c.l.b16 %v1540
      %v2213 = vunpack.c.h.b16 %v1540
      %v2214 = vunpack.c.l.b16 %v1541
      %v2215 = vunpack.c.h.b16 %v1541
      %v2216 = vunpack.c.l.b16 %v1542
      %v2217 = vunpack.c.h.b16 %v1542
      %v2218 = vunpack.c.l.b16 %v1543
      %v2219 = vunpack.c.h.b16 %v1543
      %v2220 = vunpack.c.l.b16 %v1544
      %v2221 = vunpack.c.h.b16 %v1544
      %v2222 = vunpack.c.l.b16 %v1545
      %v2223 = vunpack.c.h.b16 %v1545
      %v2224 = vunpack.c.l.b16 %v1546
      %v2225 = vunpack.c.h.b16 %v1546
      %v2226 = vunpack.c.l.b16 %v1547
      %v2227 = vunpack.c.h.b16 %v1547
      %v2228 = vunpack.c.l.b16 %v1548
      %v2229 = vunpack.c.h.b16 %v1548
      %v2230 = vunpack.c.l.b16 %v1549
      %v2231 = vunpack.c.h.b16 %v1549
      %v2232 = vunpack.c.l.b16 %v1550
      %v2233 = vunpack.c.h.b16 %v1550
      %v2234 = vunpack.c.l.b16 %v1551
      %v2235 = vunpack.c.h.b16 %v1551
      %v2236 = vunpack.c.l.b16 %v1552
      %v2237 = vunpack.c.h.b16 %v1552
      %v2238 = vunpack.c.l.b16 %v1553
      %v2239 = vunpack.c.h.b16 %v1553
      %v2240 = vunpack.c.l.b16 %v1554
      %v2241 = vunpack.c.h.b16 %v1554
      %v2242 = vunpack.c.l.b16 %v1555
      %v2243 = vunpack.c.h.b16 %v1555
      %v2244 = vunpack.c.l.b16 %v1556
      %v2245 = vunpack.c.h.b16 %v1556
      %v2246 = vunpack.c.l.b16 %v1557
      %v2247 = vunpack.c.h.b16 %v1557
      %v2248 = vunpack.c.l.b16 %v1558
      %v2249 = vunpack.c.h.b16 %v1558
      %v2250 = vunpack.c.l.b16 %v1559
      %v2251 = vunpack.c.h.b16 %v1559
      %v2252 = vunpack.c.l.b16 %v1560
      %v2253 = vunpack.c.h.b16 %v1560
      %v2254 = vunpack.c.l.b16 %v1561
      %v2255 = vunpack.c.h.b16 %v1561
      %v2256 = vunpack.c.l.b16 %v1562
      %v2257 = vunpack.c.h.b16 %v1562
      %v2258 = vunpack.c.l.b16 %v1563
      %v2259 = vunpack.c.h.b16 %v1563
      %v2260 = vunpack.c.l.b16 %v1564
      %v2261 = vunpack.c.h.b16 %v1564
      %v2262 = vunpack.c.l.b16 %v1565
      %v2263 = vunpack.c.h.b16 %v1565
      %v2264 = vunpack.c.l.b16 %v1566
      %v2265 = vunpack.c.h.b16 %v1566
      %v2266 = vunpack.c.l.b16 %v1567
      %v2267 = vunpack.c.h.b16 %v1567
      %v2268 = vunpack.c.l.b16 %v1568
      %v2269 = vunpack.c.h.b16 %v1568
      %v2270 = vunpack.c.l.b16 %v1569
      %v2271 = vunpack.c.h.b16 %v1569
      %v2272 = vunpack.c.l.b16 %v1570
      %v2273 = vunpack.c.h.b16 %v1570
      %v2274 = vunpack.c.l.b16 %v1571
      %v2275 = vunpack.c.h.b16 %v1571
      %v2276 = vunpack.c.l.b16 %v1572
      %v2277 = vunpack.c.h.b16 %v1572
      %v2278 = vunpack.c.l.b16 %v1573
      %v2279 = vunpack.c.h.b16 %v1573
      %v2280 = vunpack.c.l.b16 %v1574
      %v2281 = vunpack.c.h.b16 %v1574
      %v2282 = vunpack.c.l.b16 %v1575
      %v2283 = vunpack.c.h.b16 %v1575
      %v2284 = vunpack.c.l.b16 %v1576
      %v2285 = vunpack.c.h.b16 %v1576
      %v2286 = vunpack.c.l.b16 %v1577
      %v2287 = vunpack.c.h.b16 %v1577
      %v2288 = vunpack.c.l.b16 %v1578
      %v2289 = vunpack.c.h.b16 %v1578
      %v2290 = vunpack.c.l.b16 %v1579
      %v2291 = vunpack.c.h.b16 %v1579
      %v2292 = vunpack.c.l.b16 %v1580
      %v2293 = vunpack.c.h.b16 %v1580
      %v2294 = vunpack.c.l.b16 %v1581
      %v2295 = vunpack.c.h.b16 %v1581
      %v2296 = vunpack.c.l.b16 %v1582
      %v2297 = vunpack.c.h.b16 %v1582
      %v2298 = vunpack.c.l.b16 %v1583
      %v2299 = vunpack.c.h.b16 %v1583
      %v2300 = vunpack.c.l.b16 %v1584
      %v2301 = vunpack.c.h.b16 %v1584
      %v2302 = vunpack.c.l.b16 %v1585
      %v2303 = vunpack.c.h.b16 %v1585
      %v2304 = vunpack.c.l.b16 %v1586
      %v2305 = vunpack.c.h.b16 %v1586
      %v2306 = vunpack.c.l.b16 %v1587
      %v2307 = vunpack.c.h.b16 %v1587
      %v2308 = vunpack.c.l.b16 %v1588
      %v2309 = vunpack.c.h.b16 %v1588
      %v2310 = vunpack.c.l.b16 %v1589
      %v2311 = vunpack.c.h.b16 %v1589
      %v2312 = vunpack.c.l.b16 %v1590
      %v2313 = vunpack.c.h.b16 %v1590
      %v2314 = vunpack.c.l.b16 %v1591
      %v2315 = vunpack.c.h.b16 %v1591
      %v2316 = vunpack.c.l.b16 %v1592
      %v2317 = vunpack.c.h.b16 %v1592
      %v2318 = vunpack.c.l.b16 %v1593
      %v2319 = vunpack.c.h.b16 %v1593
      %v2320 = vunpack.c.l.b16 %v1594
      %v2321 = vunpack.c.h.b16 %v1594
      %v2322 = vunpack.c.l.b16 %v1595
      %v2323 = vunpack.c.h.b16 %v1595
      %v2324 = vunpack.c.l.b16 %v1596
      %v2325 = vunpack.c.h.b16 %v1596
      %v2326 = vunpack.c.l.b16 %v1597
      %v2327 = vunpack.c.h.b16 %v1597
      %v2328 = vunpack.c.l.b16 %v1598
      %v2329 = vunpack.c.h.b16 %v1598
      %v2330 = vunpack.c.l.b16 %v1599
      %v2331 = vunpack.c.h.b16 %v1599
      %v2332 = vunpack.c.l.b16 %v1600
      %v2333 = vunpack.c.h.b16 %v1600
      %v2334 = vunpack.c.l.b16 %v1601
      %v2335 = vunpack.c.h.b16 %v1601
      %v2336 = vunpack.c.l.b16 %v1602
      %v2337 = vunpack.c.h.b16 %v1602
      %v2338 = vunpack.c.l.b16 %v1603
      %v2339 = vunpack.c.h.b16 %v1603
      %v2340 = vunpack.c.l.b16 %v1604
      %v2341 = vunpack.c.h.b16 %v1604
      %v2342 = vunpack.c.l.b16 %v1605
      %v2343 = vunpack.c.h.b16 %v1605
      %v2344 = vunpack.c.l.b16 %v1606
      %v2345 = vunpack.c.h.b16 %v1606
      %v2346 = vunpack.c.l.b16 %v1607
      %v2347 = vunpack.c.h.b16 %v1607
      %v2348 = vunpack.c.l.b16 %v1608
      %v2349 = vunpack.c.h.b16 %v1608
      %v2350 = vunpack.c.l.b16 %v1609
      %v2351 = vunpack.c.h.b16 %v1609
      %v2352 = vunpack.c.l.b16 %v1610
      %v2353 = vunpack.c.h.b16 %v1610
      %v2354 = vunpack.c.l.b16 %v1611
      %v2355 = vunpack.c.h.b16 %v1611
      %v2356 = vunpack.c.l.b16 %v1612
      %v2357 = vunpack.c.h.b16 %v1612
      %v2358 = vunpack.c.l.b16 %v1613
      %v2359 = vunpack.c.h.b16 %v1613
      %v2360 = vunpack.c.l.b16 %v1614
      %v2361 = vunpack.c.h.b16 %v1614
      %v2362 = vunpack.c.l.b16 %v1615
      %v2363 = vunpack.c.h.b16 %v1615
      %v2364 = vunpack.c.l.b16 %v1616
      %v2365 = vunpack.c.h.b16 %v1616
      %v2366 = vunpack.c.l.b16 %v1617
      %v2367 = vunpack.c.h.b16 %v1617
      %v2368 = vunpack.c.l.b16 %v1618
      %v2369 = vunpack.c.h.b16 %v1618
      %v2370 = vunpack.c.l.b16 %v1619
      %v2371 = vunpack.c.h.b16 %v1619
      %v2372 = vunpack.c.l.b16 %v1620
      %v2373 = vunpack.c.h.b16 %v1620
      %v2374 = vunpack.c.l.b16 %v1621
      %v2375 = vunpack.c.h.b16 %v1621
      %v2376 = vunpack.c.l.b16 %v1622
      %v2377 = vunpack.c.h.b16 %v1622
      %v2378 = vunpack.c.l.b16 %v1623
      %v2379 = vunpack.c.h.b16 %v1623
      %v2380 = vunpack.c.l.b16 %v1624
      %v2381 = vunpack.c.h.b16 %v1624
      %v2382 = vunpack.c.l.b16 %v1625
      %v2383 = vunpack.c.h.b16 %v1625
      %v2384 = vunpack.c.l.b16 %v1626
      %v2385 = vunpack.c.h.b16 %v1626
      %v2386 = vunpack.c.l.b16 %v1627
      %v2387 = vunpack.c.h.b16 %v1627
      %v2388 = vunpack.c.l.b16 %v1628
      %v2389 = vunpack.c.h.b16 %v1628
      %v2390 = vunpack.c.l.b16 %v1629
      %v2391 = vunpack.c.h.b16 %v1629
      %v2392 = vunpack.c.l.b16 %v1630
      %v2393 = vunpack.c.h.b16 %v1630
      %v2394 = vunpack.c.l.b16 %v1631
      %v2395 = vunpack.c.h.b16 %v1631
      %v2396 = vunpack.c.l.b16 %v1632
      %v2397 = vunpack.c.h.b16 %v1632
      %v2398 = vunpack.c.l.b16 %v1633
      %v2399 = vunpack.c.h.b16 %v1633
      %v2400 = vunpack.c.l.b16 %v1634
      %v2401 = vunpack.c.h.b16 %v1634
      %v2402 = vunpack.c.l.b16 %v1635
      %v2403 = vunpack.c.h.b16 %v1635
      %v2404 = vunpack.c.l.b16 %v1636
      %v2405 = vunpack.c.h.b16 %v1636
      %v2406 = vunpack.c.l.b16 %v1637
      %v2407 = vunpack.c.h.b16 %v1637
      %v2408 = vunpack.c.l.b16 %v1638
      %v2409 = vunpack.c.h.b16 %v1638
      %v2410 = vunpack.c.l.b16 %v1639
      %v2411 = vunpack.c.h.b16 %v1639
      %v2412 = vunpack.c.l.b16 %v1640
      %v2413 = vunpack.c.h.b16 %v1640
      %v2414 = vunpack.c.l.b16 %v1641
      %v2415 = vunpack.c.h.b16 %v1641
      %v2416 = vunpack.c.l.b16 %v1642
      %v2417 = vunpack.c.h.b16 %v1642
      %v2418 = vunpack.c.l.b16 %v1643
      %v2419 = vunpack.c.h.b16 %v1643
      %v2420 = vunpack.c.l.b16 %v1644
      %v2421 = vunpack.c.h.b16 %v1644
      %v2422 = vunpack.c.l.b16 %v1645
      %v2423 = vunpack.c.h.b16 %v1645
      %v2424 = vunpack.c.l.b16 %v1646
      %v2425 = vunpack.c.h.b16 %v1646
      %v2426 = vunpack.c.l.b16 %v1647
      %v2427 = vunpack.c.h.b16 %v1647
      %v2428 = vunpack.c.l.b16 %v1648
      %v2429 = vunpack.c.h.b16 %v1648
      %v2430 = vunpack.c.l.b16 %v1649
      %v2431 = vunpack.c.h.b16 %v1649
      %v2432 = vunpack.c.l.b16 %v1650
      %v2433 = vunpack.c.h.b16 %v1650
      %v2434 = vunpack.c.l.b16 %v1651
      %v2435 = vunpack.c.h.b16 %v1651
      %v2436 = vunpack.c.l.b16 %v1652
      %v2437 = vunpack.c.h.b16 %v1652
      %v2438 = vunpack.c.l.b16 %v1653
      %v2439 = vunpack.c.h.b16 %v1653
      %v2440 = vunpack.c.l.b16 %v1654
      %v2441 = vunpack.c.h.b16 %v1654
      %v2442 = vunpack.c.l.b16 %v1655
      %v2443 = vunpack.c.h.b16 %v1655
      %v2444 = vunpack.c.l.b16 %v1656
      %v2445 = vunpack.c.h.b16 %v1656
      %v2446 = vunpack.c.l.b16 %v1657
      %v2447 = vunpack.c.h.b16 %v1657
      %v2448 = vunpack.c.l.b16 %v1658
      %v2449 = vunpack.c.h.b16 %v1658
      %v2450 = vunpack.c.l.b16 %v1659
      %v2451 = vunpack.c.h.b16 %v1659
      %v2452 = vunpack.c.l.b16 %v1660
      %v2453 = vunpack.c.h.b16 %v1660
      %v2454 = vunpack.c.l.b16 %v1661
      %v2455 = vunpack.c.h.b16 %v1661
      %v2456 = vunpack.c.l.b16 %v1662
      %v2457 = vunpack.c.h.b16 %v1662
      %v2458 = vunpack.c.l.b16 %v1663
      %v2459 = vunpack.c.h.b16 %v1663
      %v2460 = vunpack.c.l.b16 %v1664
      %v2461 = vunpack.c.h.b16 %v1664
      %v2462 = vunpack.c.l.b16 %v1665
      %v2463 = vunpack.c.h.b16 %v1665
      %v2464 = vunpack.c.l.b16 %v1666
      %v2465 = vunpack.c.h.b16 %v1666
      %v2466 = vunpack.c.l.b16 %v1667
      %v2467 = vunpack.c.h.b16 %v1667
      %v2468 = vunpack.c.l.b16 %v1668
      %v2469 = vunpack.c.h.b16 %v1668
      %v2470 = vunpack.c.l.b16 %v1669
      %v2471 = vunpack.c.h.b16 %v1669
      %v2472 = vunpack.c.l.b16 %v1670
      %v2473 = vunpack.c.h.b16 %v1670
      %v2474 = vunpack.c.l.b16 %v1671
      %v2475 = vunpack.c.h.b16 %v1671
      %v2476 = vunpack.c.l.b16 %v1672
      %v2477 = vunpack.c.h.b16 %v1672
      %v2478 = vunpack.c.l.b16 %v1673
      %v2479 = vunpack.c.h.b16 %v1673
      %v2480 = vunpack.c.l.b16 %v1674
      %v2481 = vunpack.c.h.b16 %v1674
      %v2482 = vunpack.c.l.b16 %v1675
      %v2483 = vunpack.c.h.b16 %v1675
      %v2484 = vunpack.c.l.b16 %v1676
      %v2485 = vunpack.c.h.b16 %v1676
      %v2486 = vunpack.c.l.b16 %v1677
      %v2487 = vunpack.c.h.b16 %v1677
      %v2488 = vunpack.c.l.b16 %v1678
      %v2489 = vunpack.c.h.b16 %v1678
      %v2490 = vunpack.c.l.b16 %v1679
      %v2491 = vunpack.c.h.b16 %v1679
      %v2492 = vunpack.c.l.b16 %v1680
      %v2493 = vunpack.c.h.b16 %v1680
      %v2494 = vunpack.c.l.b16 %v1681
      %v2495 = vunpack.c.h.b16 %v1681
      %v2496 = vunpack.c.l.b16 %v1682
      %v2497 = vunpack.c.h.b16 %v1682
      %v2498 = vunpack.c.l.b16 %v1683
      %v2499 = vunpack.c.h.b16 %v1683
      %v2500 = vunpack.c.l.b16 %v1684
      %v2501 = vunpack.c.h.b16 %v1684
      %v2502 = vunpack.c.l.b16 %v1685
      %v2503 = vunpack.c.h.b16 %v1685
      %v2504 = vunpack.c.l.b16 %v1686
      %v2505 = vunpack.c.h.b16 %v1686
      %v2506 = vunpack.c.l.b16 %v1687
      %v2507 = vunpack.c.h.b16 %v1687
      %v2508 = vunpack.c.l.b16 %v1688
      %v2509 = vunpack.c.h.b16 %v1688
      %v2510 = vunpack.c.l.b16 %v1689
      %v2511 = vunpack.c.h.b16 %v1689
      %v2512 = vunpack.c.l.b16 %v1690
      %v2513 = vunpack.c.h.b16 %v1690
      %v2514 = vunpack.c.l.b16 %v1691
      %v2515 = vunpack.c.h.b16 %v1691
      %v2516 = vunpack.c.l.b16 %v1692
      %v2517 = vunpack.c.h.b16 %v1692
      %v2518 = vunpack.c.l.b16 %v1693
      %v2519 = vunpack.c.h.b16 %v1693
      %v2520 = vunpack.c.l.b16 %v1694
      %v2521 = vunpack.c.h.b16 %v1694
      %v2522 = vunpack.c.l.b16 %v1695
      %v2523 = vunpack.c.h.b16 %v1695
      %v2524 = vunpack.c.l.b16 %v1696
      %v2525 = vunpack.c.h.b16 %v1696
      %v2526 = vunpack.c.l.b16 %v1697
      %v2527 = vunpack.c.h.b16 %v1697
      %v2528 = vunpack.c.l.b16 %v1698
      %v2529 = vunpack.c.h.b16 %v1698
      %v2530 = vunpack.c.l.b16 %v1699
      %v2531 = vunpack.c.h.b16 %v1699
      %v2532 = vunpack.c.l.b16 %v1700
      %v2533 = vunpack.c.h.b16 %v1700
      %v2534 = vunpack.c.l.b16 %v1701
      %v2535 = vunpack.c.h.b16 %v1701
      %v2536 = vunpack.c.l.b16 %v1702
      %v2537 = vunpack.c.h.b16 %v1702
      %v2538 = vunpack.c.l.b16 %v1703
      %v2539 = vunpack.c.h.b16 %v1703
      %v2540 = vunpack.c.l.b16 %v1704
      %v2541 = vunpack.c.h.b16 %v1704
      %v2542 = vunpack.c.l.b16 %v1705
      %v2543 = vunpack.c.h.b16 %v1705
      %v2544 = vunpack.c.l.b16 %v1706
      %v2545 = vunpack.c.h.b16 %v1706
      %v2546 = vunpack.c.l.b16 %v1707
      %v2547 = vunpack.c.h.b16 %v1707
      %v2548 = vunpack.c.l.b16 %v1708
      %v2549 = vunpack.c.h.b16 %v1708
      %v2550 = vunpack.c.l.b16 %v1709
      %v2551 = vunpack.c.h.b16 %v1709
      %v2552 = vunpack.c.l.b16 %v1710
      %v2553 = vunpack.c.h.b16 %v1710
      %v2554 = vunpack.c.l.b16 %v1711
      %v2555 = vunpack.c.h.b16 %v1711
      %v2556 = vunpack.c.l.b16 %v1712
      %v2557 = vunpack.c.h.b16 %v1712
      %v2558 = vunpack.c.l.b16 %v1713
      %v2559 = vunpack.c.h.b16 %v1713
      %v2560 = vunpack.c.l.b16 %v1714
      %v2561 = vunpack.c.h.b16 %v1714
      %v2562 = vunpack.c.l.b16 %v1715
      %v2563 = vunpack.c.h.b16 %v1715
      %v2564 = vpack.c.b16 %v2056, %v2052
      %v2565 = vpack.c.b16 %v2057, %v2053
      %v2566 = vpack.c.b16 %v2058, %v2054
      %v2567 = vpack.c.b16 %v2059, %v2055
      %v2568 = vpack.c.b16 %v2064, %v2060
      %v2569 = vpack.c.b16 %v2065, %v2061
      %v2570 = vpack.c.b16 %v2066, %v2062
      %v2571 = vpack.c.b16 %v2067, %v2063
      %v2572 = vpack.c.b16 %v2072, %v2068
      %v2573 = vpack.c.b16 %v2073, %v2069
      %v2574 = vpack.c.b16 %v2074, %v2070
      %v2575 = vpack.c.b16 %v2075, %v2071
      %v2576 = vpack.c.b16 %v2080, %v2076
      %v2577 = vpack.c.b16 %v2081, %v2077
      %v2578 = vpack.c.b16 %v2082, %v2078
      %v2579 = vpack.c.b16 %v2083, %v2079
      %v2580 = vpack.c.b16 %v2088, %v2084
      %v2581 = vpack.c.b16 %v2089, %v2085
      %v2582 = vpack.c.b16 %v2090, %v2086
      %v2583 = vpack.c.b16 %v2091, %v2087
      %v2584 = vpack.c.b16 %v2096, %v2092
      %v2585 = vpack.c.b16 %v2097, %v2093
      %v2586 = vpack.c.b16 %v2098, %v2094
      %v2587 = vpack.c.b16 %v2099, %v2095
      %v2588 = vpack.c.b16 %v2104, %v2100
      %v2589 = vpack.c.b16 %v2105, %v2101
      %v2590 = vpack.c.b16 %v2106, %v2102
      %v2591 = vpack.c.b16 %v2107, %v2103
      %v2592 = vpack.c.b16 %v2112, %v2108
      %v2593 = vpack.c.b16 %v2113, %v2109
      %v2594 = vpack.c.b16 %v2114, %v2110
      %v2595 = vpack.c.b16 %v2115, %v2111
      %v2596 = vpack.c.b16 %v2120, %v2116
      %v2597 = vpack.c.b16 %v2121, %v2117
      %v2598 = vpack.c.b16 %v2122, %v2118
      %v2599 = vpack.c.b16 %v2123, %v2119
      %v2600 = vpack.c.b16 %v2128, %v2124
      %v2601 = vpack.c.b16 %v2129, %v2125
      %v2602 = vpack.c.b16 %v2130, %v2126
      %v2603 = vpack.c.b16 %v2131, %v2127
      %v2604 = vpack.c.b16 %v2136, %v2132
      %v2605 = vpack.c.b16 %v2137, %v2133
      %v2606 = vpack.c.b16 %v2138, %v2134
      %v2607 = vpack.c.b16 %v2139, %v2135
      %v2608 = vpack.c.b16 %v2144, %v2140
      %v2609 = vpack.c.b16 %v2145, %v2141
      %v2610 = vpack.c.b16 %v2146, %v2142
      %v2611 = vpack.c.b16 %v2147, %v2143
      %v2612 = vpack.c.b16 %v2152, %v2148
      %v2613 = vpack.c.b16 %v2153, %v2149
      %v2614 = vpack.c.b16 %v2154, %v2150
      %v2615 = vpack.c.b16 %v2155, %v2151
      %v2616 = vpack.c.b16 %v2160, %v2156
      %v2617 = vpack.c.b16 %v2161, %v2157
      %v2618 = vpack.c.b16 %v2162, %v2158
      %v2619 = vpack.c.b16 %v2163, %v2159
      %v2620 = vpack.c.b16 %v2168, %v2164
      %v2621 = vpack.c.b16 %v2169, %v2165
      %v2622 = vpack.c.b16 %v2170, %v2166
      %v2623 = vpack.c.b16 %v2171, %v2167
      %v2624 = vpack.c.b16 %v2176, %v2172
      %v2625 = vpack.c.b16 %v2177, %v2173
      %v2626 = vpack.c.b16 %v2178, %v2174
      %v2627 = vpack.c.b16 %v2179, %v2175
      %v2628 = vpack.c.b16 %v2184, %v2180
      %v2629 = vpack.c.b16 %v2185, %v2181
      %v2630 = vpack.c.b16 %v2186, %v2182
      %v2631 = vpack.c.b16 %v2187, %v2183
      %v2632 = vpack.c.b16 %v2192, %v2188
      %v2633 = vpack.c.b16 %v2193, %v2189
      %v2634 = vpack.c.b16 %v2194, %v2190
      %v2635 = vpack.c.b16 %v2195, %v2191
      %v2636 = vpack.c.b16 %v2200, %v2196
      %v2637 = vpack.c.b16 %v2201, %v2197
      %v2638 = vpack.c.b16 %v2202, %v2198
      %v2639 = vpack.c.b16 %v2203, %v2199
      %v2640 = vpack.c.b16 %v2208, %v2204
      %v2641 = vpack.c.b16 %v2209, %v2205
      %v2642 = vpack.c.b16 %v2210, %v2206
      %v2643 = vpack.c.b16 %v2211, %v2207
      %v2644 = vpack.c.b16 %v2216, %v2212
      %v2645 = vpack.c.b16 %v2217, %v2213
      %v2646 = vpack.c.b16 %v2218, %v2214
      %v2647 = vpack.c.b16 %v2219, %v2215
      %v2648 = vpack.c.b16 %v2224, %v2220
      %v2649 = vpack.c.b16 %v2225, %v2221
      %v2650 = vpack.c.b16 %v2226, %v2222
      %v2651 = vpack.c.b16 %v2227, %v2223
      %v2652 = vpack.c.b16 %v2232, %v2228
      %v2653 = vpack.c.b16 %v2233, %v2229
      %v2654 = vpack.c.b16 %v2234, %v2230
      %v2655 = vpack.c.b16 %v2235, %v2231
      %v2656 = vpack.c.b16 %v2240, %v2236
      %v2657 = vpack.c.b16 %v2241, %v2237
      %v2658 = vpack.c.b16 %v2242, %v2238
      %v2659 = vpack.c.b16 %v2243, %v2239
      %v2660 = vpack.c.b16 %v2248, %v2244
      %v2661 = vpack.c.b16 %v2249, %v2245
      %v2662 = vpack.c.b16 %v2250, %v2246
      %v2663 = vpack.c.b16 %v2251, %v2247
      %v2664 = vpack.c.b16 %v2256, %v2252
      %v2665 = vpack.c.b16 %v2257, %v2253
      %v2666 = vpack.c.b16 %v2258, %v2254
      %v2667 = vpack.c.b16 %v2259, %v2255
      %v2668 = vpack.c.b16 %v2264, %v2260
      %v2669 = vpack.c.b16 %v2265, %v2261
      %v2670 = vpack.c.b16 %v2266, %v2262
      %v2671 = vpack.c.b16 %v2267, %v2263
      %v2672 = vpack.c.b16 %v2272, %v2268
      %v2673 = vpack.c.b16 %v2273, %v2269
      %v2674 = vpack.c.b16 %v2274, %v2270
      %v2675 = vpack.c.b16 %v2275, %v2271
      %v2676 = vpack.c.b16 %v2280, %v2276
      %v2677 = vpack.c.b16 %v2281, %v2277
      %v2678 = vpack.c.b16 %v2282, %v2278
      %v2679 = vpack.c.b16 %v2283, %v2279
      %v2680 = vpack.c.b16 %v2288, %v2284
      %v2681 = vpack.c.b16 %v2289, %v2285
      %v2682 = vpack.c.b16 %v2290, %v2286
      %v2683 = vpack.c.b16 %v2291, %v2287
      %v2684 = vpack.c.b16 %v2296, %v2292
      %v2685 = vpack.c.b16 %v2297, %v2293
      %v2686 = vpack.c.b16 %v2298, %v2294
      %v2687 = vpack.c.b16 %v2299, %v2295
      %v2688 = vpack.c.b16 %v2304, %v2300
      %v2689 = vpack.c.b16 %v2305, %v2301
      %v2690 = vpack.c.b16 %v2306, %v2302
      %v2691 = vpack.c.b16 %v2307, %v2303
      %v2692 = vpack.c.b16 %v2312, %v2308
      %v2693 = vpack.c.b16 %v2313, %v2309
      %v2694 = vpack.c.b16 %v2314, %v2310
      %v2695 = vpack.c.b16 %v2315, %v2311
      %v2696 = vpack.c.b16 %v2320, %v2316
      %v2697 = vpack.c.b16 %v2321, %v2317
      %v2698 = vpack.c.b16 %v2322, %v2318
      %v2699 = vpack.c.b16 %v2323, %v2319
      %v2700 = vpack.c.b16 %v2328, %v2324
      %v2701 = vpack.c.b16 %v2329, %v2325
      %v2702 = vpack.c.b16 %v2330, %v2326
      %v2703 = vpack.c.b16 %v2331, %v2327
      %v2704 = vpack.c.b16 %v2336, %v2332
      %v2705 = vpack.c.b16 %v2337, %v2333
      %v2706 = vpack.c.b16 %v2338, %v2334
      %v2707 = vpack.c.b16 %v2339, %v2335
      %v2708 = vpack.c.b16 %v2344, %v2340
      %v2709 = vpack.c.b16 %v2345, %v2341
      %v2710 = vpack.c.b16 %v2346, %v2342
      %v2711 = vpack.c.b16 %v2347, %v2343
      %v2712 = vpack.c.b16 %v2352, %v2348
      %v2713 = vpack.c.b16 %v2353, %v2349
      %v2714 = vpack.c.b16 %v2354, %v2350
      %v2715 = vpack.c.b16 %v2355, %v2351
      %v2716 = vpack.c.b16 %v2360, %v2356
      %v2717 = vpack.c.b16 %v2361, %v2357
      %v2718 = vpack.c.b16 %v2362, %v2358
      %v2719 = vpack.c.b16 %v2363, %v2359
      %v2720 = vpack.c.b16 %v2368, %v2364
      %v2721 = vpack.c.b16 %v2369, %v2365
      %v2722 = vpack.c.b16 %v2370, %v2366
      %v2723 = vpack.c.b16 %v2371, %v2367
      %v2724 = vpack.c.b16 %v2376, %v2372
      %v2725 = vpack.c.b16 %v2377, %v2373
      %v2726 = vpack.c.b16 %v2378, %v2374
      %v2727 = vpack.c.b16 %v2379, %v2375
      %v2728 = vpack.c.b16 %v2384, %v2380
      %v2729 = vpack.c.b16 %v2385, %v2381
      %v2730 = vpack.c.b16 %v2386, %v2382
      %v2731 = vpack.c.b16 %v2387, %v2383
      %v2732 = vpack.c.b16 %v2392, %v2388
      %v2733 = vpack.c.b16 %v2393, %v2389
      %v2734 = vpack.c.b16 %v2394, %v2390
      %v2735 = vpack.c.b16 %v2395, %v2391
      %v2736 = vpack.c.b16 %v2400, %v2396
      %v2737 = vpack.c.b16 %v2401, %v2397
      %v2738 = vpack.c.b16 %v2402, %v2398
      %v2739 = vpack.c.b16 %v2403, %v2399
      %v2740 = vpack.c.b16 %v2408, %v2404
      %v2741 = vpack.c.b16 %v2409, %v2405
      %v2742 = vpack.c.b16 %v2410, %v2406
      %v2743 = vpack.c.b16 %v2411, %v2407
      %v2744 = vpack.c.b16 %v2416, %v2412
      %v2745 = vpack.c.b16 %v2417, %v2413
      %v2746 = vpack.c.b16 %v2418, %v2414
      %v2747 = vpack.c.b16 %v2419, %v2415
      %v2748 = vpack.c.b16 %v2424, %v2420
      %v2749 = vpack.c.b16 %v2425, %v2421
      %v2750 = vpack.c.b16 %v2426, %v2422
      %v2751 = vpack.c.b16 %v2427, %v2423
      %v2752 = vpack.c.b16 %v2432, %v2428
      %v2753 = vpack.c.b16 %v2433, %v2429
      %v2754 = vpack.c.b16 %v2434, %v2430
      %v2755 = vpack.c.b16 %v2435, %v2431
      %v2756 = vpack.c.b16 %v2440, %v2436
      %v2757 = vpack.c.b16 %v2441, %v2437
      %v2758 = vpack.c.b16 %v2442, %v2438
      %v2759 = vpack.c.b16 %v2443, %v2439
      %v2760 = vpack.c.b16 %v2448, %v2444
      %v2761 = vpack.c.b16 %v2449, %v2445
      %v2762 = vpack.c.b16 %v2450, %v2446
      %v2763 = vpack.c.b16 %v2451, %v2447
      %v2764 = vpack.c.b16 %v2456, %v2452
      %v2765 = vpack.c.b16 %v2457, %v2453
      %v2766 = vpack.c.b16 %v2458, %v2454
      %v2767 = vpack.c.b16 %v2459, %v2455
      %v2768 = vpack.c.b16 %v2464, %v2460
      %v2769 = vpack.c.b16 %v2465, %v2461
      %v2770 = vpack.c.b16 %v2466, %v2462
      %v2771 = vpack.c.b16 %v2467, %v2463
      %v2772 = vpack.c.b16 %v2472, %v2468
      %v2773 = vpack.c.b16 %v2473, %v2469
      %v2774 = vpack.c.b16 %v2474, %v2470
      %v2775 = vpack.c.b16 %v2475, %v2471
      %v2776 = vpack.c.b16 %v2480, %v2476
      %v2777 = vpack.c.b16 %v2481, %v2477
      %v2778 = vpack.c.b16 %v2482, %v2478
      %v2779 = vpack.c.b16 %v2483, %v2479
      %v2780 = vpack.c.b16 %v2488, %v2484
      %v2781 = vpack.c.b16 %v2489, %v2485
      %v2782 = vpack.c.b16 %v2490, %v2486
      %v2783 = vpack.c.b16 %v2491, %v2487
      %v2784 = vpack.c.b16 %v2496, %v2492
      %v2785 = vpack.c.b16 %v2497, %v2493
      %v2786 = vpack.c.b16 %v2498, %v2494
      %v2787 = vpack.c.b16 %v2499, %v2495
      %v2788 = vpack.c.b16 %v2504, %v2500
      %v2789 = vpack.c.b16 %v2505, %v2501
      %v2790 = vpack.c.b16 %v2506, %v2502
      %v2791 = vpack.c.b16 %v2507, %v2503
      %v2792 = vpack.c.b16 %v2512, %v2508
      %v2793 = vpack.c.b16 %v2513, %v2509
      %v2794 = vpack.c.b16 %v2514, %v2510
      %v2795 = vpack.c.b16 %v2515, %v2511
      %v2796 = vpack.c.b16 %v2520, %v2516
      %v2797 = vpack.c.b16 %v2521, %v2517
      %v2798 = vpack.c.b16 %v2522, %v2518
      %v2799 = vpack.c.b16 %v2523, %v2519
      %v2800 = vpack.c.b16 %v2528, %v2524
      %v2801 = vpack.c.b16 %v2529, %v2525
      %v2802 = vpack.c.b16 %v2530, %v2526
      %v2803 = vpack.c.b16 %v2531, %v2527
      %v2804 = vpack.c.b16 %v2536, %v2532
      %v2805 = vpack.c.b16 %v2537, %v2533
      %v2806 = vpack.c.b16 %v2538, %v2534
      %v2807 = vpack.c.b16 %v2539, %v2535
      %v2808 = vpack.c.b16 %v2544, %v2540
      %v2809 = vpack.c.b16 %v2545, %v2541
      %v2810 = vpack.c.b16 %v2546, %v2542
      %v2811 = vpack.c.b16 %v2547, %v2543
      %v2812 = vpack.c.b16 %v2552, %v2548
      %v2813 = vpack.c.b16 %v2553, %v2549
      %v2814 = vpack.c.b16 %v2554, %v2550
      %v2815 = vpack.c.b16 %v2555, %v2551
      %v2816 = vpack.c.b16 %v2560, %v2556
      %v2817 = vpack.c.b16 %v2561, %v2557
      %v2818 = vpack.c.b16 %v2562, %v2558
      %v2819 = vpack.c.b16 %v2563, %v2559
      %3076 = vmatprep.subr.bf16.mxu0 %v2565
      %3077 = vmatpush1.bf16.msra.mxu0 %v2564
      %3078 = vmatprep.subr.bf16.mxu0 %v2569
      %3079 = vmatpush1.bf16.msra.mxu0 %v2568
      %3080 = vmatprep.subr.bf16.mxu0 %v2573
      %3081 = vmatpush1.bf16.msra.mxu0 %v2572
      %3082 = vmatprep.subr.bf16.mxu0 %v2577
      %3083 = vmatpush1.bf16.msra.mxu0 %v2576
      %3084 = vmatprep.subr.bf16.mxu0 %v2581
      %3085 = vmatpush1.bf16.msra.mxu0 %v2580
      %3086 = vmatprep.subr.bf16.mxu0 %v2585
      %3087 = vmatpush1.bf16.msra.mxu0 %v2584
      %3088 = vmatprep.subr.bf16.mxu0 %v2589
      %3089 = vmatpush1.bf16.msra.mxu0 %v2588
      %3090 = vmatprep.subr.bf16.mxu0 %v2593
      %3091 = vmatpush1.bf16.msra.mxu0 %v2592
      %3092 = vmatprep.subr.bf16.mxu0 %v2597
      %3093 = vmatpush1.bf16.msra.mxu0 %v2596
      %3094 = vmatprep.subr.bf16.mxu0 %v2601
      %3095 = vmatpush1.bf16.msra.mxu0 %v2600
      %3096 = vmatprep.subr.bf16.mxu0 %v2605
      %3097 = vmatpush1.bf16.msra.mxu0 %v2604
      %3098 = vmatprep.subr.bf16.mxu0 %v2609
      %3099 = vmatpush1.bf16.msra.mxu0 %v2608
      %3100 = vmatprep.subr.bf16.mxu0 %v2613
      %3101 = vmatpush1.bf16.msra.mxu0 %v2612
      %3102 = vmatprep.subr.bf16.mxu0 %v2617
      %3103 = vmatpush1.bf16.msra.mxu0 %v2616
      %3104 = vmatprep.subr.bf16.mxu0 %v2621
      %3105 = vmatpush1.bf16.msra.mxu0 %v2620
      %3106 = vmatprep.subr.bf16.mxu0 %v2625
      %3107 = vmatpush1.bf16.msra.mxu0 %v2624
      %3108 = vmatprep.mubr.bf16.mxu0 %v1776
      %3109 = vmatmul.mubr.bf16.gmra.mrb[0].mxu0 %v1762
      %v3110 = vpop.f32.mrb[0].mxu0
      %v3111 = vadd.f32 %v1721, %v3110
      %v3112 = vpop.f32.mrb[0].mxu0
      %v3113 = vadd.f32 %v1725, %v3112
      %v3114 = vpop.f32.mrb[0].mxu0
      %v3115 = vpop.f32.mrb[0].mxu0
      %3116 = vdwg.mxu0
      %3117 = vmatprep.subr.bf16.mxu0 %v2629
      %3118 = vmatpush1.bf16.msra.mxu0 %v2628
      %3119 = vmatprep.subr.bf16.mxu0 %v2633
      %3120 = vmatpush1.bf16.msra.mxu0 %v2632
      %3121 = vmatprep.subr.bf16.mxu0 %v2637
      %3122 = vmatpush1.bf16.msra.mxu0 %v2636
      %3123 = vmatprep.subr.bf16.mxu0 %v2641
      %3124 = vmatpush1.bf16.msra.mxu0 %v2640
      %3125 = vmatprep.subr.bf16.mxu0 %v2645
      %3126 = vmatpush1.bf16.msra.mxu0 %v2644
      %3127 = vmatprep.subr.bf16.mxu0 %v2649
      %3128 = vmatpush1.bf16.msra.mxu0 %v2648
      %3129 = vmatprep.subr.bf16.mxu0 %v2653
      %3130 = vmatpush1.bf16.msra.mxu0 %v2652
      %3131 = vmatprep.subr.bf16.mxu0 %v2657
      %3132 = vmatpush1.bf16.msra.mxu0 %v2656
      %3133 = vmatprep.subr.bf16.mxu0 %v2661
      %3134 = vmatpush1.bf16.msra.mxu0 %v2660
      %3135 = vmatprep.subr.bf16.mxu0 %v2665
      %3136 = vmatpush1.bf16.msra.mxu0 %v2664
      %3137 = vmatprep.subr.bf16.mxu0 %v2669
      %3138 = vmatpush1.bf16.msra.mxu0 %v2668
      %3139 = vmatprep.subr.bf16.mxu0 %v2673
      %3140 = vmatpush1.bf16.msra.mxu0 %v2672
      %3141 = vmatprep.subr.bf16.mxu0 %v2677
      %3142 = vmatpush1.bf16.msra.mxu0 %v2676
      %3143 = vmatprep.subr.bf16.mxu0 %v2681
      %3144 = vmatpush1.bf16.msra.mxu0 %v2680
      %3145 = vmatprep.subr.bf16.mxu0 %v2685
      %3146 = vmatpush1.bf16.msra.mxu0 %v2684
      %3147 = vmatprep.subr.bf16.mxu0 %v2689
      %3148 = vmatpush1.bf16.msra.mxu0 %v2688
      %3149 = vmatprep.mubr.bf16.mxu0 %v1786
      %3150 = vmatmul.mubr.bf16.gmra.mrb[0].mxu0 %v1784
      %v3151 = vpop.f32.mrb[0].mxu0
      %v3152 = vadd.f32 %v3111, %v3151
      %v3153 = vpop.f32.mrb[0].mxu0
      %v3154 = vadd.f32 %v3113, %v3153
      %v3155 = vpop.f32.mrb[0].mxu0
      %v3156 = vpop.f32.mrb[0].mxu0
      %3157 = vdwg.mxu0
      %3158 = vmatprep.subr.bf16.mxu0 %v2693
      %3159 = vmatpush1.bf16.msra.mxu0 %v2692
      %3160 = vmatprep.subr.bf16.mxu0 %v2697
      %3161 = vmatpush1.bf16.msra.mxu0 %v2696
      %3162 = vmatprep.subr.bf16.mxu0 %v2701
      %3163 = vmatpush1.bf16.msra.mxu0 %v2700
      %3164 = vmatprep.subr.bf16.mxu0 %v2705
      %3165 = vmatpush1.bf16.msra.mxu0 %v2704
      %3166 = vmatprep.subr.bf16.mxu0 %v2709
      %3167 = vmatpush1.bf16.msra.mxu0 %v2708
      %3168 = vmatprep.subr.bf16.mxu0 %v2713
      %3169 = vmatpush1.bf16.msra.mxu0 %v2712
      %3170 = vmatprep.subr.bf16.mxu0 %v2717
      %3171 = vmatpush1.bf16.msra.mxu0 %v2716
      %3172 = vmatprep.subr.bf16.mxu0 %v2721
      %3173 = vmatpush1.bf16.msra.mxu0 %v2720
      %3174 = vmatprep.subr.bf16.mxu0 %v2725
      %3175 = vmatpush1.bf16.msra.mxu0 %v2724
      %3176 = vmatprep.subr.bf16.mxu0 %v2729
      %3177 = vmatpush1.bf16.msra.mxu0 %v2728
      %3178 = vmatprep.subr.bf16.mxu0 %v2733
      %3179 = vmatpush1.bf16.msra.mxu0 %v2732
      %3180 = vmatprep.subr.bf16.mxu0 %v2737
      %3181 = vmatpush1.bf16.msra.mxu0 %v2736
      %3182 = vmatprep.subr.bf16.mxu0 %v2741
      %3183 = vmatpush1.bf16.msra.mxu0 %v2740
      %3184 = vmatprep.subr.bf16.mxu0 %v2745
      %3185 = vmatpush1.bf16.msra.mxu0 %v2744
      %3186 = vmatprep.subr.bf16.mxu0 %v2749
      %3187 = vmatpush1.bf16.msra.mxu0 %v2748
      %3188 = vmatprep.subr.bf16.mxu0 %v2753
      %3189 = vmatpush1.bf16.msra.mxu0 %v2752
      %3190 = vmatprep.mubr.bf16.mxu0 %v1783
      %3191 = vmatmul.mubr.bf16.gmra.mrb[0].mxu0 %v1769
      %v3192 = vpop.f32.mrb[0].mxu0
      %v3193 = vadd.f32 %v3152, %v3192
      %v3194 = vpop.f32.mrb[0].mxu0
      %v3195 = vadd.f32 %v3154, %v3194
      %v3196 = vpop.f32.mrb[0].mxu0
      %v3197 = vpop.f32.mrb[0].mxu0
      %3198 = vdwg.mxu0
      %3199 = vmatprep.subr.bf16.mxu0 %v2757
      %3200 = vmatpush1.bf16.msra.mxu0 %v2756
      %3201 = vmatprep.subr.bf16.mxu0 %v2761
      %3202 = vmatpush1.bf16.msra.mxu0 %v2760
      %3203 = vmatprep.subr.bf16.mxu0 %v2765
      %3204 = vmatpush1.bf16.msra.mxu0 %v2764
      %3205 = vmatprep.subr.bf16.mxu0 %v2769
      %3206 = vmatpush1.bf16.msra.mxu0 %v2768
      %3207 = vmatprep.subr.bf16.mxu0 %v2773
      %3208 = vmatpush1.bf16.msra.mxu0 %v2772
      %3209 = vmatprep.subr.bf16.mxu0 %v2777
      %3210 = vmatpush1.bf16.msra.mxu0 %v2776
      %3211 = vmatprep.subr.bf16.mxu0 %v2781
      %3212 = vmatpush1.bf16.msra.mxu0 %v2780
      %3213 = vmatprep.subr.bf16.mxu0 %v2785
      %3214 = vmatpush1.bf16.msra.mxu0 %v2784
      %3215 = vmatprep.subr.bf16.mxu0 %v2789
      %3216 = vmatpush1.bf16.msra.mxu0 %v2788
      %3217 = vmatprep.subr.bf16.mxu0 %v2793
      %3218 = vmatpush1.bf16.msra.mxu0 %v2792
      %3219 = vmatprep.subr.bf16.mxu0 %v2797
      %3220 = vmatpush1.bf16.msra.mxu0 %v2796
      %3221 = vmatprep.subr.bf16.mxu0 %v2801
      %3222 = vmatpush1.bf16.msra.mxu0 %v2800
      %3223 = vmatprep.subr.bf16.mxu0 %v2805
      %3224 = vmatpush1.bf16.msra.mxu0 %v2804
      %3225 = vmatprep.subr.bf16.mxu0 %v2809
      %3226 = vmatpush1.bf16.msra.mxu0 %v2808
      %3227 = vmatprep.subr.bf16.mxu0 %v2813
      %3228 = vmatpush1.bf16.msra.mxu0 %v2812
      %3229 = vmatprep.subr.bf16.mxu0 %v2817
      %3230 = vmatpush1.bf16.msra.mxu0 %v2816
      %3231 = vmatprep.mubr.bf16.mxu0 %v1787
      %3232 = vmatmul.mubr.bf16.gmra.mrb[0].mxu0 %v1785
      %v3233 = vpop.f32.mrb[0].mxu0
      %v3234 = vadd.f32 %v3193, %v3233
      %v3235 = vpop.f32.mrb[0].mxu0
      %v3236 = vadd.f32 %v3195, %v3235
      %v3237 = vpop.f32.mrb[0].mxu0
      %v3238 = vpop.f32.mrb[0].mxu0
      %3239 = vdwg.mxu0
      %3240 = vmatprep.subr.bf16.mxu0 %v2567
      %3241 = vmatpush1.bf16.msra.mxu0 %v2566
      %3242 = vmatprep.subr.bf16.mxu0 %v2571
      %3243 = vmatpush1.bf16.msra.mxu0 %v2570
      %3244 = vmatprep.subr.bf16.mxu0 %v2575
      %3245 = vmatpush1.bf16.msra.mxu0 %v2574
      %3246 = vmatprep.subr.bf16.mxu0 %v2579
      %3247 = vmatpush1.bf16.msra.mxu0 %v2578
      %3248 = vmatprep.subr.bf16.mxu0 %v2583
      %3249 = vmatpush1.bf16.msra.mxu0 %v2582
      %3250 = vmatprep.subr.bf16.mxu0 %v2587
      %3251 = vmatpush1.bf16.msra.mxu0 %v2586
      %3252 = vmatprep.subr.bf16.mxu0 %v2591
      %3253 = vmatpush1.bf16.msra.mxu0 %v2590
      %3254 = vmatprep.subr.bf16.mxu0 %v2595
      %3255 = vmatpush1.bf16.msra.mxu0 %v2594
      %3256 = vmatprep.subr.bf16.mxu0 %v2599
      %3257 = vmatpush1.bf16.msra.mxu0 %v2598
      %3258 = vmatprep.subr.bf16.mxu0 %v2603
      %3259 = vmatpush1.bf16.msra.mxu0 %v2602
      %3260 = vmatprep.subr.bf16.mxu0 %v2607
      %3261 = vmatpush1.bf16.msra.mxu0 %v2606
      %3262 = vmatprep.subr.bf16.mxu0 %v2611
      %3263 = vmatpush1.bf16.msra.mxu0 %v2610
      %3264 = vmatprep.subr.bf16.mxu0 %v2615
      %3265 = vmatpush1.bf16.msra.mxu0 %v2614
      %3266 = vmatprep.subr.bf16.mxu0 %v2619
      %3267 = vmatpush1.bf16.msra.mxu0 %v2618
      %3268 = vmatprep.subr.bf16.mxu0 %v2623
      %3269 = vmatpush1.bf16.msra.mxu0 %v2622
      %3270 = vmatprep.subr.bf16.mxu0 %v2627
      %3271 = vmatpush1.bf16.msra.mxu0 %v2626
      %3272 = vmatprep.mubr.bf16.mxu0 %v1776
      %3273 = vmatmul.mubr.bf16.gmra.mrb[0].mxu0 %v1762
      %v3274 = vpop.f32.mrb[0].mxu0
      %v3275 = vadd.f32 %v1729, %v3274
      %v3276 = vpop.f32.mrb[0].mxu0
      %v3277 = vadd.f32 %v1733, %v3276
      %v3278 = vpop.f32.mrb[0].mxu0
      %v3279 = vpop.f32.mrb[0].mxu0
      %3280 = vdwg.mxu0
      %3281 = vmatprep.subr.bf16.mxu0 %v2631
      %3282 = vmatpush1.bf16.msra.mxu0 %v2630
      %3283 = vmatprep.subr.bf16.mxu0 %v2635
      %3284 = vmatpush1.bf16.msra.mxu0 %v2634
      %3285 = vmatprep.subr.bf16.mxu0 %v2639
      %3286 = vmatpush1.bf16.msra.mxu0 %v2638
      %3287 = vmatprep.subr.bf16.mxu0 %v2643
      %3288 = vmatpush1.bf16.msra.mxu0 %v2642
      %3289 = vmatprep.subr.bf16.mxu0 %v2647
      %3290 = vmatpush1.bf16.msra.mxu0 %v2646
      %3291 = vmatprep.subr.bf16.mxu0 %v2651
      %3292 = vmatpush1.bf16.msra.mxu0 %v2650
      %3293 = vmatprep.subr.bf16.mxu0 %v2655
      %3294 = vmatpush1.bf16.msra.mxu0 %v2654
      %3295 = vmatprep.subr.bf16.mxu0 %v2659
      %3296 = vmatpush1.bf16.msra.mxu0 %v2658
      %3297 = vmatprep.subr.bf16.mxu0 %v2663
      %3298 = vmatpush1.bf16.msra.mxu0 %v2662
      %3299 = vmatprep.subr.bf16.mxu0 %v2667
      %3300 = vmatpush1.bf16.msra.mxu0 %v2666
      %3301 = vmatprep.subr.bf16.mxu0 %v2671
      %3302 = vmatpush1.bf16.msra.mxu0 %v2670
      %3303 = vmatprep.subr.bf16.mxu0 %v2675
      %3304 = vmatpush1.bf16.msra.mxu0 %v2674
      %3305 = vmatprep.subr.bf16.mxu0 %v2679
      %3306 = vmatpush1.bf16.msra.mxu0 %v2678
      %3307 = vmatprep.subr.bf16.mxu0 %v2683
      %3308 = vmatpush1.bf16.msra.mxu0 %v2682
      %3309 = vmatprep.subr.bf16.mxu0 %v2687
      %3310 = vmatpush1.bf16.msra.mxu0 %v2686
      %3311 = vmatprep.subr.bf16.mxu0 %v2691
      %3312 = vmatpush1.bf16.msra.mxu0 %v2690
      %3313 = vmatprep.mubr.bf16.mxu0 %v1786
      %3314 = vmatmul.mubr.bf16.gmra.mrb[0].mxu0 %v1784
      %v3315 = vpop.f32.mrb[0].mxu0
      %v3316 = vadd.f32 %v3275, %v3315
      %v3317 = vpop.f32.mrb[0].mxu0
      %v3318 = vadd.f32 %v3277, %v3317
      %v3319 = vpop.f32.mrb[0].mxu0
      %v3320 = vpop.f32.mrb[0].mxu0
      %3321 = vdwg.mxu0
      %3322 = vmatprep.subr.bf16.mxu0 %v2695
      %3323 = vmatpush1.bf16.msra.mxu0 %v2694
      %3324 = vmatprep.subr.bf16.mxu0 %v2699
      %3325 = vmatpush1.bf16.msra.mxu0 %v2698
      %3326 = vmatprep.subr.bf16.mxu0 %v2703
      %3327 = vmatpush1.bf16.msra.mxu0 %v2702
      %3328 = vmatprep.subr.bf16.mxu0 %v2707
      %3329 = vmatpush1.bf16.msra.mxu0 %v2706
      %3330 = vmatprep.subr.bf16.mxu0 %v2711
      %3331 = vmatpush1.bf16.msra.mxu0 %v2710
      %3332 = vmatprep.subr.bf16.mxu0 %v2715
      %3333 = vmatpush1.bf16.msra.mxu0 %v2714
      %3334 = vmatprep.subr.bf16.mxu0 %v2719
      %3335 = vmatpush1.bf16.msra.mxu0 %v2718
      %3336 = vmatprep.subr.bf16.mxu0 %v2723
      %3337 = vmatpush1.bf16.msra.mxu0 %v2722
      %3338 = vmatprep.subr.bf16.mxu0 %v2727
      %3339 = vmatpush1.bf16.msra.mxu0 %v2726
      %3340 = vmatprep.subr.bf16.mxu0 %v2731
      %3341 = vmatpush1.bf16.msra.mxu0 %v2730
      %3342 = vmatprep.subr.bf16.mxu0 %v2735
      %3343 = vmatpush1.bf16.msra.mxu0 %v2734
      %3344 = vmatprep.subr.bf16.mxu0 %v2739
      %3345 = vmatpush1.bf16.msra.mxu0 %v2738
      %3346 = vmatprep.subr.bf16.mxu0 %v2743
      %3347 = vmatpush1.bf16.msra.mxu0 %v2742
      %3348 = vmatprep.subr.bf16.mxu0 %v2747
      %3349 = vmatpush1.bf16.msra.mxu0 %v2746
      %3350 = vmatprep.subr.bf16.mxu0 %v2751
      %3351 = vmatpush1.bf16.msra.mxu0 %v2750
      %3352 = vmatprep.subr.bf16.mxu0 %v2755
      %3353 = vmatpush1.bf16.msra.mxu0 %v2754
      %3354 = vmatprep.mubr.bf16.mxu0 %v1783
      %3355 = vmatmul.mubr.bf16.gmra.mrb[0].mxu0 %v1769
      %v3356 = vpop.f32.mrb[0].mxu0
      %v3357 = vadd.f32 %v3316, %v3356
      %v3358 = vpop.f32.mrb[0].mxu0
      %v3359 = vadd.f32 %v3318, %v3358
      %v3360 = vpop.f32.mrb[0].mxu0
      %v3361 = vpop.f32.mrb[0].mxu0
      %3362 = vdwg.mxu0
      %3363 = vmatprep.subr.bf16.mxu0 %v2759
      %3364 = vmatpush1.bf16.msra.mxu0 %v2758
      %3365 = vmatprep.subr.bf16.mxu0 %v2763
      %3366 = vmatpush1.bf16.msra.mxu0 %v2762
      %3367 = vmatprep.subr.bf16.mxu0 %v2767
      %3368 = vmatpush1.bf16.msra.mxu0 %v2766
      %3369 = vmatprep.subr.bf16.mxu0 %v2771
      %3370 = vmatpush1.bf16.msra.mxu0 %v2770
      %3371 = vmatprep.subr.bf16.mxu0 %v2775
      %3372 = vmatpush1.bf16.msra.mxu0 %v2774
      %3373 = vmatprep.subr.bf16.mxu0 %v2779
      %3374 = vmatpush1.bf16.msra.mxu0 %v2778
      %3375 = vmatprep.subr.bf16.mxu0 %v2783
      %3376 = vmatpush1.bf16.msra.mxu0 %v2782
      %3377 = vmatprep.subr.bf16.mxu0 %v2787
      %3378 = vmatpush1.bf16.msra.mxu0 %v2786
      %3379 = vmatprep.subr.bf16.mxu0 %v2791
      %3380 = vmatpush1.bf16.msra.mxu0 %v2790
      %3381 = vmatprep.subr.bf16.mxu0 %v2795
      %3382 = vmatpush1.bf16.msra.mxu0 %v2794
      %3383 = vmatprep.subr.bf16.mxu0 %v2799
      %3384 = vmatpush1.bf16.msra.mxu0 %v2798
      %3385 = vmatprep.subr.bf16.mxu0 %v2803
      %3386 = vmatpush1.bf16.msra.mxu0 %v2802
      %3387 = vmatprep.subr.bf16.mxu0 %v2807
      %3388 = vmatpush1.bf16.msra.mxu0 %v2806
      %3389 = vmatprep.subr.bf16.mxu0 %v2811
      %3390 = vmatpush1.bf16.msra.mxu0 %v2810
      %3391 = vmatprep.subr.bf16.mxu0 %v2815
      %3392 = vmatpush1.bf16.msra.mxu0 %v2814
      %3393 = vmatprep.subr.bf16.mxu0 %v2819
      %3394 = vmatpush1.bf16.msra.mxu0 %v2818
      %3395 = vmatprep.mubr.bf16.mxu0 %v1787
      %3396 = vmatmul.mubr.bf16.gmra.mrb[0].mxu0 %v1785
      %v3397 = vpop.f32.mrb[0].mxu0
      %v3398 = vadd.f32 %v3357, %v3397
      %v3399 = vpop.f32.mrb[0].mxu0
      %v3400 = vadd.f32 %v3359, %v3399
      %v3401 = vpop.f32.mrb[0].mxu0
      %v3402 = vpop.f32.mrb[0].mxu0
      %3403 = vdwg.mxu0
      %v3404 = vmax.f32 %v3234, 0.0
      %v3405 = vmax.f32 %v3236, 0.0
      %v3406 = vmax.f32 %v3398, 0.0
      %v3407 = vmax.f32 %v3400, 0.0
      %v3408 = vpack.c.bf16 %v3404, %v3404
      %v3409 = vpack.c.bf16 %v3405, %v3405
      %v3410 = vpack.c.bf16 %v3406, %v3406
      %v3411 = vpack.c.bf16 %v3407, %v3407
      %v3412 = vld [vmem:[#allocation8] sm:$0xf]
      %v3413 = vld [vmem:[#allocation8 + $0x4] sm:$0xf]
      %v3414 = vld [vmem:[#allocation8 + $0x8] sm:$0xf]
      %v3415 = vld [vmem:[#allocation8 + $0xc] sm:$0xf]
      %v3416 = vld [vmem:[#allocation8 + $0x10] sm:$0xf]
      %v3417 = vld [vmem:[#allocation8 + $0x14] sm:$0xf]
      %v3418 = vld [vmem:[#allocation8 + $0x18] sm:$0xf]
      %v3419 = vld [vmem:[#allocation8 + $0x1c] sm:$0xf]
      %v3420 = vld [vmem:[#allocation8 + $0x20] sm:$0xf]
      %v3421 = vld [vmem:[#allocation8 + $0x24] sm:$0xf]
      %v3422 = vld [vmem:[#allocation8 + $0x28] sm:$0xf]
      %v3423 = vld [vmem:[#allocation8 + $0x2c] sm:$0xf]
      %v3424 = vld [vmem:[#allocation8 + $0x30] sm:$0xf]
      %v3425 = vld [vmem:[#allocation8 + $0x34] sm:$0xf]
      %v3426 = vld [vmem:[#allocation8 + $0x38] sm:$0xf]
      %v3427 = vld [vmem:[#allocation8 + $0x3c] sm:$0xf]
      %v3428 = vld [vmem:[#allocation8 + $0x40] sm:$0xf]
      %v3429 = vld [vmem:[#allocation8 + $0x44] sm:$0xf]
      %v3430 = vld [vmem:[#allocation8 + $0x48] sm:$0xf]
      %v3431 = vld [vmem:[#allocation8 + $0x4c] sm:$0xf]
      %v3432 = vld [vmem:[#allocation8 + $0x50] sm:$0xf]
      %v3433 = vld [vmem:[#allocation8 + $0x54] sm:$0xf]
      %v3434 = vld [vmem:[#allocation8 + $0x58] sm:$0xf]
      %v3435 = vld [vmem:[#allocation8 + $0x5c] sm:$0xf]
      %v3436 = vld [vmem:[#allocation8 + $0x60] sm:$0xf]
      %v3437 = vld [vmem:[#allocation8 + $0x64] sm:$0xf]
      %v3438 = vld [vmem:[#allocation8 + $0x68] sm:$0xf]
      %v3439 = vld [vmem:[#allocation8 + $0x6c] sm:$0xf]
      %v3440 = vld [vmem:[#allocation8 + $0x70] sm:$0xf]
      %v3441 = vld [vmem:[#allocation8 + $0x74] sm:$0xf]
      %v3442 = vld [vmem:[#allocation8 + $0x78] sm:$0xf]
      %v3443 = vld [vmem:[#allocation8 + $0x7c] sm:$0xf]
      %v3444 = vld [vmem:[#allocation8 + $0x80] sm:$0xf]
      %v3445 = vld [vmem:[#allocation8 + $0x84] sm:$0xf]
      %v3446 = vld [vmem:[#allocation8 + $0x88] sm:$0xf]
      %v3447 = vld [vmem:[#allocation8 + $0x8c] sm:$0xf]
      %v3448 = vld [vmem:[#allocation8 + $0x90] sm:$0xf]
      %v3449 = vld [vmem:[#allocation8 + $0x94] sm:$0xf]
      %v3450 = vld [vmem:[#allocation8 + $0x98] sm:$0xf]
      %v3451 = vld [vmem:[#allocation8 + $0x9c] sm:$0xf]
      %v3452 = vld [vmem:[#allocation8 + $0xa0] sm:$0xf]
      %v3453 = vld [vmem:[#allocation8 + $0xa4] sm:$0xf]
      %v3454 = vld [vmem:[#allocation8 + $0xa8] sm:$0xf]
      %v3455 = vld [vmem:[#allocation8 + $0xac] sm:$0xf]
      %v3456 = vld [vmem:[#allocation8 + $0xb0] sm:$0xf]
      %v3457 = vld [vmem:[#allocation8 + $0xb4] sm:$0xf]
      %v3458 = vld [vmem:[#allocation8 + $0xb8] sm:$0xf]
      %v3459 = vld [vmem:[#allocation8 + $0xbc] sm:$0xf]
      %v3460 = vld [vmem:[#allocation8 + $0xc0] sm:$0xf]
      %v3461 = vld [vmem:[#allocation8 + $0xc4] sm:$0xf]
      %v3462 = vld [vmem:[#allocation8 + $0xc8] sm:$0xf]
      %v3463 = vld [vmem:[#allocation8 + $0xcc] sm:$0xf]
      %v3464 = vld [vmem:[#allocation8 + $0xd0] sm:$0xf]
      %v3465 = vld [vmem:[#allocation8 + $0xd4] sm:$0xf]
      %v3466 = vld [vmem:[#allocation8 + $0xd8] sm:$0xf]
      %v3467 = vld [vmem:[#allocation8 + $0xdc] sm:$0xf]
      %v3468 = vld [vmem:[#allocation8 + $0xe0] sm:$0xf]
      %v3469 = vld [vmem:[#allocation8 + $0xe4] sm:$0xf]
      %v3470 = vld [vmem:[#allocation8 + $0xe8] sm:$0xf]
      %v3471 = vld [vmem:[#allocation8 + $0xec] sm:$0xf]
      %v3472 = vld [vmem:[#allocation8 + $0xf0] sm:$0xf]
      %v3473 = vld [vmem:[#allocation8 + $0xf4] sm:$0xf]
      %v3474 = vld [vmem:[#allocation8 + $0xf8] sm:$0xf]
      %v3475 = vld [vmem:[#allocation8 + $0xfc] sm:$0xf]
      %v3476 = vld [vmem:[%s4] sm:$0x1]
      %v3478 = vlaneseq
      %v3479 = vshrl.u32 %v3478, 7
      %v3480 = vsub.s32 0, %v3479
      %v3481 = vrot.slane %v3476, %v3480
      %v3547 = vunpack.c.l.b16 %v3412
      %v3548 = vunpack.c.l.b16 %v3413
      %v3549 = vunpack.c.l.b16 %v3414
      %v3550 = vunpack.c.l.b16 %v3415
      %v3551 = vunpack.c.l.b16 %v3416
      %v3552 = vunpack.c.l.b16 %v3417
      %v3553 = vunpack.c.l.b16 %v3418
      %v3554 = vunpack.c.l.b16 %v3419
      %v3555 = vunpack.c.l.b16 %v3420
      %v3556 = vunpack.c.l.b16 %v3421
      %v3557 = vunpack.c.l.b16 %v3422
      %v3558 = vunpack.c.l.b16 %v3423
      %v3559 = vunpack.c.l.b16 %v3424
      %v3560 = vunpack.c.l.b16 %v3425
      %v3561 = vunpack.c.l.b16 %v3426
      %v3562 = vunpack.c.l.b16 %v3427
      %v3563 = vunpack.c.l.b16 %v3428
      %v3564 = vunpack.c.l.b16 %v3429
      %v3565 = vunpack.c.l.b16 %v3430
      %v3566 = vunpack.c.l.b16 %v3431
      %v3567 = vunpack.c.l.b16 %v3432
      %v3568 = vunpack.c.l.b16 %v3433
      %v3569 = vunpack.c.l.b16 %v3434
      %v3570 = vunpack.c.l.b16 %v3435
      %v3571 = vunpack.c.l.b16 %v3436
      %v3572 = vunpack.c.l.b16 %v3437
      %v3573 = vunpack.c.l.b16 %v3438
      %v3574 = vunpack.c.l.b16 %v3439
      %v3575 = vunpack.c.l.b16 %v3440
      %v3576 = vunpack.c.l.b16 %v3441
      %v3577 = vunpack.c.l.b16 %v3442
      %v3578 = vunpack.c.l.b16 %v3443
      %v3579 = vunpack.c.l.b16 %v3444
      %v3580 = vunpack.c.l.b16 %v3445
      %v3581 = vunpack.c.l.b16 %v3446
      %v3582 = vunpack.c.l.b16 %v3447
      %v3583 = vunpack.c.l.b16 %v3448
      %v3584 = vunpack.c.l.b16 %v3449
      %v3585 = vunpack.c.l.b16 %v3450
      %v3586 = vunpack.c.l.b16 %v3451
      %v3587 = vunpack.c.l.b16 %v3452
      %v3588 = vunpack.c.l.b16 %v3453
      %v3589 = vunpack.c.l.b16 %v3454
      %v3590 = vunpack.c.l.b16 %v3455
      %v3591 = vunpack.c.l.b16 %v3456
      %v3592 = vunpack.c.l.b16 %v3457
      %v3593 = vunpack.c.l.b16 %v3458
      %v3594 = vunpack.c.l.b16 %v3459
      %v3595 = vunpack.c.l.b16 %v3460
      %v3596 = vunpack.c.l.b16 %v3461
      %v3597 = vunpack.c.l.b16 %v3462
      %v3598 = vunpack.c.l.b16 %v3463
      %v3599 = vunpack.c.l.b16 %v3464
      %v3600 = vunpack.c.l.b16 %v3465
      %v3601 = vunpack.c.l.b16 %v3466
      %v3602 = vunpack.c.l.b16 %v3467
      %v3603 = vunpack.c.l.b16 %v3468
      %v3604 = vunpack.c.l.b16 %v3469
      %v3605 = vunpack.c.l.b16 %v3470
      %v3606 = vunpack.c.l.b16 %v3471
      %v3607 = vunpack.c.l.b16 %v3472
      %v3608 = vunpack.c.l.b16 %v3473
      %v3609 = vunpack.c.l.b16 %v3474
      %v3610 = vunpack.c.l.b16 %v3475
      %v3611 = vpack.c.b16 %v3548, %v3547
      %v3612 = vpack.c.b16 %v3550, %v3549
      %v3613 = vpack.c.b16 %v3552, %v3551
      %v3614 = vpack.c.b16 %v3554, %v3553
      %v3615 = vpack.c.b16 %v3556, %v3555
      %v3616 = vpack.c.b16 %v3558, %v3557
      %v3617 = vpack.c.b16 %v3560, %v3559
      %v3618 = vpack.c.b16 %v3562, %v3561
      %v3619 = vpack.c.b16 %v3564, %v3563
      %v3620 = vpack.c.b16 %v3566, %v3565
      %v3621 = vpack.c.b16 %v3568, %v3567
      %v3622 = vpack.c.b16 %v3570, %v3569
      %v3623 = vpack.c.b16 %v3572, %v3571
      %v3624 = vpack.c.b16 %v3574, %v3573
      %v3625 = vpack.c.b16 %v3576, %v3575
      %v3626 = vpack.c.b16 %v3578, %v3577
      %v3627 = vpack.c.b16 %v3580, %v3579
      %v3628 = vpack.c.b16 %v3582, %v3581
      %v3629 = vpack.c.b16 %v3584, %v3583
      %v3630 = vpack.c.b16 %v3586, %v3585
      %v3631 = vpack.c.b16 %v3588, %v3587
      %v3632 = vpack.c.b16 %v3590, %v3589
      %v3633 = vpack.c.b16 %v3592, %v3591
      %v3634 = vpack.c.b16 %v3594, %v3593
      %v3635 = vpack.c.b16 %v3596, %v3595
      %v3636 = vpack.c.b16 %v3598, %v3597
      %v3637 = vpack.c.b16 %v3600, %v3599
      %v3638 = vpack.c.b16 %v3602, %v3601
      %v3639 = vpack.c.b16 %v3604, %v3603
      %v3640 = vpack.c.b16 %v3606, %v3605
      %v3641 = vpack.c.b16 %v3608, %v3607
      %v3642 = vpack.c.b16 %v3610, %v3609
      %3675 = vmatprep.subr.bf16.mxu0 0
      %3676 = vmatpush1.bf16.msra.mxu0 %v3611
      %3677 = vmatprep.subr.bf16.mxu0 0
      %3678 = vmatpush1.bf16.msra.mxu0 %v3612
      %3679 = vmatprep.subr.bf16.mxu0 0
      %3680 = vmatpush1.bf16.msra.mxu0 %v3613
      %3681 = vmatprep.subr.bf16.mxu0 0
      %3682 = vmatpush1.bf16.msra.mxu0 %v3614
      %3683 = vmatprep.subr.bf16.mxu0 0
      %3684 = vmatpush1.bf16.msra.mxu0 %v3615
      %3685 = vmatprep.subr.bf16.mxu0 0
      %3686 = vmatpush1.bf16.msra.mxu0 %v3616
      %3687 = vmatprep.subr.bf16.mxu0 0
      %3688 = vmatpush1.bf16.msra.mxu0 %v3617
      %3689 = vmatprep.subr.bf16.mxu0 0
      %3690 = vmatpush1.bf16.msra.mxu0 %v3618
      %3691 = vmatprep.subr.bf16.mxu0 0
      %3692 = vmatpush1.bf16.msra.mxu0 %v3619
      %3693 = vmatprep.subr.bf16.mxu0 0
      %3694 = vmatpush1.bf16.msra.mxu0 %v3620
      %3695 = vmatprep.subr.bf16.mxu0 0
      %3696 = vmatpush1.bf16.msra.mxu0 %v3621
      %3697 = vmatprep.subr.bf16.mxu0 0
      %3698 = vmatpush1.bf16.msra.mxu0 %v3622
      %3699 = vmatprep.subr.bf16.mxu0 0
      %3700 = vmatpush1.bf16.msra.mxu0 %v3623
      %3701 = vmatprep.subr.bf16.mxu0 0
      %3702 = vmatpush1.bf16.msra.mxu0 %v3624
      %3703 = vmatprep.subr.bf16.mxu0 0
      %3704 = vmatpush1.bf16.msra.mxu0 %v3625
      %3705 = vmatprep.subr.bf16.mxu0 0
      %3706 = vmatpush1.bf16.msra.mxu0 %v3626
      %3707 = vmatprep.mubr.bf16.mxu0 %v3409
      %3708 = vmatmul.mubr.bf16.gmra.mrb[0].mxu0 %v3408
      %v3709 = vpop.f32.mrb[0].mxu0
      %v3710 = vadd.f32 %v3481, %v3709
      %v3711 = vpop.f32.mrb[0].mxu0
      %v3712 = vpop.f32.mrb[0].mxu0
      %v3713 = vpop.f32.mrb[0].mxu0
      %3714 = vdwg.mxu0
      %3715 = vmatprep.subr.bf16.mxu0 0
      %3716 = vmatpush1.bf16.msra.mxu0 %v3627
      %3717 = vmatprep.subr.bf16.mxu0 0
      %3718 = vmatpush1.bf16.msra.mxu0 %v3628
      %3719 = vmatprep.subr.bf16.mxu0 0
      %3720 = vmatpush1.bf16.msra.mxu0 %v3629
      %3721 = vmatprep.subr.bf16.mxu0 0
      %3722 = vmatpush1.bf16.msra.mxu0 %v3630
      %3723 = vmatprep.subr.bf16.mxu0 0
      %3724 = vmatpush1.bf16.msra.mxu0 %v3631
      %3725 = vmatprep.subr.bf16.mxu0 0
      %3726 = vmatpush1.bf16.msra.mxu0 %v3632
      %3727 = vmatprep.subr.bf16.mxu0 0
      %3728 = vmatpush1.bf16.msra.mxu0 %v3633
      %3729 = vmatprep.subr.bf16.mxu0 0
      %3730 = vmatpush1.bf16.msra.mxu0 %v3634
      %3731 = vmatprep.subr.bf16.mxu0 0
      %3732 = vmatpush1.bf16.msra.mxu0 %v3635
      %3733 = vmatprep.subr.bf16.mxu0 0
      %3734 = vmatpush1.bf16.msra.mxu0 %v3636
      %3735 = vmatprep.subr.bf16.mxu0 0
      %3736 = vmatpush1.bf16.msra.mxu0 %v3637
      %3737 = vmatprep.subr.bf16.mxu0 0
      %3738 = vmatpush1.bf16.msra.mxu0 %v3638
      %3739 = vmatprep.subr.bf16.mxu0 0
      %3740 = vmatpush1.bf16.msra.mxu0 %v3639
      %3741 = vmatprep.subr.bf16.mxu0 0
      %3742 = vmatpush1.bf16.msra.mxu0 %v3640
      %3743 = vmatprep.subr.bf16.mxu0 0
      %3744 = vmatpush1.bf16.msra.mxu0 %v3641
      %3745 = vmatprep.subr.bf16.mxu0 0
      %3746 = vmatpush1.bf16.msra.mxu0 %v3642
      %3747 = vmatprep.mubr.bf16.mxu0 %v3411
      %3748 = vmatmul.mubr.bf16.gmra.mrb[0].mxu0 %v3410
      %v3749 = vpop.f32.mrb[0].mxu0
      %v3750 = vadd.f32 %v3710, %v3749
      %v3751 = vpop.f32.mrb[0].mxu0
      %v3752 = vpop.f32.mrb[0].mxu0
      %v3753 = vpop.f32.mrb[0].mxu0
      %3754 = vdwg.mxu0
      %3755 = vst [vmem:[#allocation9] sm:$0x3] %v3750
    $region41: #{tpu_custom_call.1} parent=1 // pred_fallthru
      _
    // Predicated region
    $region42: #{tpu_custom_call.1} parent=1 // pred_check
      _
    $region43: #{tpu_custom_call.1} parent=1 // pred_check_branch
      %3757 = sbr.rel (0) target = $region45
    $region44: #{tpu_custom_call.1} parent=1 // pred_region
      %s3759 = ssub.s32 32, 32
      %3760 = vsyncadd [#allocation5], %s3759
      %s3762 = sshll.u32 [#allocation9], 4
      %s3763 = int_to_ptr.vmem [resolvable:$true] %s3762
      %3765 = dma.vmem_to_hbm [thread:$0]  %s3763, 32, %s5, [#allocation5]
    $region45: #{tpu_custom_call.1} parent=1 // pred_fallthru
      _
    // Predicated region
    $region46: #{tpu_custom_call.1} parent=1 // pred_check
      _
    $region47: #{tpu_custom_call.1} parent=1 // pred_check_branch
      %3767 = sbr.rel (0) target = $region49
    $region48: #{tpu_custom_call.1} parent=1 // pred_region
      %3768 = dma.done [#allocation5], 32
    $region49: #{tpu_custom_call.1} parent=1 // pred_fallthru
      _
    %3769 = vsyncpa [#allocation4], 1
    %3770 = vsyncpa [#allocation7], 1
    %3771 = vsyncpa [#allocation5], 1

</llo_original>
